<compile_context>
chip_gen: v5e
topology: v5e:2x2
jax: 0.10.0
libtpu: 0.0.40
codegen_flags: <defaults>
</compile_context>

<pallas_src>
import functools

import jax
import jax.numpy as jnp
from jax.experimental import pallas as pl
from jax.experimental.pallas import tpu as pltpu


def _round_up(x, m):
    return ((x + m - 1) // m) * m


# ----------------------------------------------------------------------------
# Fused RG kernel (one grid step per batch element).
# Activation layout inside the kernel: (Cs, LG) f32 where
#   Cs = channels rounded up to 8 (sublanes),
#   the padded image (Hp*Wp = L flattened, zero halo) occupies lanes [G, G+L),
#   G is a 128-aligned front guard and LG leaves >= Wp+1 lanes of rear guard
#   so every shifted conv view is a static in-bounds lane slice.
# ----------------------------------------------------------------------------
def _rg_kernel(x_ref, mask_ref,
               w1_ref, b1_ref, w2_ref, b2_ref,
               cw1_ref, cb1_ref, cw2_ref, cb2_ref,
               wl_ref, bl_ref,
               o_ref,
               act_ref, act2_ref,
               *, Cs, Wp, G, LC, inv_hw, R):
    # Interior mask (1, LC): True on real output pixels, False on the conv halo
    # and the lane-padding tail.  Re-zeroes the halo after every conv so the
    # next 3x3 conv sees correct zero padding; also makes the CA mean exact.
    mb = mask_ref[...] > 0.5

    # Running activation <- input (image + zero halo + zero guards come packed
    # from the wrapper).  act2 is zeroed ONCE per image so its guard lanes stay
    # finite/zero for the whole RCAB chain.
    act_ref[...] = x_ref[0]
    act2_ref[...] = jnp.zeros_like(act2_ref)

    def conv3x3(src_ref, w):
        # 3x3 'same' conv as 9 accumulating (Cs,Cs)@(Cs,LC) MXU matmuls on
        # flat-shifted views of the guarded buffer (no materialized im2col).
        acc = jnp.zeros((Cs, LC), jnp.float32)
        for dy in range(3):
            for dx in range(3):
                k = dy * 3 + dx
                s = (dy - 1) * Wp + (dx - 1)
                acc = acc + jnp.dot(w[k], src_ref[:, G + s:G + s + LC],
                                    preferred_element_type=jnp.float32)
        return acc

    def rcab_body(i, carry):
        w1 = w1_ref[i]
        b1 = b1_ref[i]
        w2 = w2_ref[i]
        b2 = b2_ref[i]
        cw1 = cw1_ref[i]
        cb1 = cb1_ref[i]
        cw2 = cw2_ref[i]
        cb2 = cb2_ref[i]

        # conv1 + ReLU; halo / tail forced back to zero.
        h = jnp.where(mb, jnp.maximum(conv3x3(act_ref, w1) + b1, 0.0), 0.0)
        act2_ref[:, G:G + LC] = h          # 128-aligned, lane-dense store

        # conv2 (+ bias); halo / tail forced back to zero.
        y = jnp.where(mb, conv3x3(act2_ref, w2) + b2, 0.0)

        # Channel attention: global avg pool -> 1x1 -> ReLU -> 1x1 -> sigmoid.
        pooled = jnp.sum(y, axis=1, keepdims=True) * inv_hw           # (Cs, 1)
        t = jnp.maximum(
            jnp.dot(cw1, pooled, preferred_element_type=jnp.float32) + cb1, 0.0)
        attn = jax.nn.sigmoid(
            jnp.dot(cw2, t, preferred_element_type=jnp.float32) + cb2)  # (Cs,1)

        # RCAB residual; y is zero on the halo so act keeps its zero halo.
        act_ref[:, G:G + LC] = act_ref[:, G:G + LC] + y * attn
        return carry

    jax.lax.fori_loop(0, R, rcab_body, 0)

    # RG tail: out = x + conv3x3(RCAB_chain(x)); full-block lane-dense store.
    z = jnp.where(mb, conv3x3(act_ref, wl_ref[...]) + bl_ref[...], 0.0)
    o_ref[0] = x_ref[0, :, G:G + LC] + z


# ----------------------------------------------------------------------------
# Wrapper: one pallas_call for the whole RG.
# ----------------------------------------------------------------------------
def rg_forward(x_nchw, params):
    """x: (N, C, H, W) float32 (NCHW like PyTorch).  Returns (N, C, H, W)."""
    w1s = params["w1"]
    R = w1s.shape[0]
    Cs = w1s.shape[-1]
    N, C, H, W = x_nchw.shape
    Hp, Wp = H + 2, W + 2
    L = Hp * Wp
    OFF = Wp + 1                        # largest |tap shift|
    G = _round_up(OFF, 128)             # lane-aligned front guard
    LC = _round_up(L, 128)              # lane-aligned computed width
    LG = _round_up(G + LC + OFF, 128)   # full guarded buffer width

    # One-time layout prep (outside the kernel): channel pad to a sublane
    # multiple, 1-pixel zero conv halo, flatten spatial, add lane guards.
    xp = jnp.pad(x_nchw.astype(jnp.float32),
                 ((0, 0), (0, Cs - C), (1, 1), (1, 1)))            # (N,Cs,Hp,Wp)
    xg = jnp.pad(xp.reshape(N, Cs, L), ((0, 0), (0, 0), (G, LG - G - L)))

    # Interior mask over the computed width.
    mask = jnp.pad(jnp.ones((H, W), jnp.float32), ((1, 1), (1, 1))).reshape(-1)
    mask = jnp.pad(mask, (0, LC - L)).reshape(1, LC)

    kern = functools.partial(_rg_kernel, Cs=Cs, Wp=Wp, G=G, LC=LC,
                             inv_hw=1.0 / float(H * W), R=R)

    def full_spec(a):
        nd = a.ndim
        return pl.BlockSpec(a.shape, lambda n, _nd=nd: (0,) * _nd)

    operands = (xg, mask,
                params["w1"], params["b1"], params["w2"], params["b2"],
                params["ca_w1"], params["ca_b1"],
                params["ca_w2"], params["ca_b2"],
                params["w_last"], params["b_last"])

    out = pl.pallas_call(
        kern,
        out_shape=jax.ShapeDtypeStruct((N, Cs, LC), jnp.float32),
        grid=(N,),
        in_specs=[pl.BlockSpec((1, Cs, LG), lambda n: (n, 0, 0))]
                 + [full_spec(a) for a in operands[1:]],
        out_specs=pl.BlockSpec((1, Cs, LC), lambda n: (n, 0, 0)),
        scratch_shapes=[
            pltpu.VMEM((Cs, LG), jnp.float32),   # running activation
            pltpu.VMEM((Cs, LG), jnp.float32),   # intra-RCAB intermediate
        ],
        compiler_params=pltpu.CompilerParams(
            dimension_semantics=("parallel",)),
    )(*operands)

    # Back to NCHW: drop lane-pad tail, unflatten, strip halo + channel pad.
    out = out[:, :, :L].reshape(N, Cs, Hp, Wp)[:, :C, 1:H + 1, 1:W + 1]
    return out


# ----------------------------------------------------------------------------
# Parameter init (logical PyTorch shapes) + packing into the kernel layout.
#   3x3 conv: (Cout, Cin, 3, 3) -> (9, Cs, Cs) with tap row k = dy*3 + dx
#   1x1 conv: (Cout, Cin)       -> (Couts, Cins)
#   biases:   (Cout,)           -> (Couts, 1)
# Zero padding keeps the padded channel rows identically zero through the
# whole chain (attn=0.5 there multiplies y=0), preserving reference semantics.
# ----------------------------------------------------------------------------
def _pack_conv3x3(w, b, cs):
    cout, cin = w.shape[0], w.shape[1]
    taps = jnp.transpose(w, (2, 3, 0, 1)).reshape(9, cout, cin)
    wp = jnp.zeros((9, cs, cs), jnp.float32).at[:, :cout, :cin].set(taps)
    bp = jnp.zeros((cs, 1), jnp.float32).at[:cout, 0].set(b)
    return wp, bp


def _pack_conv1x1(w, b, cins, couts):
    cout, cin = w.shape
    wp = jnp.zeros((couts, cins), jnp.float32).at[:cout, :cin].set(w)
    bp = jnp.zeros((couts, 1), jnp.float32).at[:cout, 0].set(b)
    return wp, bp


def init_rg_params(key, num_features, num_rcab, reduction):
    C = num_features
    Cr = max(C // reduction, 1)
    Cs = _round_up(C, 8)
    Crs = _round_up(Cr, 8)

    def conv3x3_init(k):
        kw, kb = jax.random.split(k)
        scale = 1.0 / jnp.sqrt(9.0 * C)
        w = jax.random.normal(kw, (C, C, 3, 3), jnp.float32) * scale
        b = jax.random.normal(kb, (C,), jnp.float32) * scale
        return _pack_conv3x3(w, b, Cs)

    def conv1x1_init(k, cin, cout, cins, couts):
        kw, kb = jax.random.split(k)
        scale = 1.0 / jnp.sqrt(float(cin))
        w = jax.random.normal(kw, (cout, cin), jnp.float32) * scale
        b = jax.random.normal(kb, (cout,), jnp.float32) * scale
        return _pack_conv1x1(w, b, cins, couts)

    keys = jax.random.split(key, num_rcab + 1)
    names = ("w1", "b1", "w2", "b2", "ca_w1", "ca_b1", "ca_w2", "ca_b2")
    stacks = {n: [] for n in names}
    for i in range(num_rcab):
        k1, k2, k3, k4 = jax.random.split(keys[i], 4)
        w1, b1 = conv3x3_init(k1)
        w2, b2 = conv3x3_init(k2)
        cw1, cb1 = conv1x1_init(k3, C, Cr, Cs, Crs)
        cw2, cb2 = conv1x1_init(k4, Cr, C, Crs, Cs)
        for n, v in zip(names, (w1, b1, w2, b2, cw1, cb1, cw2, cb2)):
            stacks[n].append(v)
    params = {n: jnp.stack(v) for n, v in stacks.items()}
    wl, bl = conv3x3_init(keys[-1])
    params["w_last"] = wl
    params["b_last"] = bl
    return params


if __name__ == "__main__":
    # Small shapes: batch=2, channels=8, spatial=16x16, num_rcab=2, reduction=4
    N, C, H, W = 2, 8, 16, 16
    num_rcab, reduction = 2, 4

    key = jax.random.PRNGKey(0)
    kx, kp = jax.random.split(key)
    x = jax.random.normal(kx, (N, C, H, W), jnp.float32)   # NCHW like PyTorch
    params = init_rg_params(kp, C, num_rcab, reduction)

    out = jax.jit(rg_forward)(x, params)
    jax.block_until_ready(out)
    assert out.shape == (N, C, H, W)
    print("KERNEL_OK")
</pallas_src>

<mosaic_0001>
module attributes {stable_mosaic.version = 11 : i64} {
  func.func @_rg_kernel(%arg0: i32, %arg1: memref<1x8x640xf32, #tpu.memory_space<vmem>>, %arg2: memref<1x384xf32, #tpu.memory_space<vmem>>, %arg3: memref<2x9x8x8xf32, #tpu.memory_space<vmem>>, %arg4: memref<2x8x1xf32, #tpu.memory_space<vmem>>, %arg5: memref<2x9x8x8xf32, #tpu.memory_space<vmem>>, %arg6: memref<2x8x1xf32, #tpu.memory_space<vmem>>, %arg7: memref<2x8x8xf32, #tpu.memory_space<vmem>>, %arg8: memref<2x8x1xf32, #tpu.memory_space<vmem>>, %arg9: memref<2x8x8xf32, #tpu.memory_space<vmem>>, %arg10: memref<2x8x1xf32, #tpu.memory_space<vmem>>, %arg11: memref<9x8x8xf32, #tpu.memory_space<vmem>>, %arg12: memref<8x1xf32, #tpu.memory_space<vmem>>, %arg13: memref<1x8x384xf32, #tpu.memory_space<vmem>>, %arg14: memref<8x640xf32, #tpu.memory_space<vmem>>, %arg15: memref<8x640xf32, #tpu.memory_space<vmem>>) attributes {dimension_semantics = [#tpu.dimension_semantics<parallel>], iteration_bounds = array<i64: 2>, scalar_prefetch = 0 : i64, scratch_operands = 2 : i64, tpu.core_type = #tpu.core_type<tc>, window_params = [{transform_indices = @transform_0, window_bounds = array<i64: 1, 8, 640>}, {pipeline_mode = #tpu.pipeline_mode<synchronous>, transform_indices = @transform_1, window_bounds = array<i64: 1, 384>}, {pipeline_mode = #tpu.pipeline_mode<synchronous>, transform_indices = @transform_2, window_bounds = array<i64: 2, 9, 8, 8>}, {pipeline_mode = #tpu.pipeline_mode<synchronous>, transform_indices = @transform_3, window_bounds = array<i64: 2, 8, 1>}, {pipeline_mode = #tpu.pipeline_mode<synchronous>, transform_indices = @transform_4, window_bounds = array<i64: 2, 9, 8, 8>}, {pipeline_mode = #tpu.pipeline_mode<synchronous>, transform_indices = @transform_5, window_bounds = array<i64: 2, 8, 1>}, {pipeline_mode = #tpu.pipeline_mode<synchronous>, transform_indices = @transform_6, window_bounds = array<i64: 2, 8, 8>}, {pipeline_mode = #tpu.pipeline_mode<synchronous>, transform_indices = @transform_7, window_bounds = array<i64: 2, 8, 1>}, {pipeline_mode = #tpu.pipeline_mode<synchronous>, transform_indices = @transform_8, window_bounds = array<i64: 2, 8, 8>}, {pipeline_mode = #tpu.pipeline_mode<synchronous>, transform_indices = @transform_9, window_bounds = array<i64: 2, 8, 1>}, {pipeline_mode = #tpu.pipeline_mode<synchronous>, transform_indices = @transform_10, window_bounds = array<i64: 9, 8, 8>}, {pipeline_mode = #tpu.pipeline_mode<synchronous>, transform_indices = @transform_11, window_bounds = array<i64: 8, 1>}, {transform_indices = @transform_12, window_bounds = array<i64: 1, 8, 384>}]} {
    %c0 = arith.constant 0 : index
    %c0_0 = arith.constant 0 : index
    %0 = vector.load %arg2[%c0, %c0_0] : memref<1x384xf32, #tpu.memory_space<vmem>>, vector<1x384xf32>
    %cst = arith.constant 5.000000e-01 : f32
    %1 = vector.broadcast %cst : f32 to vector<1x384xf32>
    %2 = arith.cmpf ogt, %0, %1 : vector<1x384xf32>
    %c0_1 = arith.constant 0 : index
    %c0_2 = arith.constant 0 : index
    %c0_3 = arith.constant 0 : index
    %3 = vector.load %arg1[%c0_1, %c0_2, %c0_3] : memref<1x8x640xf32, #tpu.memory_space<vmem>>, vector<1x8x640xf32>
    %4 = vector.shape_cast %3 : vector<1x8x640xf32> to vector<8x640xf32>
    %c0_4 = arith.constant 0 : index
    %c0_5 = arith.constant 0 : index
    %5 = vector.load %arg14[%c0_4, %c0_5] : memref<8x640xf32, #tpu.memory_space<vmem>>, vector<8x640xf32>
    tpu.vector_store %arg14[%c0_4, %c0_5], %4 {strides = array<i32>} : memref<8x640xf32, #tpu.memory_space<vmem>>, vector<8x640xf32>,
    %cst_6 = arith.constant 0.000000e+00 : f32
    %6 = vector.broadcast %cst_6 : f32 to vector<8x640xf32>
    %c0_7 = arith.constant 0 : index
    %c0_8 = arith.constant 0 : index
    %7 = vector.load %arg15[%c0_7, %c0_8] : memref<8x640xf32, #tpu.memory_space<vmem>>, vector<8x640xf32>
    tpu.vector_store %arg15[%c0_7, %c0_8], %6 {strides = array<i32>} : memref<8x640xf32, #tpu.memory_space<vmem>>, vector<8x640xf32>,
    %c0_i32 = arith.constant 0 : i32
    %c2_i32 = arith.constant 2 : i32
    %8 = arith.addi %c0_i32, %c2_i32 : i32
    %c1_i32 = arith.constant 1 : i32
    scf.for %arg16 = %c0_i32 to %8 step %c1_i32  : i32 {
      %69 = arith.index_cast %arg16 : i32 to index
      %c0_41 = arith.constant 0 : index
      %c0_42 = arith.constant 0 : index
      %c0_43 = arith.constant 0 : index
      %70 = vector.load %arg3[%69, %c0_41, %c0_42, %c0_43] : memref<2x9x8x8xf32, #tpu.memory_space<vmem>>, vector<1x9x8x8xf32>
      %71 = vector.shape_cast %70 : vector<1x9x8x8xf32> to vector<9x8x8xf32>
      %72 = arith.index_cast %arg16 : i32 to index
      %c0_44 = arith.constant 0 : index
      %c0_45 = arith.constant 0 : index
      %73 = vector.load %arg4[%72, %c0_44, %c0_45] : memref<2x8x1xf32, #tpu.memory_space<vmem>>, vector<1x8x1xf32>
      %74 = vector.shape_cast %73 : vector<1x8x1xf32> to vector<8x1xf32>
      %75 = arith.index_cast %arg16 : i32 to index
      %c0_46 = arith.constant 0 : index
      %c0_47 = arith.constant 0 : index
      %c0_48 = arith.constant 0 : index
      %76 = vector.load %arg5[%75, %c0_46, %c0_47, %c0_48] : memref<2x9x8x8xf32, #tpu.memory_space<vmem>>, vector<1x9x8x8xf32>
      %77 = vector.shape_cast %76 : vector<1x9x8x8xf32> to vector<9x8x8xf32>
      %78 = arith.index_cast %arg16 : i32 to index
      %c0_49 = arith.constant 0 : index
      %c0_50 = arith.constant 0 : index
      %79 = vector.load %arg6[%78, %c0_49, %c0_50] : memref<2x8x1xf32, #tpu.memory_space<vmem>>, vector<1x8x1xf32>
      %80 = vector.shape_cast %79 : vector<1x8x1xf32> to vector<8x1xf32>
      %81 = arith.index_cast %arg16 : i32 to index
      %c0_51 = arith.constant 0 : index
      %c0_52 = arith.constant 0 : index
      %82 = vector.load %arg7[%81, %c0_51, %c0_52] : memref<2x8x8xf32, #tpu.memory_space<vmem>>, vector<1x8x8xf32>
      %83 = vector.shape_cast %82 : vector<1x8x8xf32> to vector<8x8xf32>
      %84 = arith.index_cast %arg16 : i32 to index
      %c0_53 = arith.constant 0 : index
      %c0_54 = arith.constant 0 : index
      %85 = vector.load %arg8[%84, %c0_53, %c0_54] : memref<2x8x1xf32, #tpu.memory_space<vmem>>, vector<1x8x1xf32>
      %86 = vector.shape_cast %85 : vector<1x8x1xf32> to vector<8x1xf32>
      %87 = arith.index_cast %arg16 : i32 to index
      %c0_55 = arith.constant 0 : index
      %c0_56 = arith.constant 0 : index
      %88 = vector.load %arg9[%87, %c0_55, %c0_56] : memref<2x8x8xf32, #tpu.memory_space<vmem>>, vector<1x8x8xf32>
      %89 = vector.shape_cast %88 : vector<1x8x8xf32> to vector<8x8xf32>
      %90 = arith.index_cast %arg16 : i32 to index
      %c0_57 = arith.constant 0 : index
      %c0_58 = arith.constant 0 : index
      %91 = vector.load %arg10[%90, %c0_57, %c0_58] : memref<2x8x1xf32, #tpu.memory_space<vmem>>, vector<1x8x1xf32>
      %92 = vector.shape_cast %91 : vector<1x8x1xf32> to vector<8x1xf32>
      %cst_59 = arith.constant 0.000000e+00 : f32
      %93 = vector.broadcast %cst_59 : f32 to vector<8x384xf32>
      %94 = vector.extract_strided_slice %71 {offsets = [0, 0, 0], sizes = [1, 8, 8], strides = [1, 1, 1]} : vector<9x8x8xf32> to vector<1x8x8xf32>
      %95 = vector.shape_cast %94 : vector<1x8x8xf32> to vector<8x8xf32>
      %c0_60 = arith.constant 0 : index
      %c109_61 = arith.constant 109 : index
      %96 = vector.load %arg14[%c0_60, %c109_61] : memref<8x640xf32, #tpu.memory_space<vmem>>, vector<8x384xf32>
      %cst_62 = arith.constant dense<0.000000e+00> : vector<8x384xf32>
      %97 = tpu.matmul %95, %96, %cst_62 {dimension_numbers = #tpu.dot_dimension_numbers<[1], [0], [0], [1], [0, 0, 1, 1], [], []>} : vector<8x8xf32>, vector<8x384xf32>, vector<8x384xf32> -> vector<8x384xf32>
      %98 = arith.addf %93, %97 : vector<8x384xf32>
      %99 = vector.extract_strided_slice %71 {offsets = [1, 0, 0], sizes = [1, 8, 8], strides = [1, 1, 1]} : vector<9x8x8xf32> to vector<1x8x8xf32>
      %100 = vector.shape_cast %99 : vector<1x8x8xf32> to vector<8x8xf32>
      %c0_63 = arith.constant 0 : index
      %c110_64 = arith.constant 110 : index
      %101 = vector.load %arg14[%c0_63, %c110_64] : memref<8x640xf32, #tpu.memory_space<vmem>>, vector<8x384xf32>
      %cst_65 = arith.constant dense<0.000000e+00> : vector<8x384xf32>
      %102 = tpu.matmul %100, %101, %cst_65 {dimension_numbers = #tpu.dot_dimension_numbers<[1], [0], [0], [1], [0, 0, 1, 1], [], []>} : vector<8x8xf32>, vector<8x384xf32>, vector<8x384xf32> -> vector<8x384xf32>
      %103 = arith.addf %98, %102 : vector<8x384xf32>
      %104 = vector.extract_strided_slice %71 {offsets = [2, 0, 0], sizes = [1, 8, 8], strides = [1, 1, 1]} : vector<9x8x8xf32> to vector<1x8x8xf32>
      %105 = vector.shape_cast %104 : vector<1x8x8xf32> to vector<8x8xf32>
      %c0_66 = arith.constant 0 : index
      %c111_67 = arith.constant 111 : index
      %106 = vector.load %arg14[%c0_66, %c111_67] : memref<8x640xf32, #tpu.memory_space<vmem>>, vector<8x384xf32>
      %cst_68 = arith.constant dense<0.000000e+00> : vector<8x384xf32>
      %107 = tpu.matmul %105, %106, %cst_68 {dimension_numbers = #tpu.dot_dimension_numbers<[1], [0], [0], [1], [0, 0, 1, 1], [], []>} : vector<8x8xf32>, vector<8x384xf32>, vector<8x384xf32> -> vector<8x384xf32>
      %108 = arith.addf %103, %107 : vector<8x384xf32>
      %109 = vector.extract_strided_slice %71 {offsets = [3, 0, 0], sizes = [1, 8, 8], strides = [1, 1, 1]} : vector<9x8x8xf32> to vector<1x8x8xf32>
      %110 = vector.shape_cast %109 : vector<1x8x8xf32> to vector<8x8xf32>
      %c0_69 = arith.constant 0 : index
      %c127_70 = arith.constant 127 : index
      %111 = vector.load %arg14[%c0_69, %c127_70] : memref<8x640xf32, #tpu.memory_space<vmem>>, vector<8x384xf32>
      %cst_71 = arith.constant dense<0.000000e+00> : vector<8x384xf32>
      %112 = tpu.matmul %110, %111, %cst_71 {dimension_numbers = #tpu.dot_dimension_numbers<[1], [0], [0], [1], [0, 0, 1, 1], [], []>} : vector<8x8xf32>, vector<8x384xf32>, vector<8x384xf32> -> vector<8x384xf32>
      %113 = arith.addf %108, %112 : vector<8x384xf32>
      %114 = vector.extract_strided_slice %71 {offsets = [4, 0, 0], sizes = [1, 8, 8], strides = [1, 1, 1]} : vector<9x8x8xf32> to vector<1x8x8xf32>
      %115 = vector.shape_cast %114 : vector<1x8x8xf32> to vector<8x8xf32>
      %c0_72 = arith.constant 0 : index
      %c128_73 = arith.constant 128 : index
      %116 = vector.load %arg14[%c0_72, %c128_73] : memref<8x640xf32, #tpu.memory_space<vmem>>, vector<8x384xf32>
      %cst_74 = arith.constant dense<0.000000e+00> : vector<8x384xf32>
      %117 = tpu.matmul %115, %116, %cst_74 {dimension_numbers = #tpu.dot_dimension_numbers<[1], [0], [0], [1], [0, 0, 1, 1], [], []>} : vector<8x8xf32>, vector<8x384xf32>, vector<8x384xf32> -> vector<8x384xf32>
      %118 = arith.addf %113, %117 : vector<8x384xf32>
      %119 = vector.extract_strided_slice %71 {offsets = [5, 0, 0], sizes = [1, 8, 8], strides = [1, 1, 1]} : vector<9x8x8xf32> to vector<1x8x8xf32>
      %120 = vector.shape_cast %119 : vector<1x8x8xf32> to vector<8x8xf32>
      %c0_75 = arith.constant 0 : index
      %c129_76 = arith.constant 129 : index
      %121 = vector.load %arg14[%c0_75, %c129_76] : memref<8x640xf32, #tpu.memory_space<vmem>>, vector<8x384xf32>
      %cst_77 = arith.constant dense<0.000000e+00> : vector<8x384xf32>
      %122 = tpu.matmul %120, %121, %cst_77 {dimension_numbers = #tpu.dot_dimension_numbers<[1], [0], [0], [1], [0, 0, 1, 1], [], []>} : vector<8x8xf32>, vector<8x384xf32>, vector<8x384xf32> -> vector<8x384xf32>
      %123 = arith.addf %118, %122 : vector<8x384xf32>
      %124 = vector.extract_strided_slice %71 {offsets = [6, 0, 0], sizes = [1, 8, 8], strides = [1, 1, 1]} : vector<9x8x8xf32> to vector<1x8x8xf32>
      %125 = vector.shape_cast %124 : vector<1x8x8xf32> to vector<8x8xf32>
      %c0_78 = arith.constant 0 : index
      %c145_79 = arith.constant 145 : index
      %126 = vector.load %arg14[%c0_78, %c145_79] : memref<8x640xf32, #tpu.memory_space<vmem>>, vector<8x384xf32>
      %cst_80 = arith.constant dense<0.000000e+00> : vector<8x384xf32>
      %127 = tpu.matmul %125, %126, %cst_80 {dimension_numbers = #tpu.dot_dimension_numbers<[1], [0], [0], [1], [0, 0, 1, 1], [], []>} : vector<8x8xf32>, vector<8x384xf32>, vector<8x384xf32> -> vector<8x384xf32>
      %128 = arith.addf %123, %127 : vector<8x384xf32>
      %129 = vector.extract_strided_slice %71 {offsets = [7, 0, 0], sizes = [1, 8, 8], strides = [1, 1, 1]} : vector<9x8x8xf32> to vector<1x8x8xf32>
      %130 = vector.shape_cast %129 : vector<1x8x8xf32> to vector<8x8xf32>
      %c0_81 = arith.constant 0 : index
      %c146_82 = arith.constant 146 : index
      %131 = vector.load %arg14[%c0_81, %c146_82] : memref<8x640xf32, #tpu.memory_space<vmem>>, vector<8x384xf32>
      %cst_83 = arith.constant dense<0.000000e+00> : vector<8x384xf32>
      %132 = tpu.matmul %130, %131, %cst_83 {dimension_numbers = #tpu.dot_dimension_numbers<[1], [0], [0], [1], [0, 0, 1, 1], [], []>} : vector<8x8xf32>, vector<8x384xf32>, vector<8x384xf32> -> vector<8x384xf32>
      %133 = arith.addf %128, %132 : vector<8x384xf32>
      %134 = vector.extract_strided_slice %71 {offsets = [8, 0, 0], sizes = [1, 8, 8], strides = [1, 1, 1]} : vector<9x8x8xf32> to vector<1x8x8xf32>
      %135 = vector.shape_cast %134 : vector<1x8x8xf32> to vector<8x8xf32>
      %c0_84 = arith.constant 0 : index
      %c147_85 = arith.constant 147 : index
      %136 = vector.load %arg14[%c0_84, %c147_85] : memref<8x640xf32, #tpu.memory_space<vmem>>, vector<8x384xf32>
      %cst_86 = arith.constant dense<0.000000e+00> : vector<8x384xf32>
      %137 = tpu.matmul %135, %136, %cst_86 {dimension_numbers = #tpu.dot_dimension_numbers<[1], [0], [0], [1], [0, 0, 1, 1], [], []>} : vector<8x8xf32>, vector<8x384xf32>, vector<8x384xf32> -> vector<8x384xf32>
      %138 = arith.addf %133, %137 : vector<8x384xf32>
      %139 = vector.broadcast %74 : vector<8x1xf32> to vector<8x384xf32>
      %140 = arith.addf %138, %139 : vector<8x384xf32>
      %cst_87 = arith.constant 0.000000e+00 : f32
      %141 = vector.broadcast %cst_87 : f32 to vector<8x384xf32>
      %142 = arith.maximumf %140, %141 : vector<8x384xf32>
      %cst_88 = arith.constant 0.000000e+00 : f32
      %143 = vector.shape_cast %2 : vector<1x384xi1> to vector<1x384xi1>
      %144 = vector.broadcast %143 : vector<1x384xi1> to vector<8x384xi1>
      %145 = vector.broadcast %cst_88 : f32 to vector<8x384xf32>
      %146 = arith.select %144, %142, %145 : vector<8x384xi1>, vector<8x384xf32>
      %c0_89 = arith.constant 0 : index
      %c128_90 = arith.constant 128 : index
      %147 = vector.load %arg15[%c0_89, %c128_90] : memref<8x640xf32, #tpu.memory_space<vmem>>, vector<8x384xf32>
      tpu.vector_store %arg15[%c0_89, %c128_90], %146 {strides = array<i32>} : memref<8x640xf32, #tpu.memory_space<vmem>>, vector<8x384xf32>,
      %cst_91 = arith.constant 0.000000e+00 : f32
      %148 = vector.broadcast %cst_91 : f32 to vector<8x384xf32>
      %149 = vector.extract_strided_slice %77 {offsets = [0, 0, 0], sizes = [1, 8, 8], strides = [1, 1, 1]} : vector<9x8x8xf32> to vector<1x8x8xf32>
      %150 = vector.shape_cast %149 : vector<1x8x8xf32> to vector<8x8xf32>
      %c0_92 = arith.constant 0 : index
      %c109_93 = arith.constant 109 : index
      %151 = vector.load %arg15[%c0_92, %c109_93] : memref<8x640xf32, #tpu.memory_space<vmem>>, vector<8x384xf32>
      %cst_94 = arith.constant dense<0.000000e+00> : vector<8x384xf32>
      %152 = tpu.matmul %150, %151, %cst_94 {dimension_numbers = #tpu.dot_dimension_numbers<[1], [0], [0], [1], [0, 0, 1, 1], [], []>} : vector<8x8xf32>, vector<8x384xf32>, vector<8x384xf32> -> vector<8x384xf32>
      %153 = arith.addf %148, %152 : vector<8x384xf32>
      %154 = vector.extract_strided_slice %77 {offsets = [1, 0, 0], sizes = [1, 8, 8], strides = [1, 1, 1]} : vector<9x8x8xf32> to vector<1x8x8xf32>
      %155 = vector.shape_cast %154 : vector<1x8x8xf32> to vector<8x8xf32>
      %c0_95 = arith.constant 0 : index
      %c110_96 = arith.constant 110 : index
      %156 = vector.load %arg15[%c0_95, %c110_96] : memref<8x640xf32, #tpu.memory_space<vmem>>, vector<8x384xf32>
      %cst_97 = arith.constant dense<0.000000e+00> : vector<8x384xf32>
      %157 = tpu.matmul %155, %156, %cst_97 {dimension_numbers = #tpu.dot_dimension_numbers<[1], [0], [0], [1], [0, 0, 1, 1], [], []>} : vector<8x8xf32>, vector<8x384xf32>, vector<8x384xf32> -> vector<8x384xf32>
      %158 = arith.addf %153, %157 : vector<8x384xf32>
      %159 = vector.extract_strided_slice %77 {offsets = [2, 0, 0], sizes = [1, 8, 8], strides = [1, 1, 1]} : vector<9x8x8xf32> to vector<1x8x8xf32>
      %160 = vector.shape_cast %159 : vector<1x8x8xf32> to vector<8x8xf32>
      %c0_98 = arith.constant 0 : index
      %c111_99 = arith.constant 111 : index
      %161 = vector.load %arg15[%c0_98, %c111_99] : memref<8x640xf32, #tpu.memory_space<vmem>>, vector<8x384xf32>
      %cst_100 = arith.constant dense<0.000000e+00> : vector<8x384xf32>
      %162 = tpu.matmul %160, %161, %cst_100 {dimension_numbers = #tpu.dot_dimension_numbers<[1], [0], [0], [1], [0, 0, 1, 1], [], []>} : vector<8x8xf32>, vector<8x384xf32>, vector<8x384xf32> -> vector<8x384xf32>
      %163 = arith.addf %158, %162 : vector<8x384xf32>
      %164 = vector.extract_strided_slice %77 {offsets = [3, 0, 0], sizes = [1, 8, 8], strides = [1, 1, 1]} : vector<9x8x8xf32> to vector<1x8x8xf32>
      %165 = vector.shape_cast %164 : vector<1x8x8xf32> to vector<8x8xf32>
      %c0_101 = arith.constant 0 : index
      %c127_102 = arith.constant 127 : index
      %166 = vector.load %arg15[%c0_101, %c127_102] : memref<8x640xf32, #tpu.memory_space<vmem>>, vector<8x384xf32>
      %cst_103 = arith.constant dense<0.000000e+00> : vector<8x384xf32>
      %167 = tpu.matmul %165, %166, %cst_103 {dimension_numbers = #tpu.dot_dimension_numbers<[1], [0], [0], [1], [0, 0, 1, 1], [], []>} : vector<8x8xf32>, vector<8x384xf32>, vector<8x384xf32> -> vector<8x384xf32>
      %168 = arith.addf %163, %167 : vector<8x384xf32>
      %169 = vector.extract_strided_slice %77 {offsets = [4, 0, 0], sizes = [1, 8, 8], strides = [1, 1, 1]} : vector<9x8x8xf32> to vector<1x8x8xf32>
      %170 = vector.shape_cast %169 : vector<1x8x8xf32> to vector<8x8xf32>
      %c0_104 = arith.constant 0 : index
      %c128_105 = arith.constant 128 : index
      %171 = vector.load %arg15[%c0_104, %c128_105] : memref<8x640xf32, #tpu.memory_space<vmem>>, vector<8x384xf32>
      %cst_106 = arith.constant dense<0.000000e+00> : vector<8x384xf32>
      %172 = tpu.matmul %170, %171, %cst_106 {dimension_numbers = #tpu.dot_dimension_numbers<[1], [0], [0], [1], [0, 0, 1, 1], [], []>} : vector<8x8xf32>, vector<8x384xf32>, vector<8x384xf32> -> vector<8x384xf32>
      %173 = arith.addf %168, %172 : vector<8x384xf32>
      %174 = vector.extract_strided_slice %77 {offsets = [5, 0, 0], sizes = [1, 8, 8], strides = [1, 1, 1]} : vector<9x8x8xf32> to vector<1x8x8xf32>
      %175 = vector.shape_cast %174 : vector<1x8x8xf32> to vector<8x8xf32>
      %c0_107 = arith.constant 0 : index
      %c129_108 = arith.constant 129 : index
      %176 = vector.load %arg15[%c0_107, %c129_108] : memref<8x640xf32, #tpu.memory_space<vmem>>, vector<8x384xf32>
      %cst_109 = arith.constant dense<0.000000e+00> : vector<8x384xf32>
      %177 = tpu.matmul %175, %176, %cst_109 {dimension_numbers = #tpu.dot_dimension_numbers<[1], [0], [0], [1], [0, 0, 1, 1], [], []>} : vector<8x8xf32>, vector<8x384xf32>, vector<8x384xf32> -> vector<8x384xf32>
      %178 = arith.addf %173, %177 : vector<8x384xf32>
      %179 = vector.extract_strided_slice %77 {offsets = [6, 0, 0], sizes = [1, 8, 8], strides = [1, 1, 1]} : vector<9x8x8xf32> to vector<1x8x8xf32>
      %180 = vector.shape_cast %179 : vector<1x8x8xf32> to vector<8x8xf32>
      %c0_110 = arith.constant 0 : index
      %c145_111 = arith.constant 145 : index
      %181 = vector.load %arg15[%c0_110, %c145_111] : memref<8x640xf32, #tpu.memory_space<vmem>>, vector<8x384xf32>
      %cst_112 = arith.constant dense<0.000000e+00> : vector<8x384xf32>
      %182 = tpu.matmul %180, %181, %cst_112 {dimension_numbers = #tpu.dot_dimension_numbers<[1], [0], [0], [1], [0, 0, 1, 1], [], []>} : vector<8x8xf32>, vector<8x384xf32>, vector<8x384xf32> -> vector<8x384xf32>
      %183 = arith.addf %178, %182 : vector<8x384xf32>
      %184 = vector.extract_strided_slice %77 {offsets = [7, 0, 0], sizes = [1, 8, 8], strides = [1, 1, 1]} : vector<9x8x8xf32> to vector<1x8x8xf32>
      %185 = vector.shape_cast %184 : vector<1x8x8xf32> to vector<8x8xf32>
      %c0_113 = arith.constant 0 : index
      %c146_114 = arith.constant 146 : index
      %186 = vector.load %arg15[%c0_113, %c146_114] : memref<8x640xf32, #tpu.memory_space<vmem>>, vector<8x384xf32>
      %cst_115 = arith.constant dense<0.000000e+00> : vector<8x384xf32>
      %187 = tpu.matmul %185, %186, %cst_115 {dimension_numbers = #tpu.dot_dimension_numbers<[1], [0], [0], [1], [0, 0, 1, 1], [], []>} : vector<8x8xf32>, vector<8x384xf32>, vector<8x384xf32> -> vector<8x384xf32>
      %188 = arith.addf %183, %187 : vector<8x384xf32>
      %189 = vector.extract_strided_slice %77 {offsets = [8, 0, 0], sizes = [1, 8, 8], strides = [1, 1, 1]} : vector<9x8x8xf32> to vector<1x8x8xf32>
      %190 = vector.shape_cast %189 : vector<1x8x8xf32> to vector<8x8xf32>
      %c0_116 = arith.constant 0 : index
      %c147_117 = arith.constant 147 : index
      %191 = vector.load %arg15[%c0_116, %c147_117] : memref<8x640xf32, #tpu.memory_space<vmem>>, vector<8x384xf32>
      %cst_118 = arith.constant dense<0.000000e+00> : vector<8x384xf32>
      %192 = tpu.matmul %190, %191, %cst_118 {dimension_numbers = #tpu.dot_dimension_numbers<[1], [0], [0], [1], [0, 0, 1, 1], [], []>} : vector<8x8xf32>, vector<8x384xf32>, vector<8x384xf32> -> vector<8x384xf32>
      %193 = arith.addf %188, %192 : vector<8x384xf32>
      %194 = vector.broadcast %80 : vector<8x1xf32> to vector<8x384xf32>
      %195 = arith.addf %193, %194 : vector<8x384xf32>
      %cst_119 = arith.constant 0.000000e+00 : f32
      %196 = vector.shape_cast %2 : vector<1x384xi1> to vector<1x384xi1>
      %197 = vector.broadcast %196 : vector<1x384xi1> to vector<8x384xi1>
      %198 = vector.broadcast %cst_119 : f32 to vector<8x384xf32>
      %199 = arith.select %197, %195, %198 : vector<8x384xi1>, vector<8x384xf32>
      %cst_120 = arith.constant dense<0.000000e+00> : vector<8xf32>
      %200 = vector.multi_reduction <add>, %199, %cst_120 [1] : vector<8x384xf32> to vector<8xf32>
      %201 = vector.shape_cast %200 : vector<8xf32> to vector<8x1xf32>
      %cst_121 = arith.constant 3.906250e-03 : f32
      %202 = vector.broadcast %cst_121 : f32 to vector<8x1xf32>
      %203 = arith.mulf %201, %202 : vector<8x1xf32>
      %cst_122 = arith.constant dense<0.000000e+00> : vector<8x1xf32>
      %204 = tpu.matmul %83, %203, %cst_122 {dimension_numbers = #tpu.dot_dimension_numbers<[1], [0], [0], [1], [0, 0, 1, 1], [], []>} : vector<8x8xf32>, vector<8x1xf32>, vector<8x1xf32> -> vector<8x1xf32>
      %205 = arith.addf %204, %86 : vector<8x1xf32>
      %cst_123 = arith.constant 0.000000e+00 : f32
      %206 = vector.broadcast %cst_123 : f32 to vector<8x1xf32>
      %207 = arith.maximumf %205, %206 : vector<8x1xf32>
      %cst_124 = arith.constant dense<0.000000e+00> : vector<8x1xf32>
      %208 = tpu.matmul %89, %207, %cst_124 {dimension_numbers = #tpu.dot_dimension_numbers<[1], [0], [0], [1], [0, 0, 1, 1], [], []>} : vector<8x8xf32>, vector<8x1xf32>, vector<8x1xf32> -> vector<8x1xf32>
      %209 = arith.addf %208, %92 : vector<8x1xf32>
      %210 = arith.negf %209 : vector<8x1xf32>
      %211 = math.exp %210 : vector<8x1xf32>
      %cst_125 = arith.constant 1.000000e+00 : f32
      %212 = vector.broadcast %cst_125 : f32 to vector<8x1xf32>
      %213 = arith.addf %212, %211 : vector<8x1xf32>
      %214 = arith.divf %212, %213 : vector<8x1xf32>
      %c0_126 = arith.constant 0 : index
      %c128_127 = arith.constant 128 : index
      %215 = vector.load %arg14[%c0_126, %c128_127] : memref<8x640xf32, #tpu.memory_space<vmem>>, vector<8x384xf32>
      %216 = vector.broadcast %214 : vector<8x1xf32> to vector<8x384xf32>
      %217 = arith.mulf %199, %216 : vector<8x384xf32>
      %218 = arith.addf %215, %217 : vector<8x384xf32>
      %c0_128 = arith.constant 0 : index
      %c128_129 = arith.constant 128 : index
      %219 = vector.load %arg14[%c0_128, %c128_129] : memref<8x640xf32, #tpu.memory_space<vmem>>, vector<8x384xf32>
      tpu.vector_store %arg14[%c0_128, %c128_129], %218 {strides = array<i32>} : memref<8x640xf32, #tpu.memory_space<vmem>>, vector<8x384xf32>,
    }
    %c2_i32_9 = arith.constant 2 : i32
    %c0_10 = arith.constant 0 : index
    %c0_11 = arith.constant 0 : index
    %c0_12 = arith.constant 0 : index
    %9 = vector.load %arg11[%c0_10, %c0_11, %c0_12] : memref<9x8x8xf32, #tpu.memory_space<vmem>>, vector<9x8x8xf32>
    %cst_13 = arith.constant 0.000000e+00 : f32
    %10 = vector.broadcast %cst_13 : f32 to vector<8x384xf32>
    %11 = vector.extract_strided_slice %9 {offsets = [0, 0, 0], sizes = [1, 8, 8], strides = [1, 1, 1]} : vector<9x8x8xf32> to vector<1x8x8xf32>
    %12 = vector.shape_cast %11 : vector<1x8x8xf32> to vector<8x8xf32>
    %c0_14 = arith.constant 0 : index
    %c109 = arith.constant 109 : index
    %13 = vector.load %arg14[%c0_14, %c109] : memref<8x640xf32, #tpu.memory_space<vmem>>, vector<8x384xf32>
    %cst_15 = arith.constant dense<0.000000e+00> : vector<8x384xf32>
    %14 = tpu.matmul %12, %13, %cst_15 {dimension_numbers = #tpu.dot_dimension_numbers<[1], [0], [0], [1], [0, 0, 1, 1], [], []>} : vector<8x8xf32>, vector<8x384xf32>, vector<8x384xf32> -> vector<8x384xf32>
    %15 = arith.addf %10, %14 : vector<8x384xf32>
    %16 = vector.extract_strided_slice %9 {offsets = [1, 0, 0], sizes = [1, 8, 8], strides = [1, 1, 1]} : vector<9x8x8xf32> to vector<1x8x8xf32>
    %17 = vector.shape_cast %16 : vector<1x8x8xf32> to vector<8x8xf32>
    %c0_16 = arith.constant 0 : index
    %c110 = arith.constant 110 : index
    %18 = vector.load %arg14[%c0_16, %c110] : memref<8x640xf32, #tpu.memory_space<vmem>>, vector<8x384xf32>
    %cst_17 = arith.constant dense<0.000000e+00> : vector<8x384xf32>
    %19 = tpu.matmul %17, %18, %cst_17 {dimension_numbers = #tpu.dot_dimension_numbers<[1], [0], [0], [1], [0, 0, 1, 1], [], []>} : vector<8x8xf32>, vector<8x384xf32>, vector<8x384xf32> -> vector<8x384xf32>
    %20 = arith.addf %15, %19 : vector<8x384xf32>
    %21 = vector.extract_strided_slice %9 {offsets = [2, 0, 0], sizes = [1, 8, 8], strides = [1, 1, 1]} : vector<9x8x8xf32> to vector<1x8x8xf32>
    %22 = vector.shape_cast %21 : vector<1x8x8xf32> to vector<8x8xf32>
    %c0_18 = arith.constant 0 : index
    %c111 = arith.constant 111 : index
    %23 = vector.load %arg14[%c0_18, %c111] : memref<8x640xf32, #tpu.memory_space<vmem>>, vector<8x384xf32>
    %cst_19 = arith.constant dense<0.000000e+00> : vector<8x384xf32>
    %24 = tpu.matmul %22, %23, %cst_19 {dimension_numbers = #tpu.dot_dimension_numbers<[1], [0], [0], [1], [0, 0, 1, 1], [], []>} : vector<8x8xf32>, vector<8x384xf32>, vector<8x384xf32> -> vector<8x384xf32>
    %25 = arith.addf %20, %24 : vector<8x384xf32>
    %26 = vector.extract_strided_slice %9 {offsets = [3, 0, 0], sizes = [1, 8, 8], strides = [1, 1, 1]} : vector<9x8x8xf32> to vector<1x8x8xf32>
    %27 = vector.shape_cast %26 : vector<1x8x8xf32> to vector<8x8xf32>
    %c0_20 = arith.constant 0 : index
    %c127 = arith.constant 127 : index
    %28 = vector.load %arg14[%c0_20, %c127] : memref<8x640xf32, #tpu.memory_space<vmem>>, vector<8x384xf32>
    %cst_21 = arith.constant dense<0.000000e+00> : vector<8x384xf32>
    %29 = tpu.matmul %27, %28, %cst_21 {dimension_numbers = #tpu.dot_dimension_numbers<[1], [0], [0], [1], [0, 0, 1, 1], [], []>} : vector<8x8xf32>, vector<8x384xf32>, vector<8x384xf32> -> vector<8x384xf32>
    %30 = arith.addf %25, %29 : vector<8x384xf32>
    %31 = vector.extract_strided_slice %9 {offsets = [4, 0, 0], sizes = [1, 8, 8], strides = [1, 1, 1]} : vector<9x8x8xf32> to vector<1x8x8xf32>
    %32 = vector.shape_cast %31 : vector<1x8x8xf32> to vector<8x8xf32>
    %c0_22 = arith.constant 0 : index
    %c128 = arith.constant 128 : index
    %33 = vector.load %arg14[%c0_22, %c128] : memref<8x640xf32, #tpu.memory_space<vmem>>, vector<8x384xf32>
    %cst_23 = arith.constant dense<0.000000e+00> : vector<8x384xf32>
    %34 = tpu.matmul %32, %33, %cst_23 {dimension_numbers = #tpu.dot_dimension_numbers<[1], [0], [0], [1], [0, 0, 1, 1], [], []>} : vector<8x8xf32>, vector<8x384xf32>, vector<8x384xf32> -> vector<8x384xf32>
    %35 = arith.addf %30, %34 : vector<8x384xf32>
    %36 = vector.extract_strided_slice %9 {offsets = [5, 0, 0], sizes = [1, 8, 8], strides = [1, 1, 1]} : vector<9x8x8xf32> to vector<1x8x8xf32>
    %37 = vector.shape_cast %36 : vector<1x8x8xf32> to vector<8x8xf32>
    %c0_24 = arith.constant 0 : index
    %c129 = arith.constant 129 : index
    %38 = vector.load %arg14[%c0_24, %c129] : memref<8x640xf32, #tpu.memory_space<vmem>>, vector<8x384xf32>
    %cst_25 = arith.constant dense<0.000000e+00> : vector<8x384xf32>
    %39 = tpu.matmul %37, %38, %cst_25 {dimension_numbers = #tpu.dot_dimension_numbers<[1], [0], [0], [1], [0, 0, 1, 1], [], []>} : vector<8x8xf32>, vector<8x384xf32>, vector<8x384xf32> -> vector<8x384xf32>
    %40 = arith.addf %35, %39 : vector<8x384xf32>
    %41 = vector.extract_strided_slice %9 {offsets = [6, 0, 0], sizes = [1, 8, 8], strides = [1, 1, 1]} : vector<9x8x8xf32> to vector<1x8x8xf32>
    %42 = vector.shape_cast %41 : vector<1x8x8xf32> to vector<8x8xf32>
    %c0_26 = arith.constant 0 : index
    %c145 = arith.constant 145 : index
    %43 = vector.load %arg14[%c0_26, %c145] : memref<8x640xf32, #tpu.memory_space<vmem>>, vector<8x384xf32>
    %cst_27 = arith.constant dense<0.000000e+00> : vector<8x384xf32>
    %44 = tpu.matmul %42, %43, %cst_27 {dimension_numbers = #tpu.dot_dimension_numbers<[1], [0], [0], [1], [0, 0, 1, 1], [], []>} : vector<8x8xf32>, vector<8x384xf32>, vector<8x384xf32> -> vector<8x384xf32>
    %45 = arith.addf %40, %44 : vector<8x384xf32>
    %46 = vector.extract_strided_slice %9 {offsets = [7, 0, 0], sizes = [1, 8, 8], strides = [1, 1, 1]} : vector<9x8x8xf32> to vector<1x8x8xf32>
    %47 = vector.shape_cast %46 : vector<1x8x8xf32> to vector<8x8xf32>
    %c0_28 = arith.constant 0 : index
    %c146 = arith.constant 146 : index
    %48 = vector.load %arg14[%c0_28, %c146] : memref<8x640xf32, #tpu.memory_space<vmem>>, vector<8x384xf32>
    %cst_29 = arith.constant dense<0.000000e+00> : vector<8x384xf32>
    %49 = tpu.matmul %47, %48, %cst_29 {dimension_numbers = #tpu.dot_dimension_numbers<[1], [0], [0], [1], [0, 0, 1, 1], [], []>} : vector<8x8xf32>, vector<8x384xf32>, vector<8x384xf32> -> vector<8x384xf32>
    %50 = arith.addf %45, %49 : vector<8x384xf32>
    %51 = vector.extract_strided_slice %9 {offsets = [8, 0, 0], sizes = [1, 8, 8], strides = [1, 1, 1]} : vector<9x8x8xf32> to vector<1x8x8xf32>
    %52 = vector.shape_cast %51 : vector<1x8x8xf32> to vector<8x8xf32>
    %c0_30 = arith.constant 0 : index
    %c147 = arith.constant 147 : index
    %53 = vector.load %arg14[%c0_30, %c147] : memref<8x640xf32, #tpu.memory_space<vmem>>, vector<8x384xf32>
    %cst_31 = arith.constant dense<0.000000e+00> : vector<8x384xf32>
    %54 = tpu.matmul %52, %53, %cst_31 {dimension_numbers = #tpu.dot_dimension_numbers<[1], [0], [0], [1], [0, 0, 1, 1], [], []>} : vector<8x8xf32>, vector<8x384xf32>, vector<8x384xf32> -> vector<8x384xf32>
    %55 = arith.addf %50, %54 : vector<8x384xf32>
    %c0_32 = arith.constant 0 : index
    %c0_33 = arith.constant 0 : index
    %56 = vector.load %arg12[%c0_32, %c0_33] : memref<8x1xf32, #tpu.memory_space<vmem>>, vector<8x1xf32>
    %57 = vector.broadcast %56 : vector<8x1xf32> to vector<8x384xf32>
    %58 = arith.addf %55, %57 : vector<8x384xf32>
    %cst_34 = arith.constant 0.000000e+00 : f32
    %59 = vector.shape_cast %2 : vector<1x384xi1> to vector<1x384xi1>
    %60 = vector.broadcast %59 : vector<1x384xi1> to vector<8x384xi1>
    %61 = vector.broadcast %cst_34 : f32 to vector<8x384xf32>
    %62 = arith.select %60, %58, %61 : vector<8x384xi1>, vector<8x384xf32>
    %c0_35 = arith.constant 0 : index
    %c0_36 = arith.constant 0 : index
    %c128_37 = arith.constant 128 : index
    %63 = vector.load %arg1[%c0_35, %c0_36, %c128_37] : memref<1x8x640xf32, #tpu.memory_space<vmem>>, vector<1x8x384xf32>
    %64 = vector.shape_cast %63 : vector<1x8x384xf32> to vector<8x384xf32>
    %65 = arith.addf %64, %62 : vector<8x384xf32>
    %c0_38 = arith.constant 0 : index
    %c0_39 = arith.constant 0 : index
    %c0_40 = arith.constant 0 : index
    %66 = vector.load %arg13[%c0_38, %c0_39, %c0_40] : memref<1x8x384xf32, #tpu.memory_space<vmem>>, vector<1x8x384xf32>
    %67 = vector.shape_cast %66 : vector<1x8x384xf32> to vector<8x384xf32>
    %68 = vector.shape_cast %65 : vector<8x384xf32> to vector<1x8x384xf32>
    tpu.vector_store %arg13[%c0_38, %c0_39, %c0_40], %68 {strides = array<i32>} : memref<1x8x384xf32, #tpu.memory_space<vmem>>, vector<1x8x384xf32>,
    return
  }
  func.func @transform_0(%arg0: i32) -> (i32, i32, i32) {
    %c0_i32 = arith.constant 0 : i32
    %c0_i32_0 = arith.constant 0 : i32
    %c0_i32_1 = arith.constant 0 : i32
    return %arg0, %c0_i32, %c0_i32_0 : i32, i32, i32
  }
  func.func @transform_1(%arg0: i32) -> (i32, i32) {
    %c0_i32 = arith.constant 0 : i32
    %c0_i32_0 = arith.constant 0 : i32
    %c0_i32_1 = arith.constant 0 : i32
    return %c0_i32, %c0_i32_0 : i32, i32
  }
  func.func @transform_2(%arg0: i32) -> (i32, i32, i32, i32) {
    %c0_i32 = arith.constant 0 : i32
    %c0_i32_0 = arith.constant 0 : i32
    %c0_i32_1 = arith.constant 0 : i32
    %c0_i32_2 = arith.constant 0 : i32
    %c0_i32_3 = arith.constant 0 : i32
    return %c0_i32, %c0_i32_0, %c0_i32_1, %c0_i32_2 : i32, i32, i32, i32
  }
  func.func @transform_3(%arg0: i32) -> (i32, i32, i32) {
    %c0_i32 = arith.constant 0 : i32
    %c0_i32_0 = arith.constant 0 : i32
    %c0_i32_1 = arith.constant 0 : i32
    %c0_i32_2 = arith.constant 0 : i32
    return %c0_i32, %c0_i32_0, %c0_i32_1 : i32, i32, i32
  }
  func.func @transform_4(%arg0: i32) -> (i32, i32, i32, i32) {
    %c0_i32 = arith.constant 0 : i32
    %c0_i32_0 = arith.constant 0 : i32
    %c0_i32_1 = arith.constant 0 : i32
    %c0_i32_2 = arith.constant 0 : i32
    %c0_i32_3 = arith.constant 0 : i32
    return %c0_i32, %c0_i32_0, %c0_i32_1, %c0_i32_2 : i32, i32, i32, i32
  }
  func.func @transform_5(%arg0: i32) -> (i32, i32, i32) {
    %c0_i32 = arith.constant 0 : i32
    %c0_i32_0 = arith.constant 0 : i32
    %c0_i32_1 = arith.constant 0 : i32
    %c0_i32_2 = arith.constant 0 : i32
    return %c0_i32, %c0_i32_0, %c0_i32_1 : i32, i32, i32
  }
  func.func @transform_6(%arg0: i32) -> (i32, i32, i32) {
    %c0_i32 = arith.constant 0 : i32
    %c0_i32_0 = arith.constant 0 : i32
    %c0_i32_1 = arith.constant 0 : i32
    %c0_i32_2 = arith.constant 0 : i32
    return %c0_i32, %c0_i32_0, %c0_i32_1 : i32, i32, i32
  }
  func.func @transform_7(%arg0: i32) -> (i32, i32, i32) {
    %c0_i32 = arith.constant 0 : i32
    %c0_i32_0 = arith.constant 0 : i32
    %c0_i32_1 = arith.constant 0 : i32
    %c0_i32_2 = arith.constant 0 : i32
    return %c0_i32, %c0_i32_0, %c0_i32_1 : i32, i32, i32
  }
  func.func @transform_8(%arg0: i32) -> (i32, i32, i32) {
    %c0_i32 = arith.constant 0 : i32
    %c0_i32_0 = arith.constant 0 : i32
    %c0_i32_1 = arith.constant 0 : i32
    %c0_i32_2 = arith.constant 0 : i32
    return %c0_i32, %c0_i32_0, %c0_i32_1 : i32, i32, i32
  }
  func.func @transform_9(%arg0: i32) -> (i32, i32, i32) {
    %c0_i32 = arith.constant 0 : i32
    %c0_i32_0 = arith.constant 0 : i32
    %c0_i32_1 = arith.constant 0 : i32
    %c0_i32_2 = arith.constant 0 : i32
    return %c0_i32, %c0_i32_0, %c0_i32_1 : i32, i32, i32
  }
  func.func @transform_10(%arg0: i32) -> (i32, i32, i32) {
    %c0_i32 = arith.constant 0 : i32
    %c0_i32_0 = arith.constant 0 : i32
    %c0_i32_1 = arith.constant 0 : i32
    %c0_i32_2 = arith.constant 0 : i32
    return %c0_i32, %c0_i32_0, %c0_i32_1 : i32, i32, i32
  }
  func.func @transform_11(%arg0: i32) -> (i32, i32) {
    %c0_i32 = arith.constant 0 : i32
    %c0_i32_0 = arith.constant 0 : i32
    %c0_i32_1 = arith.constant 0 : i32
    return %c0_i32, %c0_i32_0 : i32, i32
  }
  func.func @transform_12(%arg0: i32) -> (i32, i32, i32) {
    %c0_i32 = arith.constant 0 : i32
    %c0_i32_0 = arith.constant 0 : i32
    %c0_i32_1 = arith.constant 0 : i32
    return %arg0, %c0_i32, %c0_i32_0 : i32, i32, i32
  }
}

</mosaic_0001>

<llo_original>
// kernel: rg_forward.1
$region0: #{rg_forward.1}
  #allocation0 [shape = 'u32[]', space=smem, size = 0x4, offset = 0x4, fixed_abs, tag = 'smem constant byte address 0x4 - core index']
  #allocation1 [shape = 'u32[72,128]{1,0:T(1,128)}', space=vmem, size = 0x9000, scoped, tag = 'internal scratch']
  #allocation2 [shape = 'f32[8,640]{1,0:T(8,128)}', space=vmem, size = 0x5000, scoped, tag = 'scratch operand']
  #allocation3 [shape = 'f32[8,640]{1,0:T(8,128)}', space=vmem, size = 0x5000, scoped, tag = 'scratch operand']
  %s0 = inlined_call_operand.vmem [shape: f32[2,8,640], index: 0, kind: input, shape index: {}]
  %s1 = inlined_call_operand.vmem [shape: f32[1,384], index: 1, kind: input, shape index: {}]
  %s2 = inlined_call_operand.vmem [shape: f32[2,9,8,8], index: 2, kind: input, shape index: {}]
  %s3 = inlined_call_operand.vmem [shape: f32[2,8,1], index: 3, kind: input, shape index: {}]
  %s4 = inlined_call_operand.vmem [shape: f32[2,9,8,8], index: 4, kind: input, shape index: {}]
  %s5 = inlined_call_operand.vmem [shape: f32[2,8,1], index: 5, kind: input, shape index: {}]
  %s6 = inlined_call_operand.vmem [shape: f32[2,8,8], index: 6, kind: input, shape index: {}]
  %s7 = inlined_call_operand.vmem [shape: f32[2,8,1], index: 7, kind: input, shape index: {}]
  %s8 = inlined_call_operand.vmem [shape: f32[2,8,8], index: 8, kind: input, shape index: {}]
  %s9 = inlined_call_operand.vmem [shape: f32[2,8,1], index: 9, kind: input, shape index: {}]
  %s10 = inlined_call_operand.vmem [shape: f32[9,8,8], index: 10, kind: input, shape index: {}]
  %s11 = inlined_call_operand.vmem [shape: f32[8,1], index: 11, kind: input, shape index: {}]
  %s12 = inlined_call_operand.vmem [shape: f32[2,8,384], index: 12, kind: output, shape index: {}]
  %s13 = sld [smem:[#allocation0]]
  $region88: #{rg_forward.1} parent=0
    _
  %s15 = ssub.s32 1, %s13
  %s16 = scalar_select 0, %s15, %s13
  loop: start=0, step=1, limit=4
  $region2: #{rg_forward.1} parent=0 // loop_pre_header
    _
  $region3: #{rg_forward.1} parent=0 // loop_header
    %s18 = sphi 0, %s22
    %p19 = scmp.ge.s32.totalorder %s18, 4
    %s28 = sphi 0, %s30
    %s31 = sphi 0, %s28
    %s32 = sphi 0, %s31
    %s48 = sphi 0, %s32
    %s52 = sphi 0, %s52
    %s54 = sphi 0, %s52
    %s55 = sphi 0, %s54
    %s69 = sphi 0, %s55
    %s73 = sphi 0, %s73
    %s75 = sphi 0, %s73
    %s76 = sphi 0, %s75
    %s90 = sphi 0, %s76
    %s94 = sphi 0, %s94
    %s96 = sphi 0, %s94
    %s97 = sphi 0, %s96
    %s111 = sphi 0, %s97
    %s115 = sphi 0, %s115
    %s117 = sphi 0, %s115
    %s118 = sphi 0, %s117
    %s132 = sphi 0, %s118
    %s136 = sphi 0, %s136
    %s138 = sphi 0, %s136
    %s139 = sphi 0, %s138
    %s153 = sphi 0, %s139
    %s157 = sphi 0, %s157
    %s159 = sphi 0, %s157
    %s160 = sphi 0, %s159
    %s174 = sphi 0, %s160
    %s178 = sphi 0, %s178
    %s180 = sphi 0, %s178
    %s181 = sphi 0, %s180
    %s195 = sphi 0, %s181
    %s199 = sphi 0, %s199
    %s201 = sphi 0, %s199
    %s202 = sphi 0, %s201
    %s216 = sphi 0, %s202
    %s220 = sphi 0, %s220
    %s222 = sphi 0, %s220
    %s223 = sphi 0, %s222
    %s237 = sphi 0, %s223
    %s241 = sphi 0, %s241
    %s243 = sphi 0, %s241
    %s244 = sphi 0, %s243
    %s258 = sphi 0, %s244
    %s262 = sphi 0, %s262
    %s264 = sphi 0, %s262
    %s265 = sphi 0, %s264
    %s279 = sphi 0, %s265
    %s285 = sphi 0, %s287
    %s288 = sphi 0, %s285
    %s289 = sphi 0, %s288
    %s305 = sphi 0, %s289
  $region4: #{rg_forward.1} parent=0 // loop_header_branch
    %21 = sbr.rel (%p19) target = $region8
  $region5: #{rg_forward.1} parent=0 // loop_body
    %s23 = ssub.s32 %s18, 1
    %s24 = ssub.s32 %s18, 2
    %s25 = sadd.s32 %s18, 1
    %s26 = ssub.s32 %s18, %s25
    %p27 = scmp.eq.s32.totalorder %s26, 0
    %s29 = sadd.s32 %s28, 1
    %s30 = scalar_select %p27, %s28, %s29
    %p33 = pneg %p27
    %p34 = scmp.eq.s32.totalorder %s18, 1
    %p35 = por %p33, %p34
    %p36 = scmp.ne.s32.totalorder %s28, %s31
    %p37 = scmp.eq.s32.totalorder %s18, 0
    %p38 = por %p36, %p37
    %p39 = scmp.ne.s32.totalorder %s28, %s31
    %p40 = scmp.eq.s32.totalorder %s23, 1
    %p41 = por %p39, %p40
    %p42 = scmp.ne.s32.totalorder %s31, %s32
    %p43 = scmp.eq.s32.totalorder %s23, 0
    %p44 = por %p42, %p43
    %p45 = scmp.ne.s32.totalorder %s31, %s32
    %p46 = scmp.eq.s32.totalorder %s24, 1
    %p47 = por %p45, %p46
    %p49 = scmp.ne.s32.totalorder %s32, %s48
    %p50 = scmp.eq.s32.totalorder %s24, 0
    %p51 = por %p49, %p50
    %s53 = sadd.s32 %s52, 1
    %p56 = scmp.eq.s32.totalorder %s18, 1
    %p57 = scmp.ne.s32.totalorder %s52, %s54
    %p58 = scmp.eq.s32.totalorder %s18, 0
    %p59 = por %p57, %p58
    %p60 = scmp.ne.s32.totalorder %s52, %s54
    %p61 = scmp.eq.s32.totalorder %s23, 1
    %p62 = por %p60, %p61
    %p63 = scmp.ne.s32.totalorder %s54, %s55
    %p64 = scmp.eq.s32.totalorder %s23, 0
    %p65 = por %p63, %p64
    %p66 = scmp.ne.s32.totalorder %s54, %s55
    %p67 = scmp.eq.s32.totalorder %s24, 1
    %p68 = por %p66, %p67
    %p70 = scmp.ne.s32.totalorder %s55, %s69
    %p71 = scmp.eq.s32.totalorder %s24, 0
    %p72 = por %p70, %p71
    %s74 = sadd.s32 %s73, 1
    %p77 = scmp.eq.s32.totalorder %s18, 1
    %p78 = scmp.ne.s32.totalorder %s73, %s75
    %p79 = scmp.eq.s32.totalorder %s18, 0
    %p80 = por %p78, %p79
    %p81 = scmp.ne.s32.totalorder %s73, %s75
    %p82 = scmp.eq.s32.totalorder %s23, 1
    %p83 = por %p81, %p82
    %p84 = scmp.ne.s32.totalorder %s75, %s76
    %p85 = scmp.eq.s32.totalorder %s23, 0
    %p86 = por %p84, %p85
    %p87 = scmp.ne.s32.totalorder %s75, %s76
    %p88 = scmp.eq.s32.totalorder %s24, 1
    %p89 = por %p87, %p88
    %p91 = scmp.ne.s32.totalorder %s76, %s90
    %p92 = scmp.eq.s32.totalorder %s24, 0
    %p93 = por %p91, %p92
    %s95 = sadd.s32 %s94, 1
    %p98 = scmp.eq.s32.totalorder %s18, 1
    %p99 = scmp.ne.s32.totalorder %s94, %s96
    %p100 = scmp.eq.s32.totalorder %s18, 0
    %p101 = por %p99, %p100
    %p102 = scmp.ne.s32.totalorder %s94, %s96
    %p103 = scmp.eq.s32.totalorder %s23, 1
    %p104 = por %p102, %p103
    %p105 = scmp.ne.s32.totalorder %s96, %s97
    %p106 = scmp.eq.s32.totalorder %s23, 0
    %p107 = por %p105, %p106
    %p108 = scmp.ne.s32.totalorder %s96, %s97
    %p109 = scmp.eq.s32.totalorder %s24, 1
    %p110 = por %p108, %p109
    %p112 = scmp.ne.s32.totalorder %s97, %s111
    %p113 = scmp.eq.s32.totalorder %s24, 0
    %p114 = por %p112, %p113
    %s116 = sadd.s32 %s115, 1
    %p119 = scmp.eq.s32.totalorder %s18, 1
    %p120 = scmp.ne.s32.totalorder %s115, %s117
    %p121 = scmp.eq.s32.totalorder %s18, 0
    %p122 = por %p120, %p121
    %p123 = scmp.ne.s32.totalorder %s115, %s117
    %p124 = scmp.eq.s32.totalorder %s23, 1
    %p125 = por %p123, %p124
    %p126 = scmp.ne.s32.totalorder %s117, %s118
    %p127 = scmp.eq.s32.totalorder %s23, 0
    %p128 = por %p126, %p127
    %p129 = scmp.ne.s32.totalorder %s117, %s118
    %p130 = scmp.eq.s32.totalorder %s24, 1
    %p131 = por %p129, %p130
    %p133 = scmp.ne.s32.totalorder %s118, %s132
    %p134 = scmp.eq.s32.totalorder %s24, 0
    %p135 = por %p133, %p134
    %s137 = sadd.s32 %s136, 1
    %p140 = scmp.eq.s32.totalorder %s18, 1
    %p141 = scmp.ne.s32.totalorder %s136, %s138
    %p142 = scmp.eq.s32.totalorder %s18, 0
    %p143 = por %p141, %p142
    %p144 = scmp.ne.s32.totalorder %s136, %s138
    %p145 = scmp.eq.s32.totalorder %s23, 1
    %p146 = por %p144, %p145
    %p147 = scmp.ne.s32.totalorder %s138, %s139
    %p148 = scmp.eq.s32.totalorder %s23, 0
    %p149 = por %p147, %p148
    %p150 = scmp.ne.s32.totalorder %s138, %s139
    %p151 = scmp.eq.s32.totalorder %s24, 1
    %p152 = por %p150, %p151
    %p154 = scmp.ne.s32.totalorder %s139, %s153
    %p155 = scmp.eq.s32.totalorder %s24, 0
    %p156 = por %p154, %p155
    %s158 = sadd.s32 %s157, 1
    %p161 = scmp.eq.s32.totalorder %s18, 1
    %p162 = scmp.ne.s32.totalorder %s157, %s159
    %p163 = scmp.eq.s32.totalorder %s18, 0
    %p164 = por %p162, %p163
    %p165 = scmp.ne.s32.totalorder %s157, %s159
    %p166 = scmp.eq.s32.totalorder %s23, 1
    %p167 = por %p165, %p166
    %p168 = scmp.ne.s32.totalorder %s159, %s160
    %p169 = scmp.eq.s32.totalorder %s23, 0
    %p170 = por %p168, %p169
    %p171 = scmp.ne.s32.totalorder %s159, %s160
    %p172 = scmp.eq.s32.totalorder %s24, 1
    %p173 = por %p171, %p172
    %p175 = scmp.ne.s32.totalorder %s160, %s174
    %p176 = scmp.eq.s32.totalorder %s24, 0
    %p177 = por %p175, %p176
    %s179 = sadd.s32 %s178, 1
    %p182 = scmp.eq.s32.totalorder %s18, 1
    %p183 = scmp.ne.s32.totalorder %s178, %s180
    %p184 = scmp.eq.s32.totalorder %s18, 0
    %p185 = por %p183, %p184
    %p186 = scmp.ne.s32.totalorder %s178, %s180
    %p187 = scmp.eq.s32.totalorder %s23, 1
    %p188 = por %p186, %p187
    %p189 = scmp.ne.s32.totalorder %s180, %s181
    %p190 = scmp.eq.s32.totalorder %s23, 0
    %p191 = por %p189, %p190
    %p192 = scmp.ne.s32.totalorder %s180, %s181
    %p193 = scmp.eq.s32.totalorder %s24, 1
    %p194 = por %p192, %p193
    %p196 = scmp.ne.s32.totalorder %s181, %s195
    %p197 = scmp.eq.s32.totalorder %s24, 0
    %p198 = por %p196, %p197
    %s200 = sadd.s32 %s199, 1
    %p203 = scmp.eq.s32.totalorder %s18, 1
    %p204 = scmp.ne.s32.totalorder %s199, %s201
    %p205 = scmp.eq.s32.totalorder %s18, 0
    %p206 = por %p204, %p205
    %p207 = scmp.ne.s32.totalorder %s199, %s201
    %p208 = scmp.eq.s32.totalorder %s23, 1
    %p209 = por %p207, %p208
    %p210 = scmp.ne.s32.totalorder %s201, %s202
    %p211 = scmp.eq.s32.totalorder %s23, 0
    %p212 = por %p210, %p211
    %p213 = scmp.ne.s32.totalorder %s201, %s202
    %p214 = scmp.eq.s32.totalorder %s24, 1
    %p215 = por %p213, %p214
    %p217 = scmp.ne.s32.totalorder %s202, %s216
    %p218 = scmp.eq.s32.totalorder %s24, 0
    %p219 = por %p217, %p218
    %s221 = sadd.s32 %s220, 1
    %p224 = scmp.eq.s32.totalorder %s18, 1
    %p225 = scmp.ne.s32.totalorder %s220, %s222
    %p226 = scmp.eq.s32.totalorder %s18, 0
    %p227 = por %p225, %p226
    %p228 = scmp.ne.s32.totalorder %s220, %s222
    %p229 = scmp.eq.s32.totalorder %s23, 1
    %p230 = por %p228, %p229
    %p231 = scmp.ne.s32.totalorder %s222, %s223
    %p232 = scmp.eq.s32.totalorder %s23, 0
    %p233 = por %p231, %p232
    %p234 = scmp.ne.s32.totalorder %s222, %s223
    %p235 = scmp.eq.s32.totalorder %s24, 1
    %p236 = por %p234, %p235
    %p238 = scmp.ne.s32.totalorder %s223, %s237
    %p239 = scmp.eq.s32.totalorder %s24, 0
    %p240 = por %p238, %p239
    %s242 = sadd.s32 %s241, 1
    %p245 = scmp.eq.s32.totalorder %s18, 1
    %p246 = scmp.ne.s32.totalorder %s241, %s243
    %p247 = scmp.eq.s32.totalorder %s18, 0
    %p248 = por %p246, %p247
    %p249 = scmp.ne.s32.totalorder %s241, %s243
    %p250 = scmp.eq.s32.totalorder %s23, 1
    %p251 = por %p249, %p250
    %p252 = scmp.ne.s32.totalorder %s243, %s244
    %p253 = scmp.eq.s32.totalorder %s23, 0
    %p254 = por %p252, %p253
    %p255 = scmp.ne.s32.totalorder %s243, %s244
    %p256 = scmp.eq.s32.totalorder %s24, 1
    %p257 = por %p255, %p256
    %p259 = scmp.ne.s32.totalorder %s244, %s258
    %p260 = scmp.eq.s32.totalorder %s24, 0
    %p261 = por %p259, %p260
    %s263 = sadd.s32 %s262, 1
    %p266 = scmp.eq.s32.totalorder %s18, 1
    %p267 = scmp.ne.s32.totalorder %s262, %s264
    %p268 = scmp.eq.s32.totalorder %s18, 0
    %p269 = por %p267, %p268
    %p270 = scmp.ne.s32.totalorder %s262, %s264
    %p271 = scmp.eq.s32.totalorder %s23, 1
    %p272 = por %p270, %p271
    %p273 = scmp.ne.s32.totalorder %s264, %s265
    %p274 = scmp.eq.s32.totalorder %s23, 0
    %p275 = por %p273, %p274
    %p276 = scmp.ne.s32.totalorder %s264, %s265
    %p277 = scmp.eq.s32.totalorder %s24, 1
    %p278 = por %p276, %p277
    %p280 = scmp.ne.s32.totalorder %s265, %s279
    %p281 = scmp.eq.s32.totalorder %s24, 0
    %p282 = por %p280, %p281
    %s283 = ssub.s32 %s18, %s25
    %p284 = scmp.eq.s32.totalorder %s283, 0
    %s286 = sadd.s32 %s285, 1
    %s287 = scalar_select %p284, %s285, %s286
    %p290 = pneg %p284
    %p291 = scmp.eq.s32.totalorder %s18, 1
    %p292 = por %p290, %p291
    %p293 = scmp.ne.s32.totalorder %s285, %s288
    %p294 = scmp.eq.s32.totalorder %s18, 0
    %p295 = por %p293, %p294
    %p296 = scmp.ne.s32.totalorder %s285, %s288
    %p297 = scmp.eq.s32.totalorder %s23, 1
    %p298 = por %p296, %p297
    %p299 = scmp.ne.s32.totalorder %s288, %s289
    %p300 = scmp.eq.s32.totalorder %s23, 0
    %p301 = por %p299, %p300
    %p302 = scmp.ne.s32.totalorder %s288, %s289
    %p303 = scmp.eq.s32.totalorder %s24, 1
    %p304 = por %p302, %p303
    %p306 = scmp.ne.s32.totalorder %s289, %s305
    %p307 = scmp.eq.s32.totalorder %s24, 0
    %p308 = por %p306, %p307
    %p309 = scmp.le.s32.totalorder 1, %s18
    %p310 = scmp.lt.s32.totalorder %s18, 3
    %p311 = pnand %p309, %p310
    %p312 = pneg %p311
    // Predicated region
    $region9: #{rg_forward.1} parent=5 // pred_check
      _
    $region10: #{rg_forward.1} parent=5 // pred_check_branch
      %314 = sbr.rel (%p311) target = $region12
    $region11: #{rg_forward.1} parent=5 // pred_region
      %s315 = ssub.s32 %s18, 1
      // Predicated region
      $region13: #{rg_forward.1} parent=11 // pred_check
        %p316 = pneg %p65
      $region14: #{rg_forward.1} parent=11 // pred_check_branch
        %318 = sbr.rel (%p316) target = $region16
      $region15: #{rg_forward.1} parent=11 // pred_region
        _
      $region16: #{rg_forward.1} parent=11 // pred_fallthru
        _
      // Predicated region
      $region17: #{rg_forward.1} parent=11 // pred_check
        %p319 = pneg %p86
      $region18: #{rg_forward.1} parent=11 // pred_check_branch
        %321 = sbr.rel (%p319) target = $region20
      $region19: #{rg_forward.1} parent=11 // pred_region
        _
      $region20: #{rg_forward.1} parent=11 // pred_fallthru
        _
      // Predicated region
      $region21: #{rg_forward.1} parent=11 // pred_check
        %p322 = pneg %p107
      $region22: #{rg_forward.1} parent=11 // pred_check_branch
        %324 = sbr.rel (%p322) target = $region24
      $region23: #{rg_forward.1} parent=11 // pred_region
        _
      $region24: #{rg_forward.1} parent=11 // pred_fallthru
        _
      // Predicated region
      $region25: #{rg_forward.1} parent=11 // pred_check
        %p325 = pneg %p128
      $region26: #{rg_forward.1} parent=11 // pred_check_branch
        %327 = sbr.rel (%p325) target = $region28
      $region27: #{rg_forward.1} parent=11 // pred_region
        _
      $region28: #{rg_forward.1} parent=11 // pred_fallthru
        _
      // Predicated region
      $region29: #{rg_forward.1} parent=11 // pred_check
        %p328 = pneg %p149
      $region30: #{rg_forward.1} parent=11 // pred_check_branch
        %330 = sbr.rel (%p328) target = $region32
      $region31: #{rg_forward.1} parent=11 // pred_region
        _
      $region32: #{rg_forward.1} parent=11 // pred_fallthru
        _
      // Predicated region
      $region33: #{rg_forward.1} parent=11 // pred_check
        %p331 = pneg %p170
      $region34: #{rg_forward.1} parent=11 // pred_check_branch
        %333 = sbr.rel (%p331) target = $region36
      $region35: #{rg_forward.1} parent=11 // pred_region
        _
      $region36: #{rg_forward.1} parent=11 // pred_fallthru
        _
      // Predicated region
      $region37: #{rg_forward.1} parent=11 // pred_check
        %p334 = pneg %p191
      $region38: #{rg_forward.1} parent=11 // pred_check_branch
        %336 = sbr.rel (%p334) target = $region40
      $region39: #{rg_forward.1} parent=11 // pred_region
        _
      $region40: #{rg_forward.1} parent=11 // pred_fallthru
        _
      // Predicated region
      $region41: #{rg_forward.1} parent=11 // pred_check
        %p337 = pneg %p212
      $region42: #{rg_forward.1} parent=11 // pred_check_branch
        %339 = sbr.rel (%p337) target = $region44
      $region43: #{rg_forward.1} parent=11 // pred_region
        _
      $region44: #{rg_forward.1} parent=11 // pred_fallthru
        _
      // Predicated region
      $region45: #{rg_forward.1} parent=11 // pred_check
        %p340 = pneg %p233
      $region46: #{rg_forward.1} parent=11 // pred_check_branch
        %342 = sbr.rel (%p340) target = $region48
      $region47: #{rg_forward.1} parent=11 // pred_region
        _
      $region48: #{rg_forward.1} parent=11 // pred_fallthru
        _
      // Predicated region
      $region49: #{rg_forward.1} parent=11 // pred_check
        %p343 = pneg %p254
      $region50: #{rg_forward.1} parent=11 // pred_check_branch
        %345 = sbr.rel (%p343) target = $region52
      $region51: #{rg_forward.1} parent=11 // pred_region
        _
      $region52: #{rg_forward.1} parent=11 // pred_fallthru
        _
      // Predicated region
      $region53: #{rg_forward.1} parent=11 // pred_check
        %p346 = pneg %p275
      $region54: #{rg_forward.1} parent=11 // pred_check_branch
        %348 = sbr.rel (%p346) target = $region56
      $region55: #{rg_forward.1} parent=11 // pred_region
        _
      $region56: #{rg_forward.1} parent=11 // pred_fallthru
        _
    $region12: #{rg_forward.1} parent=5 // pred_fallthru
      _
    %p349 = scmp.lt.s32.totalorder %s18, 2
    // Predicated region
    $region57: #{rg_forward.1} parent=5 // pred_check
      %p350 = pneg %p349
    $region58: #{rg_forward.1} parent=5 // pred_check_branch
      %352 = sbr.rel (%p350) target = $region60
    $region59: #{rg_forward.1} parent=5 // pred_region
      // Predicated region
      $region61: #{rg_forward.1} parent=59 // pred_check
        %p353 = pneg %p38
      $region62: #{rg_forward.1} parent=59 // pred_check_branch
        %355 = sbr.rel (%p353) target = $region64
      $region63: #{rg_forward.1} parent=59 // pred_region
        %p356 = scmp.lt.s32.totalorder %s18, 1
        %s357 = scalar_select %p356, %s18, 1
        %s358 = smul.addr %s357, 5
        %s359 = smul.addr %s358, 8
        %s360 = scalar_lea.vmem %s0, %s359
      $region64: #{rg_forward.1} parent=59 // pred_fallthru
        _
    $region60: #{rg_forward.1} parent=5 // pred_fallthru
      _
    %p361 = scmp.le.s32.totalorder 1, %s18
    %p362 = scmp.lt.s32.totalorder %s18, 3
    %p363 = pnand %p361, %p362
    %p364 = pneg %p363
    // Predicated region
    $region65: #{rg_forward.1} parent=5 // pred_check
      _
    $region66: #{rg_forward.1} parent=5 // pred_check_branch
      %366 = sbr.rel (%p363) target = $region68
    $region67: #{rg_forward.1} parent=5 // pred_region
      %s367 = ssub.s32 %s18, 1
      %p368 = scmp.lt.s32.totalorder %s23, 1
      %s369 = scalar_select %p368, %s23, 1
      %s370 = smul.addr %s369, 5
      %s371 = smul.addr %s370, 8
      %s372 = scalar_lea.vmem %s0, %s371
      %p373 = pneg %p44
      %p374 = pneg %p41
      %p375 = pneg %p65
      %p376 = pneg %p62
      %p377 = pneg %p86
      %p378 = pneg %p83
      %p379 = pneg %p107
      %p380 = pneg %p104
      %p381 = pneg %p128
      %p382 = pneg %p125
      %p383 = pneg %p149
      %p384 = pneg %p146
      %p385 = pneg %p170
      %p386 = pneg %p167
      %p387 = pneg %p191
      %p388 = pneg %p188
      %p389 = pneg %p212
      %p390 = pneg %p209
      %p391 = pneg %p233
      %p392 = pneg %p230
      %p393 = pneg %p254
      %p394 = pneg %p251
      %p395 = pneg %p275
      %p396 = pneg %p272
      %p397 = pneg %p301
      %p398 = pneg %p298
      %p399 = scmp.lt.s32.totalorder %s23, 1
      %s400 = scalar_select %p399, %s23, 1
      %s401 = smul.addr %s400, 3
      %s402 = smul.addr %s401, 8
      %s403 = scalar_lea.vmem %s12, %s402
      %p404 = scmp.lt.s32.totalorder %s23, 1
      %s405 = scalar_select %p404, %s23, 1
      %s406 = smul.addr %s405, 5
      %s407 = smul.addr %s406, 8
      %s408 = scalar_lea.vmem %s0, %s407
      %p409 = scmp.lt.s32.totalorder %s23, 1
      %s410 = scalar_select %p409, %s23, 1
      %s411 = smul.addr %s410, 3
      %s412 = smul.addr %s411, 8
      %s413 = scalar_lea.vmem %s12, %s412
      %v414 = vld [vmem:[%s1] sm:$0x7]
      %vm415 = vcmp.gt.f32.partialorder %v414, 0.5
      %v416 = vld [vmem:[%s408] sm:$0xff]
      %v417 = vld [vmem:[%s408 + $0x8] sm:$0xff]
      %v418 = vld [vmem:[%s408 + $0x10] sm:$0xff]
      %v419 = vld [vmem:[%s408 + $0x18] sm:$0xff]
      %v420 = vld [vmem:[%s408 + $0x20] sm:$0xff]
      %421 = vst [vmem:[#allocation2] sm:$0xff] %v416
      %422 = vst [vmem:[#allocation2 + $0x8] sm:$0xff] %v417
      %423 = vst [vmem:[#allocation2 + $0x10] sm:$0xff] %v418
      %424 = vst [vmem:[#allocation2 + $0x18] sm:$0xff] %v419
      %425 = vst [vmem:[#allocation2 + $0x20] sm:$0xff] %v420
      %426 = vst [vmem:[#allocation3] sm:$0xff] 0.0
      %427 = vst [vmem:[#allocation3 + $0x8] sm:$0xff] 0.0
      %428 = vst [vmem:[#allocation3 + $0x10] sm:$0xff] 0.0
      %429 = vst [vmem:[#allocation3 + $0x18] sm:$0xff] 0.0
      %430 = vst [vmem:[#allocation3 + $0x20] sm:$0xff] 0.0
      loop: start=0, step=1, limit=2
      $region69: #{rg_forward.1} parent=67 // loop_pre_header
        _
      $region70: #{rg_forward.1} parent=67 // loop_header
        %s432 = sphi 0, %s436
        %p433 = scmp.ge.s32.totalorder %s432, 2
      $region71: #{rg_forward.1} parent=67 // loop_header_branch
        %435 = sbr.rel (%p433) target = $region75
      $region72: #{rg_forward.1} parent=67 // loop_body
        %s437 = smul.u32 %s432, 72
        %s438 = scalar_lea.vmem %s2, %s437
        %v439 = vld [vmem:[%s438] sm:$0xff]
        %v440 = vld [vmem:[%s438 + $0x8] sm:$0xff]
        %v441 = vld [vmem:[%s438 + $0x10] sm:$0xff]
        %v442 = vld [vmem:[%s438 + $0x18] sm:$0xff]
        %v443 = vld [vmem:[%s438 + $0x20] sm:$0xff]
        %v444 = vld [vmem:[%s438 + $0x28] sm:$0xff]
        %v445 = vld [vmem:[%s438 + $0x30] sm:$0xff]
        %v446 = vld [vmem:[%s438 + $0x38] sm:$0xff]
        %v447 = vld [vmem:[%s438 + $0x40] sm:$0xff]
        %s448 = smul.u32 %s432, 8
        %s449 = scalar_lea.vmem %s3, %s448
        %v450 = vld [vmem:[%s449] sm:$0xff]
        %s451 = scalar_lea.vmem %s4, %s437
        %v452 = vld [vmem:[%s451] sm:$0xff]
        %v453 = vld [vmem:[%s451 + $0x8] sm:$0xff]
        %v454 = vld [vmem:[%s451 + $0x10] sm:$0xff]
        %v455 = vld [vmem:[%s451 + $0x18] sm:$0xff]
        %v456 = vld [vmem:[%s451 + $0x20] sm:$0xff]
        %v457 = vld [vmem:[%s451 + $0x28] sm:$0xff]
        %v458 = vld [vmem:[%s451 + $0x30] sm:$0xff]
        %v459 = vld [vmem:[%s451 + $0x38] sm:$0xff]
        %v460 = vld [vmem:[%s451 + $0x40] sm:$0xff]
        %s461 = scalar_lea.vmem %s5, %s448
        %v462 = vld [vmem:[%s461] sm:$0xff]
        %s463 = scalar_lea.vmem %s6, %s448
        %v464 = vld [vmem:[%s463] sm:$0xff]
        %s465 = scalar_lea.vmem %s7, %s448
        %v466 = vld [vmem:[%s465] sm:$0xff]
        %s467 = scalar_lea.vmem %s8, %s448
        %v468 = vld [vmem:[%s467] sm:$0xff]
        %s469 = scalar_lea.vmem %s9, %s448
        %v470 = vld [vmem:[%s469] sm:$0xff]
        %v471 = vld [vmem:[#allocation2] sm:$0xff]
        %v472 = vld [vmem:[#allocation2 + $0x8] sm:$0xff]
        %v473 = vld [vmem:[#allocation2 + $0x10] sm:$0xff]
        %v474 = vld [vmem:[#allocation2 + $0x18] sm:$0xff]
        %479 = vrot.lane.b32.xlu0 %v471, 18
        %v480 = vpop.permute.xlu0 %479
        %481 = vrot.lane.b32.xlu0 %v472, 18
        %v482 = vpop.permute.xlu0 %481
        %483 = vrot.lane.b32.xlu0 %v473, 18
        %v484 = vpop.permute.xlu0 %483
        %485 = vrot.lane.b32.xlu0 %v474, 18
        %v486 = vpop.permute.xlu0 %485
        %vm487 = vcmask 146432
        %v488 = vsel %vm487, %v480, %v482
        %v489 = vsel %vm487, %v482, %v484
        %v490 = vsel %vm487, %v484, %v486
        %vm494 = vcmask 64512
        %v496 = vsel %vm494, %v440, 0
        %498 = vmatpush.msra.mxu0 0.0
        %499 = vmatpush.msra.mxu0 0.0
        %500 = vmatpush.msra.mxu0 0.0
        %501 = vmatpush.msra.mxu0 0.0
        %502 = vmatpush.msra.mxu0 0.0
        %503 = vmatpush.msra.mxu0 0.0
        %504 = vmatpush.msra.mxu0 0.0
        %505 = vmatpush.msra.mxu0 0.0
        %506 = vmatpush.msra.mxu0 0.0
        %507 = vmatpush.msra.mxu0 0.0
        %508 = vmatpush.msra.mxu0 0.0
        %509 = vmatpush.msra.mxu0 0.0
        %510 = vmatpush.msra.mxu0 0.0
        %511 = vmatpush.msra.mxu0 0.0
        %512 = vmatpush.msra.mxu0 0.0
        %513 = vmatpush.msra.mxu0 %v488
        %514 = vmatmul.f32.gmra.mxu0 %v496
        %v515 = vpop.f32.mrf.mxu0
        %v516 = vadd.f32 0.0, %v515
        %517 = vdwg.mxu0
        %518 = vmatpush.msra.mxu0 0.0
        %519 = vmatpush.msra.mxu0 0.0
        %520 = vmatpush.msra.mxu0 0.0
        %521 = vmatpush.msra.mxu0 0.0
        %522 = vmatpush.msra.mxu0 0.0
        %523 = vmatpush.msra.mxu0 0.0
        %524 = vmatpush.msra.mxu0 0.0
        %525 = vmatpush.msra.mxu0 0.0
        %526 = vmatpush.msra.mxu0 0.0
        %527 = vmatpush.msra.mxu0 0.0
        %528 = vmatpush.msra.mxu0 0.0
        %529 = vmatpush.msra.mxu0 0.0
        %530 = vmatpush.msra.mxu0 0.0
        %531 = vmatpush.msra.mxu0 0.0
        %532 = vmatpush.msra.mxu0 0.0
        %533 = vmatpush.msra.mxu0 %v489
        %534 = vmatmul.f32.gmra.mxu0 %v496
        %v535 = vpop.f32.mrf.mxu0
        %v536 = vadd.f32 0.0, %v535
        %537 = vdwg.mxu0
        %538 = vmatpush.msra.mxu0 0.0
        %539 = vmatpush.msra.mxu0 0.0
        %540 = vmatpush.msra.mxu0 0.0
        %541 = vmatpush.msra.mxu0 0.0
        %542 = vmatpush.msra.mxu0 0.0
        %543 = vmatpush.msra.mxu0 0.0
        %544 = vmatpush.msra.mxu0 0.0
        %545 = vmatpush.msra.mxu0 0.0
        %546 = vmatpush.msra.mxu0 0.0
        %547 = vmatpush.msra.mxu0 0.0
        %548 = vmatpush.msra.mxu0 0.0
        %549 = vmatpush.msra.mxu0 0.0
        %550 = vmatpush.msra.mxu0 0.0
        %551 = vmatpush.msra.mxu0 0.0
        %552 = vmatpush.msra.mxu0 0.0
        %553 = vmatpush.msra.mxu0 %v490
        %554 = vmatmul.f32.gmra.mxu0 %v496
        %v555 = vpop.f32.mrf.mxu0
        %v556 = vadd.f32 0.0, %v555
        %557 = vdwg.mxu0
        %558 = vrot.lane.b32.xlu0 %v471, 19
        %v559 = vpop.permute.xlu0 %558
        %560 = vrot.lane.b32.xlu0 %v472, 19
        %v561 = vpop.permute.xlu0 %560
        %562 = vrot.lane.b32.xlu0 %v473, 19
        %v563 = vpop.permute.xlu0 %562
        %564 = vrot.lane.b32.xlu0 %v474, 19
        %v565 = vpop.permute.xlu0 %564
        %vm566 = vcmask 154624
        %v567 = vsel %vm566, %v559, %v561
        %v568 = vsel %vm566, %v561, %v563
        %v569 = vsel %vm566, %v563, %v565
        %v574 = vsel %vm494, %v439, 0
        %576 = vmatpush.msra.mxu0 0.0
        %577 = vmatpush.msra.mxu0 0.0
        %578 = vmatpush.msra.mxu0 0.0
        %579 = vmatpush.msra.mxu0 0.0
        %580 = vmatpush.msra.mxu0 0.0
        %581 = vmatpush.msra.mxu0 0.0
        %582 = vmatpush.msra.mxu0 0.0
        %583 = vmatpush.msra.mxu0 0.0
        %584 = vmatpush.msra.mxu0 0.0
        %585 = vmatpush.msra.mxu0 0.0
        %586 = vmatpush.msra.mxu0 0.0
        %587 = vmatpush.msra.mxu0 0.0
        %588 = vmatpush.msra.mxu0 0.0
        %589 = vmatpush.msra.mxu0 0.0
        %590 = vmatpush.msra.mxu0 0.0
        %591 = vmatpush.msra.mxu0 %v567
        %592 = vmatmul.f32.gmra.mxu0 %v574
        %v593 = vpop.f32.mrf.mxu0
        %v594 = vadd.f32 %v516, %v593
        %595 = vdwg.mxu0
        %596 = vmatpush.msra.mxu0 0.0
        %597 = vmatpush.msra.mxu0 0.0
        %598 = vmatpush.msra.mxu0 0.0
        %599 = vmatpush.msra.mxu0 0.0
        %600 = vmatpush.msra.mxu0 0.0
        %601 = vmatpush.msra.mxu0 0.0
        %602 = vmatpush.msra.mxu0 0.0
        %603 = vmatpush.msra.mxu0 0.0
        %604 = vmatpush.msra.mxu0 0.0
        %605 = vmatpush.msra.mxu0 0.0
        %606 = vmatpush.msra.mxu0 0.0
        %607 = vmatpush.msra.mxu0 0.0
        %608 = vmatpush.msra.mxu0 0.0
        %609 = vmatpush.msra.mxu0 0.0
        %610 = vmatpush.msra.mxu0 0.0
        %611 = vmatpush.msra.mxu0 %v568
        %612 = vmatmul.f32.gmra.mxu0 %v574
        %v613 = vpop.f32.mrf.mxu0
        %v614 = vadd.f32 %v536, %v613
        %615 = vdwg.mxu0
        %616 = vmatpush.msra.mxu0 0.0
        %617 = vmatpush.msra.mxu0 0.0
        %618 = vmatpush.msra.mxu0 0.0
        %619 = vmatpush.msra.mxu0 0.0
        %620 = vmatpush.msra.mxu0 0.0
        %621 = vmatpush.msra.mxu0 0.0
        %622 = vmatpush.msra.mxu0 0.0
        %623 = vmatpush.msra.mxu0 0.0
        %624 = vmatpush.msra.mxu0 0.0
        %625 = vmatpush.msra.mxu0 0.0
        %626 = vmatpush.msra.mxu0 0.0
        %627 = vmatpush.msra.mxu0 0.0
        %628 = vmatpush.msra.mxu0 0.0
        %629 = vmatpush.msra.mxu0 0.0
        %630 = vmatpush.msra.mxu0 0.0
        %631 = vmatpush.msra.mxu0 %v569
        %632 = vmatmul.f32.gmra.mxu0 %v574
        %v633 = vpop.f32.mrf.mxu0
        %v634 = vadd.f32 %v556, %v633
        %635 = vdwg.mxu0
        %636 = vrot.lane.b32.xlu0 %v471, 17
        %v637 = vpop.permute.xlu0 %636
        %638 = vrot.lane.b32.xlu0 %v472, 17
        %v639 = vpop.permute.xlu0 %638
        %640 = vrot.lane.b32.xlu0 %v473, 17
        %v641 = vpop.permute.xlu0 %640
        %642 = vrot.lane.b32.xlu0 %v474, 17
        %v643 = vpop.permute.xlu0 %642
        %vm644 = vcmask 138240
        %v645 = vsel %vm644, %v637, %v639
        %v646 = vsel %vm644, %v639, %v641
        %v647 = vsel %vm644, %v641, %v643
        %v652 = vsel %vm494, %v441, 0
        %654 = vmatpush.msra.mxu0 0.0
        %655 = vmatpush.msra.mxu0 0.0
        %656 = vmatpush.msra.mxu0 0.0
        %657 = vmatpush.msra.mxu0 0.0
        %658 = vmatpush.msra.mxu0 0.0
        %659 = vmatpush.msra.mxu0 0.0
        %660 = vmatpush.msra.mxu0 0.0
        %661 = vmatpush.msra.mxu0 0.0
        %662 = vmatpush.msra.mxu0 0.0
        %663 = vmatpush.msra.mxu0 0.0
        %664 = vmatpush.msra.mxu0 0.0
        %665 = vmatpush.msra.mxu0 0.0
        %666 = vmatpush.msra.mxu0 0.0
        %667 = vmatpush.msra.mxu0 0.0
        %668 = vmatpush.msra.mxu0 0.0
        %669 = vmatpush.msra.mxu0 %v645
        %670 = vmatmul.f32.gmra.mxu0 %v652
        %v671 = vpop.f32.mrf.mxu0
        %v672 = vadd.f32 0.0, %v671
        %673 = vdwg.mxu0
        %674 = vmatpush.msra.mxu0 0.0
        %675 = vmatpush.msra.mxu0 0.0
        %676 = vmatpush.msra.mxu0 0.0
        %677 = vmatpush.msra.mxu0 0.0
        %678 = vmatpush.msra.mxu0 0.0
        %679 = vmatpush.msra.mxu0 0.0
        %680 = vmatpush.msra.mxu0 0.0
        %681 = vmatpush.msra.mxu0 0.0
        %682 = vmatpush.msra.mxu0 0.0
        %683 = vmatpush.msra.mxu0 0.0
        %684 = vmatpush.msra.mxu0 0.0
        %685 = vmatpush.msra.mxu0 0.0
        %686 = vmatpush.msra.mxu0 0.0
        %687 = vmatpush.msra.mxu0 0.0
        %688 = vmatpush.msra.mxu0 0.0
        %689 = vmatpush.msra.mxu0 %v646
        %690 = vmatmul.f32.gmra.mxu0 %v652
        %v691 = vpop.f32.mrf.mxu0
        %v692 = vadd.f32 0.0, %v691
        %693 = vdwg.mxu0
        %694 = vmatpush.msra.mxu0 0.0
        %695 = vmatpush.msra.mxu0 0.0
        %696 = vmatpush.msra.mxu0 0.0
        %697 = vmatpush.msra.mxu0 0.0
        %698 = vmatpush.msra.mxu0 0.0
        %699 = vmatpush.msra.mxu0 0.0
        %700 = vmatpush.msra.mxu0 0.0
        %701 = vmatpush.msra.mxu0 0.0
        %702 = vmatpush.msra.mxu0 0.0
        %703 = vmatpush.msra.mxu0 0.0
        %704 = vmatpush.msra.mxu0 0.0
        %705 = vmatpush.msra.mxu0 0.0
        %706 = vmatpush.msra.mxu0 0.0
        %707 = vmatpush.msra.mxu0 0.0
        %708 = vmatpush.msra.mxu0 0.0
        %709 = vmatpush.msra.mxu0 %v647
        %710 = vmatmul.f32.gmra.mxu0 %v652
        %v711 = vpop.f32.mrf.mxu0
        %v712 = vadd.f32 0.0, %v711
        %713 = vdwg.mxu0
        %v714 = vadd.f32 %v594, %v672
        %v715 = vadd.f32 %v614, %v692
        %v716 = vadd.f32 %v634, %v712
        %717 = vrot.lane.b32.xlu0 %v471, 1
        %v718 = vpop.permute.xlu0 %717
        %719 = vrot.lane.b32.xlu0 %v472, 1
        %v720 = vpop.permute.xlu0 %719
        %721 = vrot.lane.b32.xlu0 %v473, 1
        %v722 = vpop.permute.xlu0 %721
        %723 = vrot.lane.b32.xlu0 %v474, 1
        %v724 = vpop.permute.xlu0 %723
        %vm725 = vcmask 7168
        %v726 = vsel %vm725, %v718, %v720
        %v727 = vsel %vm725, %v720, %v722
        %v728 = vsel %vm725, %v722, %v724
        %v733 = vsel %vm494, %v442, 0
        %735 = vmatpush.msra.mxu0 0.0
        %736 = vmatpush.msra.mxu0 0.0
        %737 = vmatpush.msra.mxu0 0.0
        %738 = vmatpush.msra.mxu0 0.0
        %739 = vmatpush.msra.mxu0 0.0
        %740 = vmatpush.msra.mxu0 0.0
        %741 = vmatpush.msra.mxu0 0.0
        %742 = vmatpush.msra.mxu0 0.0
        %743 = vmatpush.msra.mxu0 0.0
        %744 = vmatpush.msra.mxu0 0.0
        %745 = vmatpush.msra.mxu0 0.0
        %746 = vmatpush.msra.mxu0 0.0
        %747 = vmatpush.msra.mxu0 0.0
        %748 = vmatpush.msra.mxu0 0.0
        %749 = vmatpush.msra.mxu0 0.0
        %750 = vmatpush.msra.mxu0 %v726
        %751 = vmatmul.f32.gmra.mxu0 %v733
        %v752 = vpop.f32.mrf.mxu0
        %v753 = vadd.f32 0.0, %v752
        %754 = vdwg.mxu0
        %755 = vmatpush.msra.mxu0 0.0
        %756 = vmatpush.msra.mxu0 0.0
        %757 = vmatpush.msra.mxu0 0.0
        %758 = vmatpush.msra.mxu0 0.0
        %759 = vmatpush.msra.mxu0 0.0
        %760 = vmatpush.msra.mxu0 0.0
        %761 = vmatpush.msra.mxu0 0.0
        %762 = vmatpush.msra.mxu0 0.0
        %763 = vmatpush.msra.mxu0 0.0
        %764 = vmatpush.msra.mxu0 0.0
        %765 = vmatpush.msra.mxu0 0.0
        %766 = vmatpush.msra.mxu0 0.0
        %767 = vmatpush.msra.mxu0 0.0
        %768 = vmatpush.msra.mxu0 0.0
        %769 = vmatpush.msra.mxu0 0.0
        %770 = vmatpush.msra.mxu0 %v727
        %771 = vmatmul.f32.gmra.mxu0 %v733
        %v772 = vpop.f32.mrf.mxu0
        %v773 = vadd.f32 0.0, %v772
        %774 = vdwg.mxu0
        %775 = vmatpush.msra.mxu0 0.0
        %776 = vmatpush.msra.mxu0 0.0
        %777 = vmatpush.msra.mxu0 0.0
        %778 = vmatpush.msra.mxu0 0.0
        %779 = vmatpush.msra.mxu0 0.0
        %780 = vmatpush.msra.mxu0 0.0
        %781 = vmatpush.msra.mxu0 0.0
        %782 = vmatpush.msra.mxu0 0.0
        %783 = vmatpush.msra.mxu0 0.0
        %784 = vmatpush.msra.mxu0 0.0
        %785 = vmatpush.msra.mxu0 0.0
        %786 = vmatpush.msra.mxu0 0.0
        %787 = vmatpush.msra.mxu0 0.0
        %788 = vmatpush.msra.mxu0 0.0
        %789 = vmatpush.msra.mxu0 0.0
        %790 = vmatpush.msra.mxu0 %v728
        %791 = vmatmul.f32.gmra.mxu0 %v733
        %v792 = vpop.f32.mrf.mxu0
        %v793 = vadd.f32 0.0, %v792
        %794 = vdwg.mxu0
        %v795 = vadd.f32 %v714, %v753
        %v796 = vadd.f32 %v715, %v773
        %v797 = vadd.f32 %v716, %v793
        %v799 = vsel %vm494, %v443, 0
        %801 = vmatpush.msra.mxu0 0.0
        %802 = vmatpush.msra.mxu0 0.0
        %803 = vmatpush.msra.mxu0 0.0
        %804 = vmatpush.msra.mxu0 0.0
        %805 = vmatpush.msra.mxu0 0.0
        %806 = vmatpush.msra.mxu0 0.0
        %807 = vmatpush.msra.mxu0 0.0
        %808 = vmatpush.msra.mxu0 0.0
        %809 = vmatpush.msra.mxu0 0.0
        %810 = vmatpush.msra.mxu0 0.0
        %811 = vmatpush.msra.mxu0 0.0
        %812 = vmatpush.msra.mxu0 0.0
        %813 = vmatpush.msra.mxu0 0.0
        %814 = vmatpush.msra.mxu0 0.0
        %815 = vmatpush.msra.mxu0 0.0
        %816 = vmatpush.msra.mxu0 %v472
        %817 = vmatmul.f32.gmra.mxu0 %v799
        %v818 = vpop.f32.mrf.mxu0
        %v819 = vadd.f32 0.0, %v818
        %820 = vdwg.mxu0
        %821 = vmatpush.msra.mxu0 0.0
        %822 = vmatpush.msra.mxu0 0.0
        %823 = vmatpush.msra.mxu0 0.0
        %824 = vmatpush.msra.mxu0 0.0
        %825 = vmatpush.msra.mxu0 0.0
        %826 = vmatpush.msra.mxu0 0.0
        %827 = vmatpush.msra.mxu0 0.0
        %828 = vmatpush.msra.mxu0 0.0
        %829 = vmatpush.msra.mxu0 0.0
        %830 = vmatpush.msra.mxu0 0.0
        %831 = vmatpush.msra.mxu0 0.0
        %832 = vmatpush.msra.mxu0 0.0
        %833 = vmatpush.msra.mxu0 0.0
        %834 = vmatpush.msra.mxu0 0.0
        %835 = vmatpush.msra.mxu0 0.0
        %836 = vmatpush.msra.mxu0 %v473
        %837 = vmatmul.f32.gmra.mxu0 %v799
        %v838 = vpop.f32.mrf.mxu0
        %v839 = vadd.f32 0.0, %v838
        %840 = vdwg.mxu0
        %841 = vmatpush.msra.mxu0 0.0
        %842 = vmatpush.msra.mxu0 0.0
        %843 = vmatpush.msra.mxu0 0.0
        %844 = vmatpush.msra.mxu0 0.0
        %845 = vmatpush.msra.mxu0 0.0
        %846 = vmatpush.msra.mxu0 0.0
        %847 = vmatpush.msra.mxu0 0.0
        %848 = vmatpush.msra.mxu0 0.0
        %849 = vmatpush.msra.mxu0 0.0
        %850 = vmatpush.msra.mxu0 0.0
        %851 = vmatpush.msra.mxu0 0.0
        %852 = vmatpush.msra.mxu0 0.0
        %853 = vmatpush.msra.mxu0 0.0
        %854 = vmatpush.msra.mxu0 0.0
        %855 = vmatpush.msra.mxu0 0.0
        %856 = vmatpush.msra.mxu0 %v474
        %857 = vmatmul.f32.gmra.mxu0 %v799
        %v858 = vpop.f32.mrf.mxu0
        %v859 = vadd.f32 0.0, %v858
        %860 = vdwg.mxu0
        %v861 = vadd.f32 %v795, %v819
        %v862 = vadd.f32 %v796, %v839
        %v863 = vadd.f32 %v797, %v859
        %v864 = vld [vmem:[#allocation2 + $0x8] sm:$0xff]
        %v865 = vld [vmem:[#allocation2 + $0x10] sm:$0xff]
        %v866 = vld [vmem:[#allocation2 + $0x18] sm:$0xff]
        %v867 = vld [vmem:[#allocation2 + $0x20] sm:$0xff]
        %872 = vrot.lane.b32.xlu0 %v864, 127
        %v873 = vpop.permute.xlu0 %872
        %874 = vrot.lane.b32.xlu0 %v865, 127
        %v875 = vpop.permute.xlu0 %874
        %876 = vrot.lane.b32.xlu0 %v866, 127
        %v877 = vpop.permute.xlu0 %876
        %878 = vrot.lane.b32.xlu0 %v867, 127
        %v879 = vpop.permute.xlu0 %878
        %vm880 = vcmask 1039360
        %v881 = vsel %vm880, %v873, %v875
        %v882 = vsel %vm880, %v875, %v877
        %v883 = vsel %vm880, %v877, %v879
        %v888 = vsel %vm494, %v444, 0
        %890 = vmatpush.msra.mxu0 0.0
        %891 = vmatpush.msra.mxu0 0.0
        %892 = vmatpush.msra.mxu0 0.0
        %893 = vmatpush.msra.mxu0 0.0
        %894 = vmatpush.msra.mxu0 0.0
        %895 = vmatpush.msra.mxu0 0.0
        %896 = vmatpush.msra.mxu0 0.0
        %897 = vmatpush.msra.mxu0 0.0
        %898 = vmatpush.msra.mxu0 0.0
        %899 = vmatpush.msra.mxu0 0.0
        %900 = vmatpush.msra.mxu0 0.0
        %901 = vmatpush.msra.mxu0 0.0
        %902 = vmatpush.msra.mxu0 0.0
        %903 = vmatpush.msra.mxu0 0.0
        %904 = vmatpush.msra.mxu0 0.0
        %905 = vmatpush.msra.mxu0 %v881
        %906 = vmatmul.f32.gmra.mxu0 %v888
        %v907 = vpop.f32.mrf.mxu0
        %v908 = vadd.f32 0.0, %v907
        %909 = vdwg.mxu0
        %910 = vmatpush.msra.mxu0 0.0
        %911 = vmatpush.msra.mxu0 0.0
        %912 = vmatpush.msra.mxu0 0.0
        %913 = vmatpush.msra.mxu0 0.0
        %914 = vmatpush.msra.mxu0 0.0
        %915 = vmatpush.msra.mxu0 0.0
        %916 = vmatpush.msra.mxu0 0.0
        %917 = vmatpush.msra.mxu0 0.0
        %918 = vmatpush.msra.mxu0 0.0
        %919 = vmatpush.msra.mxu0 0.0
        %920 = vmatpush.msra.mxu0 0.0
        %921 = vmatpush.msra.mxu0 0.0
        %922 = vmatpush.msra.mxu0 0.0
        %923 = vmatpush.msra.mxu0 0.0
        %924 = vmatpush.msra.mxu0 0.0
        %925 = vmatpush.msra.mxu0 %v882
        %926 = vmatmul.f32.gmra.mxu0 %v888
        %v927 = vpop.f32.mrf.mxu0
        %v928 = vadd.f32 0.0, %v927
        %929 = vdwg.mxu0
        %930 = vmatpush.msra.mxu0 0.0
        %931 = vmatpush.msra.mxu0 0.0
        %932 = vmatpush.msra.mxu0 0.0
        %933 = vmatpush.msra.mxu0 0.0
        %934 = vmatpush.msra.mxu0 0.0
        %935 = vmatpush.msra.mxu0 0.0
        %936 = vmatpush.msra.mxu0 0.0
        %937 = vmatpush.msra.mxu0 0.0
        %938 = vmatpush.msra.mxu0 0.0
        %939 = vmatpush.msra.mxu0 0.0
        %940 = vmatpush.msra.mxu0 0.0
        %941 = vmatpush.msra.mxu0 0.0
        %942 = vmatpush.msra.mxu0 0.0
        %943 = vmatpush.msra.mxu0 0.0
        %944 = vmatpush.msra.mxu0 0.0
        %945 = vmatpush.msra.mxu0 %v883
        %946 = vmatmul.f32.gmra.mxu0 %v888
        %v947 = vpop.f32.mrf.mxu0
        %v948 = vadd.f32 0.0, %v947
        %949 = vdwg.mxu0
        %v950 = vadd.f32 %v861, %v908
        %v951 = vadd.f32 %v862, %v928
        %v952 = vadd.f32 %v863, %v948
        %953 = vrot.lane.b32.xlu0 %v864, 111
        %v954 = vpop.permute.xlu0 %953
        %955 = vrot.lane.b32.xlu0 %v865, 111
        %v956 = vpop.permute.xlu0 %955
        %957 = vrot.lane.b32.xlu0 %v866, 111
        %v958 = vpop.permute.xlu0 %957
        %959 = vrot.lane.b32.xlu0 %v867, 111
        %v960 = vpop.permute.xlu0 %959
        %vm961 = vcmask 908288
        %v962 = vsel %vm961, %v954, %v956
        %v963 = vsel %vm961, %v956, %v958
        %v964 = vsel %vm961, %v958, %v960
        %v969 = vsel %vm494, %v445, 0
        %971 = vmatpush.msra.mxu0 0.0
        %972 = vmatpush.msra.mxu0 0.0
        %973 = vmatpush.msra.mxu0 0.0
        %974 = vmatpush.msra.mxu0 0.0
        %975 = vmatpush.msra.mxu0 0.0
        %976 = vmatpush.msra.mxu0 0.0
        %977 = vmatpush.msra.mxu0 0.0
        %978 = vmatpush.msra.mxu0 0.0
        %979 = vmatpush.msra.mxu0 0.0
        %980 = vmatpush.msra.mxu0 0.0
        %981 = vmatpush.msra.mxu0 0.0
        %982 = vmatpush.msra.mxu0 0.0
        %983 = vmatpush.msra.mxu0 0.0
        %984 = vmatpush.msra.mxu0 0.0
        %985 = vmatpush.msra.mxu0 0.0
        %986 = vmatpush.msra.mxu0 %v962
        %987 = vmatmul.f32.gmra.mxu0 %v969
        %v988 = vpop.f32.mrf.mxu0
        %v989 = vadd.f32 0.0, %v988
        %990 = vdwg.mxu0
        %991 = vmatpush.msra.mxu0 0.0
        %992 = vmatpush.msra.mxu0 0.0
        %993 = vmatpush.msra.mxu0 0.0
        %994 = vmatpush.msra.mxu0 0.0
        %995 = vmatpush.msra.mxu0 0.0
        %996 = vmatpush.msra.mxu0 0.0
        %997 = vmatpush.msra.mxu0 0.0
        %998 = vmatpush.msra.mxu0 0.0
        %999 = vmatpush.msra.mxu0 0.0
        %1000 = vmatpush.msra.mxu0 0.0
        %1001 = vmatpush.msra.mxu0 0.0
        %1002 = vmatpush.msra.mxu0 0.0
        %1003 = vmatpush.msra.mxu0 0.0
        %1004 = vmatpush.msra.mxu0 0.0
        %1005 = vmatpush.msra.mxu0 0.0
        %1006 = vmatpush.msra.mxu0 %v963
        %1007 = vmatmul.f32.gmra.mxu0 %v969
        %v1008 = vpop.f32.mrf.mxu0
        %v1009 = vadd.f32 0.0, %v1008
        %1010 = vdwg.mxu0
        %1011 = vmatpush.msra.mxu0 0.0
        %1012 = vmatpush.msra.mxu0 0.0
        %1013 = vmatpush.msra.mxu0 0.0
        %1014 = vmatpush.msra.mxu0 0.0
        %1015 = vmatpush.msra.mxu0 0.0
        %1016 = vmatpush.msra.mxu0 0.0
        %1017 = vmatpush.msra.mxu0 0.0
        %1018 = vmatpush.msra.mxu0 0.0
        %1019 = vmatpush.msra.mxu0 0.0
        %1020 = vmatpush.msra.mxu0 0.0
        %1021 = vmatpush.msra.mxu0 0.0
        %1022 = vmatpush.msra.mxu0 0.0
        %1023 = vmatpush.msra.mxu0 0.0
        %1024 = vmatpush.msra.mxu0 0.0
        %1025 = vmatpush.msra.mxu0 0.0
        %1026 = vmatpush.msra.mxu0 %v964
        %1027 = vmatmul.f32.gmra.mxu0 %v969
        %v1028 = vpop.f32.mrf.mxu0
        %v1029 = vadd.f32 0.0, %v1028
        %1030 = vdwg.mxu0
        %v1031 = vadd.f32 %v950, %v989
        %v1032 = vadd.f32 %v951, %v1009
        %v1033 = vadd.f32 %v952, %v1029
        %1034 = vrot.lane.b32.xlu0 %v864, 110
        %v1035 = vpop.permute.xlu0 %1034
        %1036 = vrot.lane.b32.xlu0 %v865, 110
        %v1037 = vpop.permute.xlu0 %1036
        %1038 = vrot.lane.b32.xlu0 %v866, 110
        %v1039 = vpop.permute.xlu0 %1038
        %1040 = vrot.lane.b32.xlu0 %v867, 110
        %v1041 = vpop.permute.xlu0 %1040
        %vm1042 = vcmask 900096
        %v1043 = vsel %vm1042, %v1035, %v1037
        %v1044 = vsel %vm1042, %v1037, %v1039
        %v1045 = vsel %vm1042, %v1039, %v1041
        %v1050 = vsel %vm494, %v446, 0
        %1052 = vmatpush.msra.mxu0 0.0
        %1053 = vmatpush.msra.mxu0 0.0
        %1054 = vmatpush.msra.mxu0 0.0
        %1055 = vmatpush.msra.mxu0 0.0
        %1056 = vmatpush.msra.mxu0 0.0
        %1057 = vmatpush.msra.mxu0 0.0
        %1058 = vmatpush.msra.mxu0 0.0
        %1059 = vmatpush.msra.mxu0 0.0
        %1060 = vmatpush.msra.mxu0 0.0
        %1061 = vmatpush.msra.mxu0 0.0
        %1062 = vmatpush.msra.mxu0 0.0
        %1063 = vmatpush.msra.mxu0 0.0
        %1064 = vmatpush.msra.mxu0 0.0
        %1065 = vmatpush.msra.mxu0 0.0
        %1066 = vmatpush.msra.mxu0 0.0
        %1067 = vmatpush.msra.mxu0 %v1043
        %1068 = vmatmul.f32.gmra.mxu0 %v1050
        %v1069 = vpop.f32.mrf.mxu0
        %v1070 = vadd.f32 0.0, %v1069
        %1071 = vdwg.mxu0
        %1072 = vmatpush.msra.mxu0 0.0
        %1073 = vmatpush.msra.mxu0 0.0
        %1074 = vmatpush.msra.mxu0 0.0
        %1075 = vmatpush.msra.mxu0 0.0
        %1076 = vmatpush.msra.mxu0 0.0
        %1077 = vmatpush.msra.mxu0 0.0
        %1078 = vmatpush.msra.mxu0 0.0
        %1079 = vmatpush.msra.mxu0 0.0
        %1080 = vmatpush.msra.mxu0 0.0
        %1081 = vmatpush.msra.mxu0 0.0
        %1082 = vmatpush.msra.mxu0 0.0
        %1083 = vmatpush.msra.mxu0 0.0
        %1084 = vmatpush.msra.mxu0 0.0
        %1085 = vmatpush.msra.mxu0 0.0
        %1086 = vmatpush.msra.mxu0 0.0
        %1087 = vmatpush.msra.mxu0 %v1044
        %1088 = vmatmul.f32.gmra.mxu0 %v1050
        %v1089 = vpop.f32.mrf.mxu0
        %v1090 = vadd.f32 0.0, %v1089
        %1091 = vdwg.mxu0
        %1092 = vmatpush.msra.mxu0 0.0
        %1093 = vmatpush.msra.mxu0 0.0
        %1094 = vmatpush.msra.mxu0 0.0
        %1095 = vmatpush.msra.mxu0 0.0
        %1096 = vmatpush.msra.mxu0 0.0
        %1097 = vmatpush.msra.mxu0 0.0
        %1098 = vmatpush.msra.mxu0 0.0
        %1099 = vmatpush.msra.mxu0 0.0
        %1100 = vmatpush.msra.mxu0 0.0
        %1101 = vmatpush.msra.mxu0 0.0
        %1102 = vmatpush.msra.mxu0 0.0
        %1103 = vmatpush.msra.mxu0 0.0
        %1104 = vmatpush.msra.mxu0 0.0
        %1105 = vmatpush.msra.mxu0 0.0
        %1106 = vmatpush.msra.mxu0 0.0
        %1107 = vmatpush.msra.mxu0 %v1045
        %1108 = vmatmul.f32.gmra.mxu0 %v1050
        %v1109 = vpop.f32.mrf.mxu0
        %v1110 = vadd.f32 0.0, %v1109
        %1111 = vdwg.mxu0
        %v1112 = vadd.f32 %v1031, %v1070
        %v1113 = vadd.f32 %v1032, %v1090
        %v1114 = vadd.f32 %v1033, %v1110
        %1115 = vrot.lane.b32.xlu0 %v864, 109
        %v1116 = vpop.permute.xlu0 %1115
        %1117 = vrot.lane.b32.xlu0 %v865, 109
        %v1118 = vpop.permute.xlu0 %1117
        %1119 = vrot.lane.b32.xlu0 %v866, 109
        %v1120 = vpop.permute.xlu0 %1119
        %1121 = vrot.lane.b32.xlu0 %v867, 109
        %v1122 = vpop.permute.xlu0 %1121
        %vm1123 = vcmask 891904
        %v1124 = vsel %vm1123, %v1116, %v1118
        %v1125 = vsel %vm1123, %v1118, %v1120
        %v1126 = vsel %vm1123, %v1120, %v1122
        %v1131 = vsel %vm494, %v447, 0
        %1133 = vmatpush.msra.mxu0 0.0
        %1134 = vmatpush.msra.mxu0 0.0
        %1135 = vmatpush.msra.mxu0 0.0
        %1136 = vmatpush.msra.mxu0 0.0
        %1137 = vmatpush.msra.mxu0 0.0
        %1138 = vmatpush.msra.mxu0 0.0
        %1139 = vmatpush.msra.mxu0 0.0
        %1140 = vmatpush.msra.mxu0 0.0
        %1141 = vmatpush.msra.mxu0 0.0
        %1142 = vmatpush.msra.mxu0 0.0
        %1143 = vmatpush.msra.mxu0 0.0
        %1144 = vmatpush.msra.mxu0 0.0
        %1145 = vmatpush.msra.mxu0 0.0
        %1146 = vmatpush.msra.mxu0 0.0
        %1147 = vmatpush.msra.mxu0 0.0
        %1148 = vmatpush.msra.mxu0 %v1124
        %1149 = vmatmul.f32.gmra.mxu0 %v1131
        %v1150 = vpop.f32.mrf.mxu0
        %v1151 = vadd.f32 0.0, %v1150
        %1152 = vdwg.mxu0
        %1153 = vmatpush.msra.mxu0 0.0
        %1154 = vmatpush.msra.mxu0 0.0
        %1155 = vmatpush.msra.mxu0 0.0
        %1156 = vmatpush.msra.mxu0 0.0
        %1157 = vmatpush.msra.mxu0 0.0
        %1158 = vmatpush.msra.mxu0 0.0
        %1159 = vmatpush.msra.mxu0 0.0
        %1160 = vmatpush.msra.mxu0 0.0
        %1161 = vmatpush.msra.mxu0 0.0
        %1162 = vmatpush.msra.mxu0 0.0
        %1163 = vmatpush.msra.mxu0 0.0
        %1164 = vmatpush.msra.mxu0 0.0
        %1165 = vmatpush.msra.mxu0 0.0
        %1166 = vmatpush.msra.mxu0 0.0
        %1167 = vmatpush.msra.mxu0 0.0
        %1168 = vmatpush.msra.mxu0 %v1125
        %1169 = vmatmul.f32.gmra.mxu0 %v1131
        %v1170 = vpop.f32.mrf.mxu0
        %v1171 = vadd.f32 0.0, %v1170
        %1172 = vdwg.mxu0
        %1173 = vmatpush.msra.mxu0 0.0
        %1174 = vmatpush.msra.mxu0 0.0
        %1175 = vmatpush.msra.mxu0 0.0
        %1176 = vmatpush.msra.mxu0 0.0
        %1177 = vmatpush.msra.mxu0 0.0
        %1178 = vmatpush.msra.mxu0 0.0
        %1179 = vmatpush.msra.mxu0 0.0
        %1180 = vmatpush.msra.mxu0 0.0
        %1181 = vmatpush.msra.mxu0 0.0
        %1182 = vmatpush.msra.mxu0 0.0
        %1183 = vmatpush.msra.mxu0 0.0
        %1184 = vmatpush.msra.mxu0 0.0
        %1185 = vmatpush.msra.mxu0 0.0
        %1186 = vmatpush.msra.mxu0 0.0
        %1187 = vmatpush.msra.mxu0 0.0
        %1188 = vmatpush.msra.mxu0 %v1126
        %1189 = vmatmul.f32.gmra.mxu0 %v1131
        %v1190 = vpop.f32.mrf.mxu0
        %v1191 = vadd.f32 0.0, %v1190
        %1192 = vdwg.mxu0
        %v1193 = vadd.f32 %v1112, %v1151
        %v1194 = vadd.f32 %v1113, %v1171
        %v1195 = vadd.f32 %v1114, %v1191
        %1197 = vset.pattern.permute.xlu0 0
        %1198 = vperm.xlu0 %1197, %v450
        %v1199 = vpop.permute.xlu0 %1198
        %v1201 = vadd.f32 %v1193, %v1199
        %v1202 = vadd.f32 %v1194, %v1199
        %v1203 = vadd.f32 %v1195, %v1199
        %v1204 = vmax.f32 %v1201, 0.0
        %v1205 = vmax.f32 %v1202, 0.0
        %v1206 = vmax.f32 %v1203, 0.0
        %v1207 = vsel %vm415, 1, 0
        %v1208 = vperm.slane %v1207, 0
        %v1209 = vperm.slane %v1207, 1
        %v1210 = vperm.slane %v1207, 2
        %vm1211 = vcmp.eq.s32.totalorder %v1208, 1
        %vm1212 = vcmp.eq.s32.totalorder %v1209, 1
        %vm1213 = vcmp.eq.s32.totalorder %v1210, 1
        %v1214 = vsel %vm1211, %v1204, 0.0
        %v1215 = vsel %vm1212, %v1205, 0.0
        %v1216 = vsel %vm1213, %v1206, 0.0
        %1217 = vst [vmem:[#allocation3 + $0x8] sm:$0xff] %v1214
        %1218 = vst [vmem:[#allocation3 + $0x10] sm:$0xff] %v1215
        %1219 = vst [vmem:[#allocation3 + $0x18] sm:$0xff] %v1216
        %v1220 = vld [vmem:[#allocation3] sm:$0xff]
        %v1221 = vld [vmem:[#allocation3 + $0x8] sm:$0xff]
        %v1222 = vld [vmem:[#allocation3 + $0x10] sm:$0xff]
        %v1223 = vld [vmem:[#allocation3 + $0x18] sm:$0xff]
        %1228 = vrot.lane.b32.xlu0 %v1220, 18
        %v1229 = vpop.permute.xlu0 %1228
        %1230 = vrot.lane.b32.xlu0 %v1221, 18
        %v1231 = vpop.permute.xlu0 %1230
        %1232 = vrot.lane.b32.xlu0 %v1222, 18
        %v1233 = vpop.permute.xlu0 %1232
        %1234 = vrot.lane.b32.xlu0 %v1223, 18
        %v1235 = vpop.permute.xlu0 %1234
        %v1236 = vsel %vm487, %v1229, %v1231
        %v1237 = vsel %vm487, %v1231, %v1233
        %v1238 = vsel %vm487, %v1233, %v1235
        %v1243 = vsel %vm494, %v453, 0
        %1245 = vmatpush.msra.mxu0 0.0
        %1246 = vmatpush.msra.mxu0 0.0
        %1247 = vmatpush.msra.mxu0 0.0
        %1248 = vmatpush.msra.mxu0 0.0
        %1249 = vmatpush.msra.mxu0 0.0
        %1250 = vmatpush.msra.mxu0 0.0
        %1251 = vmatpush.msra.mxu0 0.0
        %1252 = vmatpush.msra.mxu0 0.0
        %1253 = vmatpush.msra.mxu0 0.0
        %1254 = vmatpush.msra.mxu0 0.0
        %1255 = vmatpush.msra.mxu0 0.0
        %1256 = vmatpush.msra.mxu0 0.0
        %1257 = vmatpush.msra.mxu0 0.0
        %1258 = vmatpush.msra.mxu0 0.0
        %1259 = vmatpush.msra.mxu0 0.0
        %1260 = vmatpush.msra.mxu0 %v1236
        %1261 = vmatmul.f32.gmra.mxu0 %v1243
        %v1262 = vpop.f32.mrf.mxu0
        %v1263 = vadd.f32 0.0, %v1262
        %1264 = vdwg.mxu0
        %1265 = vmatpush.msra.mxu0 0.0
        %1266 = vmatpush.msra.mxu0 0.0
        %1267 = vmatpush.msra.mxu0 0.0
        %1268 = vmatpush.msra.mxu0 0.0
        %1269 = vmatpush.msra.mxu0 0.0
        %1270 = vmatpush.msra.mxu0 0.0
        %1271 = vmatpush.msra.mxu0 0.0
        %1272 = vmatpush.msra.mxu0 0.0
        %1273 = vmatpush.msra.mxu0 0.0
        %1274 = vmatpush.msra.mxu0 0.0
        %1275 = vmatpush.msra.mxu0 0.0
        %1276 = vmatpush.msra.mxu0 0.0
        %1277 = vmatpush.msra.mxu0 0.0
        %1278 = vmatpush.msra.mxu0 0.0
        %1279 = vmatpush.msra.mxu0 0.0
        %1280 = vmatpush.msra.mxu0 %v1237
        %1281 = vmatmul.f32.gmra.mxu0 %v1243
        %v1282 = vpop.f32.mrf.mxu0
        %v1283 = vadd.f32 0.0, %v1282
        %1284 = vdwg.mxu0
        %1285 = vmatpush.msra.mxu0 0.0
        %1286 = vmatpush.msra.mxu0 0.0
        %1287 = vmatpush.msra.mxu0 0.0
        %1288 = vmatpush.msra.mxu0 0.0
        %1289 = vmatpush.msra.mxu0 0.0
        %1290 = vmatpush.msra.mxu0 0.0
        %1291 = vmatpush.msra.mxu0 0.0
        %1292 = vmatpush.msra.mxu0 0.0
        %1293 = vmatpush.msra.mxu0 0.0
        %1294 = vmatpush.msra.mxu0 0.0
        %1295 = vmatpush.msra.mxu0 0.0
        %1296 = vmatpush.msra.mxu0 0.0
        %1297 = vmatpush.msra.mxu0 0.0
        %1298 = vmatpush.msra.mxu0 0.0
        %1299 = vmatpush.msra.mxu0 0.0
        %1300 = vmatpush.msra.mxu0 %v1238
        %1301 = vmatmul.f32.gmra.mxu0 %v1243
        %v1302 = vpop.f32.mrf.mxu0
        %v1303 = vadd.f32 0.0, %v1302
        %1304 = vdwg.mxu0
        %1305 = vrot.lane.b32.xlu0 %v1220, 19
        %v1306 = vpop.permute.xlu0 %1305
        %1307 = vrot.lane.b32.xlu0 %v1221, 19
        %v1308 = vpop.permute.xlu0 %1307
        %1309 = vrot.lane.b32.xlu0 %v1222, 19
        %v1310 = vpop.permute.xlu0 %1309
        %1311 = vrot.lane.b32.xlu0 %v1223, 19
        %v1312 = vpop.permute.xlu0 %1311
        %v1313 = vsel %vm566, %v1306, %v1308
        %v1314 = vsel %vm566, %v1308, %v1310
        %v1315 = vsel %vm566, %v1310, %v1312
        %v1320 = vsel %vm494, %v452, 0
        %1322 = vmatpush.msra.mxu0 0.0
        %1323 = vmatpush.msra.mxu0 0.0
        %1324 = vmatpush.msra.mxu0 0.0
        %1325 = vmatpush.msra.mxu0 0.0
        %1326 = vmatpush.msra.mxu0 0.0
        %1327 = vmatpush.msra.mxu0 0.0
        %1328 = vmatpush.msra.mxu0 0.0
        %1329 = vmatpush.msra.mxu0 0.0
        %1330 = vmatpush.msra.mxu0 0.0
        %1331 = vmatpush.msra.mxu0 0.0
        %1332 = vmatpush.msra.mxu0 0.0
        %1333 = vmatpush.msra.mxu0 0.0
        %1334 = vmatpush.msra.mxu0 0.0
        %1335 = vmatpush.msra.mxu0 0.0
        %1336 = vmatpush.msra.mxu0 0.0
        %1337 = vmatpush.msra.mxu0 %v1313
        %1338 = vmatmul.f32.gmra.mxu0 %v1320
        %v1339 = vpop.f32.mrf.mxu0
        %v1340 = vadd.f32 %v1263, %v1339
        %1341 = vdwg.mxu0
        %1342 = vmatpush.msra.mxu0 0.0
        %1343 = vmatpush.msra.mxu0 0.0
        %1344 = vmatpush.msra.mxu0 0.0
        %1345 = vmatpush.msra.mxu0 0.0
        %1346 = vmatpush.msra.mxu0 0.0
        %1347 = vmatpush.msra.mxu0 0.0
        %1348 = vmatpush.msra.mxu0 0.0
        %1349 = vmatpush.msra.mxu0 0.0
        %1350 = vmatpush.msra.mxu0 0.0
        %1351 = vmatpush.msra.mxu0 0.0
        %1352 = vmatpush.msra.mxu0 0.0
        %1353 = vmatpush.msra.mxu0 0.0
        %1354 = vmatpush.msra.mxu0 0.0
        %1355 = vmatpush.msra.mxu0 0.0
        %1356 = vmatpush.msra.mxu0 0.0
        %1357 = vmatpush.msra.mxu0 %v1314
        %1358 = vmatmul.f32.gmra.mxu0 %v1320
        %v1359 = vpop.f32.mrf.mxu0
        %v1360 = vadd.f32 %v1283, %v1359
        %1361 = vdwg.mxu0
        %1362 = vmatpush.msra.mxu0 0.0
        %1363 = vmatpush.msra.mxu0 0.0
        %1364 = vmatpush.msra.mxu0 0.0
        %1365 = vmatpush.msra.mxu0 0.0
        %1366 = vmatpush.msra.mxu0 0.0
        %1367 = vmatpush.msra.mxu0 0.0
        %1368 = vmatpush.msra.mxu0 0.0
        %1369 = vmatpush.msra.mxu0 0.0
        %1370 = vmatpush.msra.mxu0 0.0
        %1371 = vmatpush.msra.mxu0 0.0
        %1372 = vmatpush.msra.mxu0 0.0
        %1373 = vmatpush.msra.mxu0 0.0
        %1374 = vmatpush.msra.mxu0 0.0
        %1375 = vmatpush.msra.mxu0 0.0
        %1376 = vmatpush.msra.mxu0 0.0
        %1377 = vmatpush.msra.mxu0 %v1315
        %1378 = vmatmul.f32.gmra.mxu0 %v1320
        %v1379 = vpop.f32.mrf.mxu0
        %v1380 = vadd.f32 %v1303, %v1379
        %1381 = vdwg.mxu0
        %1382 = vrot.lane.b32.xlu0 %v1220, 17
        %v1383 = vpop.permute.xlu0 %1382
        %1384 = vrot.lane.b32.xlu0 %v1221, 17
        %v1385 = vpop.permute.xlu0 %1384
        %1386 = vrot.lane.b32.xlu0 %v1222, 17
        %v1387 = vpop.permute.xlu0 %1386
        %1388 = vrot.lane.b32.xlu0 %v1223, 17
        %v1389 = vpop.permute.xlu0 %1388
        %v1390 = vsel %vm644, %v1383, %v1385
        %v1391 = vsel %vm644, %v1385, %v1387
        %v1392 = vsel %vm644, %v1387, %v1389
        %v1397 = vsel %vm494, %v454, 0
        %1399 = vmatpush.msra.mxu0 0.0
        %1400 = vmatpush.msra.mxu0 0.0
        %1401 = vmatpush.msra.mxu0 0.0
        %1402 = vmatpush.msra.mxu0 0.0
        %1403 = vmatpush.msra.mxu0 0.0
        %1404 = vmatpush.msra.mxu0 0.0
        %1405 = vmatpush.msra.mxu0 0.0
        %1406 = vmatpush.msra.mxu0 0.0
        %1407 = vmatpush.msra.mxu0 0.0
        %1408 = vmatpush.msra.mxu0 0.0
        %1409 = vmatpush.msra.mxu0 0.0
        %1410 = vmatpush.msra.mxu0 0.0
        %1411 = vmatpush.msra.mxu0 0.0
        %1412 = vmatpush.msra.mxu0 0.0
        %1413 = vmatpush.msra.mxu0 0.0
        %1414 = vmatpush.msra.mxu0 %v1390
        %1415 = vmatmul.f32.gmra.mxu0 %v1397
        %v1416 = vpop.f32.mrf.mxu0
        %v1417 = vadd.f32 0.0, %v1416
        %1418 = vdwg.mxu0
        %1419 = vmatpush.msra.mxu0 0.0
        %1420 = vmatpush.msra.mxu0 0.0
        %1421 = vmatpush.msra.mxu0 0.0
        %1422 = vmatpush.msra.mxu0 0.0
        %1423 = vmatpush.msra.mxu0 0.0
        %1424 = vmatpush.msra.mxu0 0.0
        %1425 = vmatpush.msra.mxu0 0.0
        %1426 = vmatpush.msra.mxu0 0.0
        %1427 = vmatpush.msra.mxu0 0.0
        %1428 = vmatpush.msra.mxu0 0.0
        %1429 = vmatpush.msra.mxu0 0.0
        %1430 = vmatpush.msra.mxu0 0.0
        %1431 = vmatpush.msra.mxu0 0.0
        %1432 = vmatpush.msra.mxu0 0.0
        %1433 = vmatpush.msra.mxu0 0.0
        %1434 = vmatpush.msra.mxu0 %v1391
        %1435 = vmatmul.f32.gmra.mxu0 %v1397
        %v1436 = vpop.f32.mrf.mxu0
        %v1437 = vadd.f32 0.0, %v1436
        %1438 = vdwg.mxu0
        %1439 = vmatpush.msra.mxu0 0.0
        %1440 = vmatpush.msra.mxu0 0.0
        %1441 = vmatpush.msra.mxu0 0.0
        %1442 = vmatpush.msra.mxu0 0.0
        %1443 = vmatpush.msra.mxu0 0.0
        %1444 = vmatpush.msra.mxu0 0.0
        %1445 = vmatpush.msra.mxu0 0.0
        %1446 = vmatpush.msra.mxu0 0.0
        %1447 = vmatpush.msra.mxu0 0.0
        %1448 = vmatpush.msra.mxu0 0.0
        %1449 = vmatpush.msra.mxu0 0.0
        %1450 = vmatpush.msra.mxu0 0.0
        %1451 = vmatpush.msra.mxu0 0.0
        %1452 = vmatpush.msra.mxu0 0.0
        %1453 = vmatpush.msra.mxu0 0.0
        %1454 = vmatpush.msra.mxu0 %v1392
        %1455 = vmatmul.f32.gmra.mxu0 %v1397
        %v1456 = vpop.f32.mrf.mxu0
        %v1457 = vadd.f32 0.0, %v1456
        %1458 = vdwg.mxu0
        %v1459 = vadd.f32 %v1340, %v1417
        %v1460 = vadd.f32 %v1360, %v1437
        %v1461 = vadd.f32 %v1380, %v1457
        %1462 = vrot.lane.b32.xlu0 %v1220, 1
        %v1463 = vpop.permute.xlu0 %1462
        %1464 = vrot.lane.b32.xlu0 %v1221, 1
        %v1465 = vpop.permute.xlu0 %1464
        %1466 = vrot.lane.b32.xlu0 %v1222, 1
        %v1467 = vpop.permute.xlu0 %1466
        %1468 = vrot.lane.b32.xlu0 %v1223, 1
        %v1469 = vpop.permute.xlu0 %1468
        %v1470 = vsel %vm725, %v1463, %v1465
        %v1471 = vsel %vm725, %v1465, %v1467
        %v1472 = vsel %vm725, %v1467, %v1469
        %v1477 = vsel %vm494, %v455, 0
        %1479 = vmatpush.msra.mxu0 0.0
        %1480 = vmatpush.msra.mxu0 0.0
        %1481 = vmatpush.msra.mxu0 0.0
        %1482 = vmatpush.msra.mxu0 0.0
        %1483 = vmatpush.msra.mxu0 0.0
        %1484 = vmatpush.msra.mxu0 0.0
        %1485 = vmatpush.msra.mxu0 0.0
        %1486 = vmatpush.msra.mxu0 0.0
        %1487 = vmatpush.msra.mxu0 0.0
        %1488 = vmatpush.msra.mxu0 0.0
        %1489 = vmatpush.msra.mxu0 0.0
        %1490 = vmatpush.msra.mxu0 0.0
        %1491 = vmatpush.msra.mxu0 0.0
        %1492 = vmatpush.msra.mxu0 0.0
        %1493 = vmatpush.msra.mxu0 0.0
        %1494 = vmatpush.msra.mxu0 %v1470
        %1495 = vmatmul.f32.gmra.mxu0 %v1477
        %v1496 = vpop.f32.mrf.mxu0
        %v1497 = vadd.f32 0.0, %v1496
        %1498 = vdwg.mxu0
        %1499 = vmatpush.msra.mxu0 0.0
        %1500 = vmatpush.msra.mxu0 0.0
        %1501 = vmatpush.msra.mxu0 0.0
        %1502 = vmatpush.msra.mxu0 0.0
        %1503 = vmatpush.msra.mxu0 0.0
        %1504 = vmatpush.msra.mxu0 0.0
        %1505 = vmatpush.msra.mxu0 0.0
        %1506 = vmatpush.msra.mxu0 0.0
        %1507 = vmatpush.msra.mxu0 0.0
        %1508 = vmatpush.msra.mxu0 0.0
        %1509 = vmatpush.msra.mxu0 0.0
        %1510 = vmatpush.msra.mxu0 0.0
        %1511 = vmatpush.msra.mxu0 0.0
        %1512 = vmatpush.msra.mxu0 0.0
        %1513 = vmatpush.msra.mxu0 0.0
        %1514 = vmatpush.msra.mxu0 %v1471
        %1515 = vmatmul.f32.gmra.mxu0 %v1477
        %v1516 = vpop.f32.mrf.mxu0
        %v1517 = vadd.f32 0.0, %v1516
        %1518 = vdwg.mxu0
        %1519 = vmatpush.msra.mxu0 0.0
        %1520 = vmatpush.msra.mxu0 0.0
        %1521 = vmatpush.msra.mxu0 0.0
        %1522 = vmatpush.msra.mxu0 0.0
        %1523 = vmatpush.msra.mxu0 0.0
        %1524 = vmatpush.msra.mxu0 0.0
        %1525 = vmatpush.msra.mxu0 0.0
        %1526 = vmatpush.msra.mxu0 0.0
        %1527 = vmatpush.msra.mxu0 0.0
        %1528 = vmatpush.msra.mxu0 0.0
        %1529 = vmatpush.msra.mxu0 0.0
        %1530 = vmatpush.msra.mxu0 0.0
        %1531 = vmatpush.msra.mxu0 0.0
        %1532 = vmatpush.msra.mxu0 0.0
        %1533 = vmatpush.msra.mxu0 0.0
        %1534 = vmatpush.msra.mxu0 %v1472
        %1535 = vmatmul.f32.gmra.mxu0 %v1477
        %v1536 = vpop.f32.mrf.mxu0
        %v1537 = vadd.f32 0.0, %v1536
        %1538 = vdwg.mxu0
        %v1539 = vadd.f32 %v1459, %v1497
        %v1540 = vadd.f32 %v1460, %v1517
        %v1541 = vadd.f32 %v1461, %v1537
        %v1543 = vsel %vm494, %v456, 0
        %1545 = vmatpush.msra.mxu0 0.0
        %1546 = vmatpush.msra.mxu0 0.0
        %1547 = vmatpush.msra.mxu0 0.0
        %1548 = vmatpush.msra.mxu0 0.0
        %1549 = vmatpush.msra.mxu0 0.0
        %1550 = vmatpush.msra.mxu0 0.0
        %1551 = vmatpush.msra.mxu0 0.0
        %1552 = vmatpush.msra.mxu0 0.0
        %1553 = vmatpush.msra.mxu0 0.0
        %1554 = vmatpush.msra.mxu0 0.0
        %1555 = vmatpush.msra.mxu0 0.0
        %1556 = vmatpush.msra.mxu0 0.0
        %1557 = vmatpush.msra.mxu0 0.0
        %1558 = vmatpush.msra.mxu0 0.0
        %1559 = vmatpush.msra.mxu0 0.0
        %1560 = vmatpush.msra.mxu0 %v1221
        %1561 = vmatmul.f32.gmra.mxu0 %v1543
        %v1562 = vpop.f32.mrf.mxu0
        %v1563 = vadd.f32 0.0, %v1562
        %1564 = vdwg.mxu0
        %1565 = vmatpush.msra.mxu0 0.0
        %1566 = vmatpush.msra.mxu0 0.0
        %1567 = vmatpush.msra.mxu0 0.0
        %1568 = vmatpush.msra.mxu0 0.0
        %1569 = vmatpush.msra.mxu0 0.0
        %1570 = vmatpush.msra.mxu0 0.0
        %1571 = vmatpush.msra.mxu0 0.0
        %1572 = vmatpush.msra.mxu0 0.0
        %1573 = vmatpush.msra.mxu0 0.0
        %1574 = vmatpush.msra.mxu0 0.0
        %1575 = vmatpush.msra.mxu0 0.0
        %1576 = vmatpush.msra.mxu0 0.0
        %1577 = vmatpush.msra.mxu0 0.0
        %1578 = vmatpush.msra.mxu0 0.0
        %1579 = vmatpush.msra.mxu0 0.0
        %1580 = vmatpush.msra.mxu0 %v1222
        %1581 = vmatmul.f32.gmra.mxu0 %v1543
        %v1582 = vpop.f32.mrf.mxu0
        %v1583 = vadd.f32 0.0, %v1582
        %1584 = vdwg.mxu0
        %1585 = vmatpush.msra.mxu0 0.0
        %1586 = vmatpush.msra.mxu0 0.0
        %1587 = vmatpush.msra.mxu0 0.0
        %1588 = vmatpush.msra.mxu0 0.0
        %1589 = vmatpush.msra.mxu0 0.0
        %1590 = vmatpush.msra.mxu0 0.0
        %1591 = vmatpush.msra.mxu0 0.0
        %1592 = vmatpush.msra.mxu0 0.0
        %1593 = vmatpush.msra.mxu0 0.0
        %1594 = vmatpush.msra.mxu0 0.0
        %1595 = vmatpush.msra.mxu0 0.0
        %1596 = vmatpush.msra.mxu0 0.0
        %1597 = vmatpush.msra.mxu0 0.0
        %1598 = vmatpush.msra.mxu0 0.0
        %1599 = vmatpush.msra.mxu0 0.0
        %1600 = vmatpush.msra.mxu0 %v1223
        %1601 = vmatmul.f32.gmra.mxu0 %v1543
        %v1602 = vpop.f32.mrf.mxu0
        %v1603 = vadd.f32 0.0, %v1602
        %1604 = vdwg.mxu0
        %v1605 = vadd.f32 %v1539, %v1563
        %v1606 = vadd.f32 %v1540, %v1583
        %v1607 = vadd.f32 %v1541, %v1603
        %v1608 = vld [vmem:[#allocation3 + $0x8] sm:$0xff]
        %v1609 = vld [vmem:[#allocation3 + $0x10] sm:$0xff]
        %v1610 = vld [vmem:[#allocation3 + $0x18] sm:$0xff]
        %v1611 = vld [vmem:[#allocation3 + $0x20] sm:$0xff]
        %1616 = vrot.lane.b32.xlu0 %v1608, 127
        %v1617 = vpop.permute.xlu0 %1616
        %1618 = vrot.lane.b32.xlu0 %v1609, 127
        %v1619 = vpop.permute.xlu0 %1618
        %1620 = vrot.lane.b32.xlu0 %v1610, 127
        %v1621 = vpop.permute.xlu0 %1620
        %1622 = vrot.lane.b32.xlu0 %v1611, 127
        %v1623 = vpop.permute.xlu0 %1622
        %v1624 = vsel %vm880, %v1617, %v1619
        %v1625 = vsel %vm880, %v1619, %v1621
        %v1626 = vsel %vm880, %v1621, %v1623
        %v1631 = vsel %vm494, %v457, 0
        %1633 = vmatpush.msra.mxu0 0.0
        %1634 = vmatpush.msra.mxu0 0.0
        %1635 = vmatpush.msra.mxu0 0.0
        %1636 = vmatpush.msra.mxu0 0.0
        %1637 = vmatpush.msra.mxu0 0.0
        %1638 = vmatpush.msra.mxu0 0.0
        %1639 = vmatpush.msra.mxu0 0.0
        %1640 = vmatpush.msra.mxu0 0.0
        %1641 = vmatpush.msra.mxu0 0.0
        %1642 = vmatpush.msra.mxu0 0.0
        %1643 = vmatpush.msra.mxu0 0.0
        %1644 = vmatpush.msra.mxu0 0.0
        %1645 = vmatpush.msra.mxu0 0.0
        %1646 = vmatpush.msra.mxu0 0.0
        %1647 = vmatpush.msra.mxu0 0.0
        %1648 = vmatpush.msra.mxu0 %v1624
        %1649 = vmatmul.f32.gmra.mxu0 %v1631
        %v1650 = vpop.f32.mrf.mxu0
        %v1651 = vadd.f32 0.0, %v1650
        %1652 = vdwg.mxu0
        %1653 = vmatpush.msra.mxu0 0.0
        %1654 = vmatpush.msra.mxu0 0.0
        %1655 = vmatpush.msra.mxu0 0.0
        %1656 = vmatpush.msra.mxu0 0.0
        %1657 = vmatpush.msra.mxu0 0.0
        %1658 = vmatpush.msra.mxu0 0.0
        %1659 = vmatpush.msra.mxu0 0.0
        %1660 = vmatpush.msra.mxu0 0.0
        %1661 = vmatpush.msra.mxu0 0.0
        %1662 = vmatpush.msra.mxu0 0.0
        %1663 = vmatpush.msra.mxu0 0.0
        %1664 = vmatpush.msra.mxu0 0.0
        %1665 = vmatpush.msra.mxu0 0.0
        %1666 = vmatpush.msra.mxu0 0.0
        %1667 = vmatpush.msra.mxu0 0.0
        %1668 = vmatpush.msra.mxu0 %v1625
        %1669 = vmatmul.f32.gmra.mxu0 %v1631
        %v1670 = vpop.f32.mrf.mxu0
        %v1671 = vadd.f32 0.0, %v1670
        %1672 = vdwg.mxu0
        %1673 = vmatpush.msra.mxu0 0.0
        %1674 = vmatpush.msra.mxu0 0.0
        %1675 = vmatpush.msra.mxu0 0.0
        %1676 = vmatpush.msra.mxu0 0.0
        %1677 = vmatpush.msra.mxu0 0.0
        %1678 = vmatpush.msra.mxu0 0.0
        %1679 = vmatpush.msra.mxu0 0.0
        %1680 = vmatpush.msra.mxu0 0.0
        %1681 = vmatpush.msra.mxu0 0.0
        %1682 = vmatpush.msra.mxu0 0.0
        %1683 = vmatpush.msra.mxu0 0.0
        %1684 = vmatpush.msra.mxu0 0.0
        %1685 = vmatpush.msra.mxu0 0.0
        %1686 = vmatpush.msra.mxu0 0.0
        %1687 = vmatpush.msra.mxu0 0.0
        %1688 = vmatpush.msra.mxu0 %v1626
        %1689 = vmatmul.f32.gmra.mxu0 %v1631
        %v1690 = vpop.f32.mrf.mxu0
        %v1691 = vadd.f32 0.0, %v1690
        %1692 = vdwg.mxu0
        %v1693 = vadd.f32 %v1605, %v1651
        %v1694 = vadd.f32 %v1606, %v1671
        %v1695 = vadd.f32 %v1607, %v1691
        %1696 = vrot.lane.b32.xlu0 %v1608, 111
        %v1697 = vpop.permute.xlu0 %1696
        %1698 = vrot.lane.b32.xlu0 %v1609, 111
        %v1699 = vpop.permute.xlu0 %1698
        %1700 = vrot.lane.b32.xlu0 %v1610, 111
        %v1701 = vpop.permute.xlu0 %1700
        %1702 = vrot.lane.b32.xlu0 %v1611, 111
        %v1703 = vpop.permute.xlu0 %1702
        %v1704 = vsel %vm961, %v1697, %v1699
        %v1705 = vsel %vm961, %v1699, %v1701
        %v1706 = vsel %vm961, %v1701, %v1703
        %v1711 = vsel %vm494, %v458, 0
        %1713 = vmatpush.msra.mxu0 0.0
        %1714 = vmatpush.msra.mxu0 0.0
        %1715 = vmatpush.msra.mxu0 0.0
        %1716 = vmatpush.msra.mxu0 0.0
        %1717 = vmatpush.msra.mxu0 0.0
        %1718 = vmatpush.msra.mxu0 0.0
        %1719 = vmatpush.msra.mxu0 0.0
        %1720 = vmatpush.msra.mxu0 0.0
        %1721 = vmatpush.msra.mxu0 0.0
        %1722 = vmatpush.msra.mxu0 0.0
        %1723 = vmatpush.msra.mxu0 0.0
        %1724 = vmatpush.msra.mxu0 0.0
        %1725 = vmatpush.msra.mxu0 0.0
        %1726 = vmatpush.msra.mxu0 0.0
        %1727 = vmatpush.msra.mxu0 0.0
        %1728 = vmatpush.msra.mxu0 %v1704
        %1729 = vmatmul.f32.gmra.mxu0 %v1711
        %v1730 = vpop.f32.mrf.mxu0
        %v1731 = vadd.f32 0.0, %v1730
        %1732 = vdwg.mxu0
        %1733 = vmatpush.msra.mxu0 0.0
        %1734 = vmatpush.msra.mxu0 0.0
        %1735 = vmatpush.msra.mxu0 0.0
        %1736 = vmatpush.msra.mxu0 0.0
        %1737 = vmatpush.msra.mxu0 0.0
        %1738 = vmatpush.msra.mxu0 0.0
        %1739 = vmatpush.msra.mxu0 0.0
        %1740 = vmatpush.msra.mxu0 0.0
        %1741 = vmatpush.msra.mxu0 0.0
        %1742 = vmatpush.msra.mxu0 0.0
        %1743 = vmatpush.msra.mxu0 0.0
        %1744 = vmatpush.msra.mxu0 0.0
        %1745 = vmatpush.msra.mxu0 0.0
        %1746 = vmatpush.msra.mxu0 0.0
        %1747 = vmatpush.msra.mxu0 0.0
        %1748 = vmatpush.msra.mxu0 %v1705
        %1749 = vmatmul.f32.gmra.mxu0 %v1711
        %v1750 = vpop.f32.mrf.mxu0
        %v1751 = vadd.f32 0.0, %v1750
        %1752 = vdwg.mxu0
        %1753 = vmatpush.msra.mxu0 0.0
        %1754 = vmatpush.msra.mxu0 0.0
        %1755 = vmatpush.msra.mxu0 0.0
        %1756 = vmatpush.msra.mxu0 0.0
        %1757 = vmatpush.msra.mxu0 0.0
        %1758 = vmatpush.msra.mxu0 0.0
        %1759 = vmatpush.msra.mxu0 0.0
        %1760 = vmatpush.msra.mxu0 0.0
        %1761 = vmatpush.msra.mxu0 0.0
        %1762 = vmatpush.msra.mxu0 0.0
        %1763 = vmatpush.msra.mxu0 0.0
        %1764 = vmatpush.msra.mxu0 0.0
        %1765 = vmatpush.msra.mxu0 0.0
        %1766 = vmatpush.msra.mxu0 0.0
        %1767 = vmatpush.msra.mxu0 0.0
        %1768 = vmatpush.msra.mxu0 %v1706
        %1769 = vmatmul.f32.gmra.mxu0 %v1711
        %v1770 = vpop.f32.mrf.mxu0
        %v1771 = vadd.f32 0.0, %v1770
        %1772 = vdwg.mxu0
        %v1773 = vadd.f32 %v1693, %v1731
        %v1774 = vadd.f32 %v1694, %v1751
        %v1775 = vadd.f32 %v1695, %v1771
        %1776 = vrot.lane.b32.xlu0 %v1608, 110
        %v1777 = vpop.permute.xlu0 %1776
        %1778 = vrot.lane.b32.xlu0 %v1609, 110
        %v1779 = vpop.permute.xlu0 %1778
        %1780 = vrot.lane.b32.xlu0 %v1610, 110
        %v1781 = vpop.permute.xlu0 %1780
        %1782 = vrot.lane.b32.xlu0 %v1611, 110
        %v1783 = vpop.permute.xlu0 %1782
        %v1784 = vsel %vm1042, %v1777, %v1779
        %v1785 = vsel %vm1042, %v1779, %v1781
        %v1786 = vsel %vm1042, %v1781, %v1783
        %v1791 = vsel %vm494, %v459, 0
        %1793 = vmatpush.msra.mxu0 0.0
        %1794 = vmatpush.msra.mxu0 0.0
        %1795 = vmatpush.msra.mxu0 0.0
        %1796 = vmatpush.msra.mxu0 0.0
        %1797 = vmatpush.msra.mxu0 0.0
        %1798 = vmatpush.msra.mxu0 0.0
        %1799 = vmatpush.msra.mxu0 0.0
        %1800 = vmatpush.msra.mxu0 0.0
        %1801 = vmatpush.msra.mxu0 0.0
        %1802 = vmatpush.msra.mxu0 0.0
        %1803 = vmatpush.msra.mxu0 0.0
        %1804 = vmatpush.msra.mxu0 0.0
        %1805 = vmatpush.msra.mxu0 0.0
        %1806 = vmatpush.msra.mxu0 0.0
        %1807 = vmatpush.msra.mxu0 0.0
        %1808 = vmatpush.msra.mxu0 %v1784
        %1809 = vmatmul.f32.gmra.mxu0 %v1791
        %v1810 = vpop.f32.mrf.mxu0
        %v1811 = vadd.f32 0.0, %v1810
        %1812 = vdwg.mxu0
        %1813 = vmatpush.msra.mxu0 0.0
        %1814 = vmatpush.msra.mxu0 0.0
        %1815 = vmatpush.msra.mxu0 0.0
        %1816 = vmatpush.msra.mxu0 0.0
        %1817 = vmatpush.msra.mxu0 0.0
        %1818 = vmatpush.msra.mxu0 0.0
        %1819 = vmatpush.msra.mxu0 0.0
        %1820 = vmatpush.msra.mxu0 0.0
        %1821 = vmatpush.msra.mxu0 0.0
        %1822 = vmatpush.msra.mxu0 0.0
        %1823 = vmatpush.msra.mxu0 0.0
        %1824 = vmatpush.msra.mxu0 0.0
        %1825 = vmatpush.msra.mxu0 0.0
        %1826 = vmatpush.msra.mxu0 0.0
        %1827 = vmatpush.msra.mxu0 0.0
        %1828 = vmatpush.msra.mxu0 %v1785
        %1829 = vmatmul.f32.gmra.mxu0 %v1791
        %v1830 = vpop.f32.mrf.mxu0
        %v1831 = vadd.f32 0.0, %v1830
        %1832 = vdwg.mxu0
        %1833 = vmatpush.msra.mxu0 0.0
        %1834 = vmatpush.msra.mxu0 0.0
        %1835 = vmatpush.msra.mxu0 0.0
        %1836 = vmatpush.msra.mxu0 0.0
        %1837 = vmatpush.msra.mxu0 0.0
        %1838 = vmatpush.msra.mxu0 0.0
        %1839 = vmatpush.msra.mxu0 0.0
        %1840 = vmatpush.msra.mxu0 0.0
        %1841 = vmatpush.msra.mxu0 0.0
        %1842 = vmatpush.msra.mxu0 0.0
        %1843 = vmatpush.msra.mxu0 0.0
        %1844 = vmatpush.msra.mxu0 0.0
        %1845 = vmatpush.msra.mxu0 0.0
        %1846 = vmatpush.msra.mxu0 0.0
        %1847 = vmatpush.msra.mxu0 0.0
        %1848 = vmatpush.msra.mxu0 %v1786
        %1849 = vmatmul.f32.gmra.mxu0 %v1791
        %v1850 = vpop.f32.mrf.mxu0
        %v1851 = vadd.f32 0.0, %v1850
        %1852 = vdwg.mxu0
        %v1853 = vadd.f32 %v1773, %v1811
        %v1854 = vadd.f32 %v1774, %v1831
        %v1855 = vadd.f32 %v1775, %v1851
        %1856 = vrot.lane.b32.xlu0 %v1608, 109
        %v1857 = vpop.permute.xlu0 %1856
        %1858 = vrot.lane.b32.xlu0 %v1609, 109
        %v1859 = vpop.permute.xlu0 %1858
        %1860 = vrot.lane.b32.xlu0 %v1610, 109
        %v1861 = vpop.permute.xlu0 %1860
        %1862 = vrot.lane.b32.xlu0 %v1611, 109
        %v1863 = vpop.permute.xlu0 %1862
        %v1864 = vsel %vm1123, %v1857, %v1859
        %v1865 = vsel %vm1123, %v1859, %v1861
        %v1866 = vsel %vm1123, %v1861, %v1863
        %v1871 = vsel %vm494, %v460, 0
        %1873 = vmatpush.msra.mxu0 0.0
        %1874 = vmatpush.msra.mxu0 0.0
        %1875 = vmatpush.msra.mxu0 0.0
        %1876 = vmatpush.msra.mxu0 0.0
        %1877 = vmatpush.msra.mxu0 0.0
        %1878 = vmatpush.msra.mxu0 0.0
        %1879 = vmatpush.msra.mxu0 0.0
        %1880 = vmatpush.msra.mxu0 0.0
        %1881 = vmatpush.msra.mxu0 0.0
        %1882 = vmatpush.msra.mxu0 0.0
        %1883 = vmatpush.msra.mxu0 0.0
        %1884 = vmatpush.msra.mxu0 0.0
        %1885 = vmatpush.msra.mxu0 0.0
        %1886 = vmatpush.msra.mxu0 0.0
        %1887 = vmatpush.msra.mxu0 0.0
        %1888 = vmatpush.msra.mxu0 %v1864
        %1889 = vmatmul.f32.gmra.mxu0 %v1871
        %v1890 = vpop.f32.mrf.mxu0
        %v1891 = vadd.f32 0.0, %v1890
        %1892 = vdwg.mxu0
        %1893 = vmatpush.msra.mxu0 0.0
        %1894 = vmatpush.msra.mxu0 0.0
        %1895 = vmatpush.msra.mxu0 0.0
        %1896 = vmatpush.msra.mxu0 0.0
        %1897 = vmatpush.msra.mxu0 0.0
        %1898 = vmatpush.msra.mxu0 0.0
        %1899 = vmatpush.msra.mxu0 0.0
        %1900 = vmatpush.msra.mxu0 0.0
        %1901 = vmatpush.msra.mxu0 0.0
        %1902 = vmatpush.msra.mxu0 0.0
        %1903 = vmatpush.msra.mxu0 0.0
        %1904 = vmatpush.msra.mxu0 0.0
        %1905 = vmatpush.msra.mxu0 0.0
        %1906 = vmatpush.msra.mxu0 0.0
        %1907 = vmatpush.msra.mxu0 0.0
        %1908 = vmatpush.msra.mxu0 %v1865
        %1909 = vmatmul.f32.gmra.mxu0 %v1871
        %v1910 = vpop.f32.mrf.mxu0
        %v1911 = vadd.f32 0.0, %v1910
        %1912 = vdwg.mxu0
        %1913 = vmatpush.msra.mxu0 0.0
        %1914 = vmatpush.msra.mxu0 0.0
        %1915 = vmatpush.msra.mxu0 0.0
        %1916 = vmatpush.msra.mxu0 0.0
        %1917 = vmatpush.msra.mxu0 0.0
        %1918 = vmatpush.msra.mxu0 0.0
        %1919 = vmatpush.msra.mxu0 0.0
        %1920 = vmatpush.msra.mxu0 0.0
        %1921 = vmatpush.msra.mxu0 0.0
        %1922 = vmatpush.msra.mxu0 0.0
        %1923 = vmatpush.msra.mxu0 0.0
        %1924 = vmatpush.msra.mxu0 0.0
        %1925 = vmatpush.msra.mxu0 0.0
        %1926 = vmatpush.msra.mxu0 0.0
        %1927 = vmatpush.msra.mxu0 0.0
        %1928 = vmatpush.msra.mxu0 %v1866
        %1929 = vmatmul.f32.gmra.mxu0 %v1871
        %v1930 = vpop.f32.mrf.mxu0
        %v1931 = vadd.f32 0.0, %v1930
        %1932 = vdwg.mxu0
        %v1933 = vadd.f32 %v1853, %v1891
        %v1934 = vadd.f32 %v1854, %v1911
        %v1935 = vadd.f32 %v1855, %v1931
        %1937 = vset.pattern.permute.xlu0 0
        %1938 = vperm.xlu0 %1937, %v462
        %v1939 = vpop.permute.xlu0 %1938
        %v1941 = vadd.f32 %v1933, %v1939
        %v1942 = vadd.f32 %v1934, %v1939
        %v1943 = vadd.f32 %v1935, %v1939
        %v1944 = vsel %vm1211, %v1941, 0.0
        %v1945 = vsel %vm1212, %v1942, 0.0
        %v1946 = vsel %vm1213, %v1943, 0.0
        %v1947 = vadd.f32 %v1944, %v1945
        %v1948 = vadd.f32 %v1947, %v1946
        %1949 = vadd.xlane.f32.xlu0 %v1948
        %v1950 = vpop.xlane.xlu0 %1949
        %v1951 = vmul.f32 %v1950, 0.00390625
        %v1953 = vsel %vm494, %v464, 0
        %1955 = vmatpush.msra.mxu0 0.0
        %1956 = vmatpush.msra.mxu0 0.0
        %1957 = vmatpush.msra.mxu0 0.0
        %1958 = vmatpush.msra.mxu0 0.0
        %1959 = vmatpush.msra.mxu0 0.0
        %1960 = vmatpush.msra.mxu0 0.0
        %1961 = vmatpush.msra.mxu0 0.0
        %1962 = vmatpush.msra.mxu0 0.0
        %1963 = vmatpush.msra.mxu0 0.0
        %1964 = vmatpush.msra.mxu0 0.0
        %1965 = vmatpush.msra.mxu0 0.0
        %1966 = vmatpush.msra.mxu0 0.0
        %1967 = vmatpush.msra.mxu0 0.0
        %1968 = vmatpush.msra.mxu0 0.0
        %1969 = vmatpush.msra.mxu0 0.0
        %1970 = vmatpush.msra.mxu0 %v1951
        %1971 = vmatmul.f32.gmra.mxu0 %v1953
        %v1972 = vpop.f32.mrf.mxu0
        %v1973 = vadd.f32 %v466, %v1972
        %1974 = vdwg.mxu0
        %v1975 = vmax.f32 %v1973, 0.0
        %v1977 = vsel %vm494, %v468, 0
        %1979 = vmatpush.msra.mxu0 0.0
        %1980 = vmatpush.msra.mxu0 0.0
        %1981 = vmatpush.msra.mxu0 0.0
        %1982 = vmatpush.msra.mxu0 0.0
        %1983 = vmatpush.msra.mxu0 0.0
        %1984 = vmatpush.msra.mxu0 0.0
        %1985 = vmatpush.msra.mxu0 0.0
        %1986 = vmatpush.msra.mxu0 0.0
        %1987 = vmatpush.msra.mxu0 0.0
        %1988 = vmatpush.msra.mxu0 0.0
        %1989 = vmatpush.msra.mxu0 0.0
        %1990 = vmatpush.msra.mxu0 0.0
        %1991 = vmatpush.msra.mxu0 0.0
        %1992 = vmatpush.msra.mxu0 0.0
        %1993 = vmatpush.msra.mxu0 0.0
        %1994 = vmatpush.msra.mxu0 %v1975
        %1995 = vmatmul.f32.gmra.mxu0 %v1977
        %v1996 = vpop.f32.mrf.mxu0
        %v1997 = vadd.f32 %v470, %v1996
        %1998 = vdwg.mxu0
        %v1999 = vxor.u32 %v1997, 2147483648
        %v2000 = vmul.f32 %v1999, 1.442695
        %v2001 = vpow.pop %v2000
        %v2002 = vadd.f32 %v2001, 1.0
        %v2003 = vrcp.pop %v2002
        %v2004 = vmul.f32 %v2002, %v2003
        %v2005 = vsub.f32 1.0, %v2004
        %v2006 = vmul.f32 %v2003, %v2005
        %v2007 = vadd.f32 %v2003, %v2006
        %vm2008 = vweird.f32 %v2002
        %vm2009 = vweird.f32 %v2003
        %vm2010 = vmor %vm2008, %vm2009
        %v2011 = vsel %vm2010, %v2003, %v2007
        %v2012 = vand.u32 2147483647, %v2002
        %vm2013 = vcmp.eq.f32.partialorder %v2012, 8.507059e+37
        %v2014 = vand.u32 %v2002, 2147483648
        %v2015 = vor.u32 1.1754944e-38, %v2014
        %v2016 = vsel %vm2013, %v2015, %v2011
        %v2017 = vmul.f32 1.0, %v2016
        %v2018 = vld [vmem:[#allocation2 + $0x8] sm:$0xff]
        %v2019 = vld [vmem:[#allocation2 + $0x10] sm:$0xff]
        %v2020 = vld [vmem:[#allocation2 + $0x18] sm:$0xff]
        %2022 = vset.pattern.permute.xlu0 0
        %2023 = vperm.xlu0 %2022, %v2017
        %v2024 = vpop.permute.xlu0 %2023
        %v2026 = vmul.f32 %v1944, %v2024
        %v2027 = vmul.f32 %v1945, %v2024
        %v2028 = vmul.f32 %v1946, %v2024
        %v2029 = vadd.f32 %v2018, %v2026
        %v2030 = vadd.f32 %v2019, %v2027
        %v2031 = vadd.f32 %v2020, %v2028
        %2032 = vst [vmem:[#allocation2 + $0x8] sm:$0xff] %v2029
        %2033 = vst [vmem:[#allocation2 + $0x10] sm:$0xff] %v2030
        %2034 = vst [vmem:[#allocation2 + $0x18] sm:$0xff] %v2031
      $region73: #{rg_forward.1} parent=67 // loop_footer
        %s436 = sadd.s32 1, %s432
      $region74: #{rg_forward.1} parent=67 // loop_footer_branch
        %431 = sbr.rel target = $region70
      $region75: #{rg_forward.1} parent=67 // loop_exit
        _
      %v2035 = vld [vmem:[%s10] sm:$0xff]
      %v2036 = vld [vmem:[%s10 + $0x8] sm:$0xff]
      %v2037 = vld [vmem:[%s10 + $0x10] sm:$0xff]
      %v2038 = vld [vmem:[%s10 + $0x18] sm:$0xff]
      %v2039 = vld [vmem:[%s10 + $0x20] sm:$0xff]
      %v2040 = vld [vmem:[%s10 + $0x28] sm:$0xff]
      %v2041 = vld [vmem:[%s10 + $0x30] sm:$0xff]
      %v2042 = vld [vmem:[%s10 + $0x38] sm:$0xff]
      %v2043 = vld [vmem:[%s10 + $0x40] sm:$0xff]
      %v2044 = vld [vmem:[#allocation2] sm:$0xff]
      %v2045 = vld [vmem:[#allocation2 + $0x8] sm:$0xff]
      %v2046 = vld [vmem:[#allocation2 + $0x10] sm:$0xff]
      %v2047 = vld [vmem:[#allocation2 + $0x18] sm:$0xff]
      %2052 = vrot.lane.b32.xlu0 %v2044, 18
      %v2053 = vpop.permute.xlu0 %2052
      %2054 = vrot.lane.b32.xlu0 %v2045, 18
      %v2055 = vpop.permute.xlu0 %2054
      %2056 = vrot.lane.b32.xlu0 %v2046, 18
      %v2057 = vpop.permute.xlu0 %2056
      %2058 = vrot.lane.b32.xlu0 %v2047, 18
      %v2059 = vpop.permute.xlu0 %2058
      %vm2060 = vcmask 146432
      %v2061 = vsel %vm2060, %v2053, %v2055
      %v2062 = vsel %vm2060, %v2055, %v2057
      %v2063 = vsel %vm2060, %v2057, %v2059
      %vm2067 = vcmask 64512
      %v2069 = vsel %vm2067, %v2036, 0
      %2071 = vmatpush.msra.mxu0 0.0
      %2072 = vmatpush.msra.mxu0 0.0
      %2073 = vmatpush.msra.mxu0 0.0
      %2074 = vmatpush.msra.mxu0 0.0
      %2075 = vmatpush.msra.mxu0 0.0
      %2076 = vmatpush.msra.mxu0 0.0
      %2077 = vmatpush.msra.mxu0 0.0
      %2078 = vmatpush.msra.mxu0 0.0
      %2079 = vmatpush.msra.mxu0 0.0
      %2080 = vmatpush.msra.mxu0 0.0
      %2081 = vmatpush.msra.mxu0 0.0
      %2082 = vmatpush.msra.mxu0 0.0
      %2083 = vmatpush.msra.mxu0 0.0
      %2084 = vmatpush.msra.mxu0 0.0
      %2085 = vmatpush.msra.mxu0 0.0
      %2086 = vmatpush.msra.mxu0 %v2061
      %2087 = vmatmul.f32.gmra.mxu0 %v2069
      %v2088 = vpop.f32.mrf.mxu0
      %v2089 = vadd.f32 0.0, %v2088
      %2090 = vdwg.mxu0
      %2091 = vmatpush.msra.mxu0 0.0
      %2092 = vmatpush.msra.mxu0 0.0
      %2093 = vmatpush.msra.mxu0 0.0
      %2094 = vmatpush.msra.mxu0 0.0
      %2095 = vmatpush.msra.mxu0 0.0
      %2096 = vmatpush.msra.mxu0 0.0
      %2097 = vmatpush.msra.mxu0 0.0
      %2098 = vmatpush.msra.mxu0 0.0
      %2099 = vmatpush.msra.mxu0 0.0
      %2100 = vmatpush.msra.mxu0 0.0
      %2101 = vmatpush.msra.mxu0 0.0
      %2102 = vmatpush.msra.mxu0 0.0
      %2103 = vmatpush.msra.mxu0 0.0
      %2104 = vmatpush.msra.mxu0 0.0
      %2105 = vmatpush.msra.mxu0 0.0
      %2106 = vmatpush.msra.mxu0 %v2062
      %2107 = vmatmul.f32.gmra.mxu0 %v2069
      %v2108 = vpop.f32.mrf.mxu0
      %v2109 = vadd.f32 0.0, %v2108
      %2110 = vdwg.mxu0
      %2111 = vmatpush.msra.mxu0 0.0
      %2112 = vmatpush.msra.mxu0 0.0
      %2113 = vmatpush.msra.mxu0 0.0
      %2114 = vmatpush.msra.mxu0 0.0
      %2115 = vmatpush.msra.mxu0 0.0
      %2116 = vmatpush.msra.mxu0 0.0
      %2117 = vmatpush.msra.mxu0 0.0
      %2118 = vmatpush.msra.mxu0 0.0
      %2119 = vmatpush.msra.mxu0 0.0
      %2120 = vmatpush.msra.mxu0 0.0
      %2121 = vmatpush.msra.mxu0 0.0
      %2122 = vmatpush.msra.mxu0 0.0
      %2123 = vmatpush.msra.mxu0 0.0
      %2124 = vmatpush.msra.mxu0 0.0
      %2125 = vmatpush.msra.mxu0 0.0
      %2126 = vmatpush.msra.mxu0 %v2063
      %2127 = vmatmul.f32.gmra.mxu0 %v2069
      %v2128 = vpop.f32.mrf.mxu0
      %v2129 = vadd.f32 0.0, %v2128
      %2130 = vdwg.mxu0
      %2131 = vrot.lane.b32.xlu0 %v2044, 19
      %v2132 = vpop.permute.xlu0 %2131
      %2133 = vrot.lane.b32.xlu0 %v2045, 19
      %v2134 = vpop.permute.xlu0 %2133
      %2135 = vrot.lane.b32.xlu0 %v2046, 19
      %v2136 = vpop.permute.xlu0 %2135
      %2137 = vrot.lane.b32.xlu0 %v2047, 19
      %v2138 = vpop.permute.xlu0 %2137
      %vm2139 = vcmask 154624
      %v2140 = vsel %vm2139, %v2132, %v2134
      %v2141 = vsel %vm2139, %v2134, %v2136
      %v2142 = vsel %vm2139, %v2136, %v2138
      %v2147 = vsel %vm2067, %v2035, 0
      %2149 = vmatpush.msra.mxu0 0.0
      %2150 = vmatpush.msra.mxu0 0.0
      %2151 = vmatpush.msra.mxu0 0.0
      %2152 = vmatpush.msra.mxu0 0.0
      %2153 = vmatpush.msra.mxu0 0.0
      %2154 = vmatpush.msra.mxu0 0.0
      %2155 = vmatpush.msra.mxu0 0.0
      %2156 = vmatpush.msra.mxu0 0.0
      %2157 = vmatpush.msra.mxu0 0.0
      %2158 = vmatpush.msra.mxu0 0.0
      %2159 = vmatpush.msra.mxu0 0.0
      %2160 = vmatpush.msra.mxu0 0.0
      %2161 = vmatpush.msra.mxu0 0.0
      %2162 = vmatpush.msra.mxu0 0.0
      %2163 = vmatpush.msra.mxu0 0.0
      %2164 = vmatpush.msra.mxu0 %v2140
      %2165 = vmatmul.f32.gmra.mxu0 %v2147
      %v2166 = vpop.f32.mrf.mxu0
      %v2167 = vadd.f32 %v2089, %v2166
      %2168 = vdwg.mxu0
      %2169 = vmatpush.msra.mxu0 0.0
      %2170 = vmatpush.msra.mxu0 0.0
      %2171 = vmatpush.msra.mxu0 0.0
      %2172 = vmatpush.msra.mxu0 0.0
      %2173 = vmatpush.msra.mxu0 0.0
      %2174 = vmatpush.msra.mxu0 0.0
      %2175 = vmatpush.msra.mxu0 0.0
      %2176 = vmatpush.msra.mxu0 0.0
      %2177 = vmatpush.msra.mxu0 0.0
      %2178 = vmatpush.msra.mxu0 0.0
      %2179 = vmatpush.msra.mxu0 0.0
      %2180 = vmatpush.msra.mxu0 0.0
      %2181 = vmatpush.msra.mxu0 0.0
      %2182 = vmatpush.msra.mxu0 0.0
      %2183 = vmatpush.msra.mxu0 0.0
      %2184 = vmatpush.msra.mxu0 %v2141
      %2185 = vmatmul.f32.gmra.mxu0 %v2147
      %v2186 = vpop.f32.mrf.mxu0
      %v2187 = vadd.f32 %v2109, %v2186
      %2188 = vdwg.mxu0
      %2189 = vmatpush.msra.mxu0 0.0
      %2190 = vmatpush.msra.mxu0 0.0
      %2191 = vmatpush.msra.mxu0 0.0
      %2192 = vmatpush.msra.mxu0 0.0
      %2193 = vmatpush.msra.mxu0 0.0
      %2194 = vmatpush.msra.mxu0 0.0
      %2195 = vmatpush.msra.mxu0 0.0
      %2196 = vmatpush.msra.mxu0 0.0
      %2197 = vmatpush.msra.mxu0 0.0
      %2198 = vmatpush.msra.mxu0 0.0
      %2199 = vmatpush.msra.mxu0 0.0
      %2200 = vmatpush.msra.mxu0 0.0
      %2201 = vmatpush.msra.mxu0 0.0
      %2202 = vmatpush.msra.mxu0 0.0
      %2203 = vmatpush.msra.mxu0 0.0
      %2204 = vmatpush.msra.mxu0 %v2142
      %2205 = vmatmul.f32.gmra.mxu0 %v2147
      %v2206 = vpop.f32.mrf.mxu0
      %v2207 = vadd.f32 %v2129, %v2206
      %2208 = vdwg.mxu0
      %2209 = vrot.lane.b32.xlu0 %v2044, 17
      %v2210 = vpop.permute.xlu0 %2209
      %2211 = vrot.lane.b32.xlu0 %v2045, 17
      %v2212 = vpop.permute.xlu0 %2211
      %2213 = vrot.lane.b32.xlu0 %v2046, 17
      %v2214 = vpop.permute.xlu0 %2213
      %2215 = vrot.lane.b32.xlu0 %v2047, 17
      %v2216 = vpop.permute.xlu0 %2215
      %vm2217 = vcmask 138240
      %v2218 = vsel %vm2217, %v2210, %v2212
      %v2219 = vsel %vm2217, %v2212, %v2214
      %v2220 = vsel %vm2217, %v2214, %v2216
      %v2225 = vsel %vm2067, %v2037, 0
      %2227 = vmatpush.msra.mxu0 0.0
      %2228 = vmatpush.msra.mxu0 0.0
      %2229 = vmatpush.msra.mxu0 0.0
      %2230 = vmatpush.msra.mxu0 0.0
      %2231 = vmatpush.msra.mxu0 0.0
      %2232 = vmatpush.msra.mxu0 0.0
      %2233 = vmatpush.msra.mxu0 0.0
      %2234 = vmatpush.msra.mxu0 0.0
      %2235 = vmatpush.msra.mxu0 0.0
      %2236 = vmatpush.msra.mxu0 0.0
      %2237 = vmatpush.msra.mxu0 0.0
      %2238 = vmatpush.msra.mxu0 0.0
      %2239 = vmatpush.msra.mxu0 0.0
      %2240 = vmatpush.msra.mxu0 0.0
      %2241 = vmatpush.msra.mxu0 0.0
      %2242 = vmatpush.msra.mxu0 %v2218
      %2243 = vmatmul.f32.gmra.mxu0 %v2225
      %v2244 = vpop.f32.mrf.mxu0
      %v2245 = vadd.f32 0.0, %v2244
      %2246 = vdwg.mxu0
      %2247 = vmatpush.msra.mxu0 0.0
      %2248 = vmatpush.msra.mxu0 0.0
      %2249 = vmatpush.msra.mxu0 0.0
      %2250 = vmatpush.msra.mxu0 0.0
      %2251 = vmatpush.msra.mxu0 0.0
      %2252 = vmatpush.msra.mxu0 0.0
      %2253 = vmatpush.msra.mxu0 0.0
      %2254 = vmatpush.msra.mxu0 0.0
      %2255 = vmatpush.msra.mxu0 0.0
      %2256 = vmatpush.msra.mxu0 0.0
      %2257 = vmatpush.msra.mxu0 0.0
      %2258 = vmatpush.msra.mxu0 0.0
      %2259 = vmatpush.msra.mxu0 0.0
      %2260 = vmatpush.msra.mxu0 0.0
      %2261 = vmatpush.msra.mxu0 0.0
      %2262 = vmatpush.msra.mxu0 %v2219
      %2263 = vmatmul.f32.gmra.mxu0 %v2225
      %v2264 = vpop.f32.mrf.mxu0
      %v2265 = vadd.f32 0.0, %v2264
      %2266 = vdwg.mxu0
      %2267 = vmatpush.msra.mxu0 0.0
      %2268 = vmatpush.msra.mxu0 0.0
      %2269 = vmatpush.msra.mxu0 0.0
      %2270 = vmatpush.msra.mxu0 0.0
      %2271 = vmatpush.msra.mxu0 0.0
      %2272 = vmatpush.msra.mxu0 0.0
      %2273 = vmatpush.msra.mxu0 0.0
      %2274 = vmatpush.msra.mxu0 0.0
      %2275 = vmatpush.msra.mxu0 0.0
      %2276 = vmatpush.msra.mxu0 0.0
      %2277 = vmatpush.msra.mxu0 0.0
      %2278 = vmatpush.msra.mxu0 0.0
      %2279 = vmatpush.msra.mxu0 0.0
      %2280 = vmatpush.msra.mxu0 0.0
      %2281 = vmatpush.msra.mxu0 0.0
      %2282 = vmatpush.msra.mxu0 %v2220
      %2283 = vmatmul.f32.gmra.mxu0 %v2225
      %v2284 = vpop.f32.mrf.mxu0
      %v2285 = vadd.f32 0.0, %v2284
      %2286 = vdwg.mxu0
      %v2287 = vadd.f32 %v2167, %v2245
      %v2288 = vadd.f32 %v2187, %v2265
      %v2289 = vadd.f32 %v2207, %v2285
      %2290 = vrot.lane.b32.xlu0 %v2044, 1
      %v2291 = vpop.permute.xlu0 %2290
      %2292 = vrot.lane.b32.xlu0 %v2045, 1
      %v2293 = vpop.permute.xlu0 %2292
      %2294 = vrot.lane.b32.xlu0 %v2046, 1
      %v2295 = vpop.permute.xlu0 %2294
      %2296 = vrot.lane.b32.xlu0 %v2047, 1
      %v2297 = vpop.permute.xlu0 %2296
      %vm2298 = vcmask 7168
      %v2299 = vsel %vm2298, %v2291, %v2293
      %v2300 = vsel %vm2298, %v2293, %v2295
      %v2301 = vsel %vm2298, %v2295, %v2297
      %v2306 = vsel %vm2067, %v2038, 0
      %2308 = vmatpush.msra.mxu0 0.0
      %2309 = vmatpush.msra.mxu0 0.0
      %2310 = vmatpush.msra.mxu0 0.0
      %2311 = vmatpush.msra.mxu0 0.0
      %2312 = vmatpush.msra.mxu0 0.0
      %2313 = vmatpush.msra.mxu0 0.0
      %2314 = vmatpush.msra.mxu0 0.0
      %2315 = vmatpush.msra.mxu0 0.0
      %2316 = vmatpush.msra.mxu0 0.0
      %2317 = vmatpush.msra.mxu0 0.0
      %2318 = vmatpush.msra.mxu0 0.0
      %2319 = vmatpush.msra.mxu0 0.0
      %2320 = vmatpush.msra.mxu0 0.0
      %2321 = vmatpush.msra.mxu0 0.0
      %2322 = vmatpush.msra.mxu0 0.0
      %2323 = vmatpush.msra.mxu0 %v2299
      %2324 = vmatmul.f32.gmra.mxu0 %v2306
      %v2325 = vpop.f32.mrf.mxu0
      %v2326 = vadd.f32 0.0, %v2325
      %2327 = vdwg.mxu0
      %2328 = vmatpush.msra.mxu0 0.0
      %2329 = vmatpush.msra.mxu0 0.0
      %2330 = vmatpush.msra.mxu0 0.0
      %2331 = vmatpush.msra.mxu0 0.0
      %2332 = vmatpush.msra.mxu0 0.0
      %2333 = vmatpush.msra.mxu0 0.0
      %2334 = vmatpush.msra.mxu0 0.0
      %2335 = vmatpush.msra.mxu0 0.0
      %2336 = vmatpush.msra.mxu0 0.0
      %2337 = vmatpush.msra.mxu0 0.0
      %2338 = vmatpush.msra.mxu0 0.0
      %2339 = vmatpush.msra.mxu0 0.0
      %2340 = vmatpush.msra.mxu0 0.0
      %2341 = vmatpush.msra.mxu0 0.0
      %2342 = vmatpush.msra.mxu0 0.0
      %2343 = vmatpush.msra.mxu0 %v2300
      %2344 = vmatmul.f32.gmra.mxu0 %v2306
      %v2345 = vpop.f32.mrf.mxu0
      %v2346 = vadd.f32 0.0, %v2345
      %2347 = vdwg.mxu0
      %2348 = vmatpush.msra.mxu0 0.0
      %2349 = vmatpush.msra.mxu0 0.0
      %2350 = vmatpush.msra.mxu0 0.0
      %2351 = vmatpush.msra.mxu0 0.0
      %2352 = vmatpush.msra.mxu0 0.0
      %2353 = vmatpush.msra.mxu0 0.0
      %2354 = vmatpush.msra.mxu0 0.0
      %2355 = vmatpush.msra.mxu0 0.0
      %2356 = vmatpush.msra.mxu0 0.0
      %2357 = vmatpush.msra.mxu0 0.0
      %2358 = vmatpush.msra.mxu0 0.0
      %2359 = vmatpush.msra.mxu0 0.0
      %2360 = vmatpush.msra.mxu0 0.0
      %2361 = vmatpush.msra.mxu0 0.0
      %2362 = vmatpush.msra.mxu0 0.0
      %2363 = vmatpush.msra.mxu0 %v2301
      %2364 = vmatmul.f32.gmra.mxu0 %v2306
      %v2365 = vpop.f32.mrf.mxu0
      %v2366 = vadd.f32 0.0, %v2365
      %2367 = vdwg.mxu0
      %v2368 = vadd.f32 %v2287, %v2326
      %v2369 = vadd.f32 %v2288, %v2346
      %v2370 = vadd.f32 %v2289, %v2366
      %v2372 = vsel %vm2067, %v2039, 0
      %2374 = vmatpush.msra.mxu0 0.0
      %2375 = vmatpush.msra.mxu0 0.0
      %2376 = vmatpush.msra.mxu0 0.0
      %2377 = vmatpush.msra.mxu0 0.0
      %2378 = vmatpush.msra.mxu0 0.0
      %2379 = vmatpush.msra.mxu0 0.0
      %2380 = vmatpush.msra.mxu0 0.0
      %2381 = vmatpush.msra.mxu0 0.0
      %2382 = vmatpush.msra.mxu0 0.0
      %2383 = vmatpush.msra.mxu0 0.0
      %2384 = vmatpush.msra.mxu0 0.0
      %2385 = vmatpush.msra.mxu0 0.0
      %2386 = vmatpush.msra.mxu0 0.0
      %2387 = vmatpush.msra.mxu0 0.0
      %2388 = vmatpush.msra.mxu0 0.0
      %2389 = vmatpush.msra.mxu0 %v2045
      %2390 = vmatmul.f32.gmra.mxu0 %v2372
      %v2391 = vpop.f32.mrf.mxu0
      %v2392 = vadd.f32 0.0, %v2391
      %2393 = vdwg.mxu0
      %2394 = vmatpush.msra.mxu0 0.0
      %2395 = vmatpush.msra.mxu0 0.0
      %2396 = vmatpush.msra.mxu0 0.0
      %2397 = vmatpush.msra.mxu0 0.0
      %2398 = vmatpush.msra.mxu0 0.0
      %2399 = vmatpush.msra.mxu0 0.0
      %2400 = vmatpush.msra.mxu0 0.0
      %2401 = vmatpush.msra.mxu0 0.0
      %2402 = vmatpush.msra.mxu0 0.0
      %2403 = vmatpush.msra.mxu0 0.0
      %2404 = vmatpush.msra.mxu0 0.0
      %2405 = vmatpush.msra.mxu0 0.0
      %2406 = vmatpush.msra.mxu0 0.0
      %2407 = vmatpush.msra.mxu0 0.0
      %2408 = vmatpush.msra.mxu0 0.0
      %2409 = vmatpush.msra.mxu0 %v2046
      %2410 = vmatmul.f32.gmra.mxu0 %v2372
      %v2411 = vpop.f32.mrf.mxu0
      %v2412 = vadd.f32 0.0, %v2411
      %2413 = vdwg.mxu0
      %2414 = vmatpush.msra.mxu0 0.0
      %2415 = vmatpush.msra.mxu0 0.0
      %2416 = vmatpush.msra.mxu0 0.0
      %2417 = vmatpush.msra.mxu0 0.0
      %2418 = vmatpush.msra.mxu0 0.0
      %2419 = vmatpush.msra.mxu0 0.0
      %2420 = vmatpush.msra.mxu0 0.0
      %2421 = vmatpush.msra.mxu0 0.0
      %2422 = vmatpush.msra.mxu0 0.0
      %2423 = vmatpush.msra.mxu0 0.0
      %2424 = vmatpush.msra.mxu0 0.0
      %2425 = vmatpush.msra.mxu0 0.0
      %2426 = vmatpush.msra.mxu0 0.0
      %2427 = vmatpush.msra.mxu0 0.0
      %2428 = vmatpush.msra.mxu0 0.0
      %2429 = vmatpush.msra.mxu0 %v2047
      %2430 = vmatmul.f32.gmra.mxu0 %v2372
      %v2431 = vpop.f32.mrf.mxu0
      %v2432 = vadd.f32 0.0, %v2431
      %2433 = vdwg.mxu0
      %v2434 = vadd.f32 %v2368, %v2392
      %v2435 = vadd.f32 %v2369, %v2412
      %v2436 = vadd.f32 %v2370, %v2432
      %v2437 = vld [vmem:[#allocation2 + $0x8] sm:$0xff]
      %v2438 = vld [vmem:[#allocation2 + $0x10] sm:$0xff]
      %v2439 = vld [vmem:[#allocation2 + $0x18] sm:$0xff]
      %v2440 = vld [vmem:[#allocation2 + $0x20] sm:$0xff]
      %2445 = vrot.lane.b32.xlu0 %v2437, 127
      %v2446 = vpop.permute.xlu0 %2445
      %2447 = vrot.lane.b32.xlu0 %v2438, 127
      %v2448 = vpop.permute.xlu0 %2447
      %2449 = vrot.lane.b32.xlu0 %v2439, 127
      %v2450 = vpop.permute.xlu0 %2449
      %2451 = vrot.lane.b32.xlu0 %v2440, 127
      %v2452 = vpop.permute.xlu0 %2451
      %vm2453 = vcmask 1039360
      %v2454 = vsel %vm2453, %v2446, %v2448
      %v2455 = vsel %vm2453, %v2448, %v2450
      %v2456 = vsel %vm2453, %v2450, %v2452
      %v2461 = vsel %vm2067, %v2040, 0
      %2463 = vmatpush.msra.mxu0 0.0
      %2464 = vmatpush.msra.mxu0 0.0
      %2465 = vmatpush.msra.mxu0 0.0
      %2466 = vmatpush.msra.mxu0 0.0
      %2467 = vmatpush.msra.mxu0 0.0
      %2468 = vmatpush.msra.mxu0 0.0
      %2469 = vmatpush.msra.mxu0 0.0
      %2470 = vmatpush.msra.mxu0 0.0
      %2471 = vmatpush.msra.mxu0 0.0
      %2472 = vmatpush.msra.mxu0 0.0
      %2473 = vmatpush.msra.mxu0 0.0
      %2474 = vmatpush.msra.mxu0 0.0
      %2475 = vmatpush.msra.mxu0 0.0
      %2476 = vmatpush.msra.mxu0 0.0
      %2477 = vmatpush.msra.mxu0 0.0
      %2478 = vmatpush.msra.mxu0 %v2454
      %2479 = vmatmul.f32.gmra.mxu0 %v2461
      %v2480 = vpop.f32.mrf.mxu0
      %v2481 = vadd.f32 0.0, %v2480
      %2482 = vdwg.mxu0
      %2483 = vmatpush.msra.mxu0 0.0
      %2484 = vmatpush.msra.mxu0 0.0
      %2485 = vmatpush.msra.mxu0 0.0
      %2486 = vmatpush.msra.mxu0 0.0
      %2487 = vmatpush.msra.mxu0 0.0
      %2488 = vmatpush.msra.mxu0 0.0
      %2489 = vmatpush.msra.mxu0 0.0
      %2490 = vmatpush.msra.mxu0 0.0
      %2491 = vmatpush.msra.mxu0 0.0
      %2492 = vmatpush.msra.mxu0 0.0
      %2493 = vmatpush.msra.mxu0 0.0
      %2494 = vmatpush.msra.mxu0 0.0
      %2495 = vmatpush.msra.mxu0 0.0
      %2496 = vmatpush.msra.mxu0 0.0
      %2497 = vmatpush.msra.mxu0 0.0
      %2498 = vmatpush.msra.mxu0 %v2455
      %2499 = vmatmul.f32.gmra.mxu0 %v2461
      %v2500 = vpop.f32.mrf.mxu0
      %v2501 = vadd.f32 0.0, %v2500
      %2502 = vdwg.mxu0
      %2503 = vmatpush.msra.mxu0 0.0
      %2504 = vmatpush.msra.mxu0 0.0
      %2505 = vmatpush.msra.mxu0 0.0
      %2506 = vmatpush.msra.mxu0 0.0
      %2507 = vmatpush.msra.mxu0 0.0
      %2508 = vmatpush.msra.mxu0 0.0
      %2509 = vmatpush.msra.mxu0 0.0
      %2510 = vmatpush.msra.mxu0 0.0
      %2511 = vmatpush.msra.mxu0 0.0
      %2512 = vmatpush.msra.mxu0 0.0
      %2513 = vmatpush.msra.mxu0 0.0
      %2514 = vmatpush.msra.mxu0 0.0
      %2515 = vmatpush.msra.mxu0 0.0
      %2516 = vmatpush.msra.mxu0 0.0
      %2517 = vmatpush.msra.mxu0 0.0
      %2518 = vmatpush.msra.mxu0 %v2456
      %2519 = vmatmul.f32.gmra.mxu0 %v2461
      %v2520 = vpop.f32.mrf.mxu0
      %v2521 = vadd.f32 0.0, %v2520
      %2522 = vdwg.mxu0
      %v2523 = vadd.f32 %v2434, %v2481
      %v2524 = vadd.f32 %v2435, %v2501
      %v2525 = vadd.f32 %v2436, %v2521
      %2526 = vrot.lane.b32.xlu0 %v2437, 111
      %v2527 = vpop.permute.xlu0 %2526
      %2528 = vrot.lane.b32.xlu0 %v2438, 111
      %v2529 = vpop.permute.xlu0 %2528
      %2530 = vrot.lane.b32.xlu0 %v2439, 111
      %v2531 = vpop.permute.xlu0 %2530
      %2532 = vrot.lane.b32.xlu0 %v2440, 111
      %v2533 = vpop.permute.xlu0 %2532
      %vm2534 = vcmask 908288
      %v2535 = vsel %vm2534, %v2527, %v2529
      %v2536 = vsel %vm2534, %v2529, %v2531
      %v2537 = vsel %vm2534, %v2531, %v2533
      %v2542 = vsel %vm2067, %v2041, 0
      %2544 = vmatpush.msra.mxu0 0.0
      %2545 = vmatpush.msra.mxu0 0.0
      %2546 = vmatpush.msra.mxu0 0.0
      %2547 = vmatpush.msra.mxu0 0.0
      %2548 = vmatpush.msra.mxu0 0.0
      %2549 = vmatpush.msra.mxu0 0.0
      %2550 = vmatpush.msra.mxu0 0.0
      %2551 = vmatpush.msra.mxu0 0.0
      %2552 = vmatpush.msra.mxu0 0.0
      %2553 = vmatpush.msra.mxu0 0.0
      %2554 = vmatpush.msra.mxu0 0.0
      %2555 = vmatpush.msra.mxu0 0.0
      %2556 = vmatpush.msra.mxu0 0.0
      %2557 = vmatpush.msra.mxu0 0.0
      %2558 = vmatpush.msra.mxu0 0.0
      %2559 = vmatpush.msra.mxu0 %v2535
      %2560 = vmatmul.f32.gmra.mxu0 %v2542
      %v2561 = vpop.f32.mrf.mxu0
      %v2562 = vadd.f32 0.0, %v2561
      %2563 = vdwg.mxu0
      %2564 = vmatpush.msra.mxu0 0.0
      %2565 = vmatpush.msra.mxu0 0.0
      %2566 = vmatpush.msra.mxu0 0.0
      %2567 = vmatpush.msra.mxu0 0.0
      %2568 = vmatpush.msra.mxu0 0.0
      %2569 = vmatpush.msra.mxu0 0.0
      %2570 = vmatpush.msra.mxu0 0.0
      %2571 = vmatpush.msra.mxu0 0.0
      %2572 = vmatpush.msra.mxu0 0.0
      %2573 = vmatpush.msra.mxu0 0.0
      %2574 = vmatpush.msra.mxu0 0.0
      %2575 = vmatpush.msra.mxu0 0.0
      %2576 = vmatpush.msra.mxu0 0.0
      %2577 = vmatpush.msra.mxu0 0.0
      %2578 = vmatpush.msra.mxu0 0.0
      %2579 = vmatpush.msra.mxu0 %v2536
      %2580 = vmatmul.f32.gmra.mxu0 %v2542
      %v2581 = vpop.f32.mrf.mxu0
      %v2582 = vadd.f32 0.0, %v2581
      %2583 = vdwg.mxu0
      %2584 = vmatpush.msra.mxu0 0.0
      %2585 = vmatpush.msra.mxu0 0.0
      %2586 = vmatpush.msra.mxu0 0.0
      %2587 = vmatpush.msra.mxu0 0.0
      %2588 = vmatpush.msra.mxu0 0.0
      %2589 = vmatpush.msra.mxu0 0.0
      %2590 = vmatpush.msra.mxu0 0.0
      %2591 = vmatpush.msra.mxu0 0.0
      %2592 = vmatpush.msra.mxu0 0.0
      %2593 = vmatpush.msra.mxu0 0.0
      %2594 = vmatpush.msra.mxu0 0.0
      %2595 = vmatpush.msra.mxu0 0.0
      %2596 = vmatpush.msra.mxu0 0.0
      %2597 = vmatpush.msra.mxu0 0.0
      %2598 = vmatpush.msra.mxu0 0.0
      %2599 = vmatpush.msra.mxu0 %v2537
      %2600 = vmatmul.f32.gmra.mxu0 %v2542
      %v2601 = vpop.f32.mrf.mxu0
      %v2602 = vadd.f32 0.0, %v2601
      %2603 = vdwg.mxu0
      %v2604 = vadd.f32 %v2523, %v2562
      %v2605 = vadd.f32 %v2524, %v2582
      %v2606 = vadd.f32 %v2525, %v2602
      %2607 = vrot.lane.b32.xlu0 %v2437, 110
      %v2608 = vpop.permute.xlu0 %2607
      %2609 = vrot.lane.b32.xlu0 %v2438, 110
      %v2610 = vpop.permute.xlu0 %2609
      %2611 = vrot.lane.b32.xlu0 %v2439, 110
      %v2612 = vpop.permute.xlu0 %2611
      %2613 = vrot.lane.b32.xlu0 %v2440, 110
      %v2614 = vpop.permute.xlu0 %2613
      %vm2615 = vcmask 900096
      %v2616 = vsel %vm2615, %v2608, %v2610
      %v2617 = vsel %vm2615, %v2610, %v2612
      %v2618 = vsel %vm2615, %v2612, %v2614
      %v2623 = vsel %vm2067, %v2042, 0
      %2625 = vmatpush.msra.mxu0 0.0
      %2626 = vmatpush.msra.mxu0 0.0
      %2627 = vmatpush.msra.mxu0 0.0
      %2628 = vmatpush.msra.mxu0 0.0
      %2629 = vmatpush.msra.mxu0 0.0
      %2630 = vmatpush.msra.mxu0 0.0
      %2631 = vmatpush.msra.mxu0 0.0
      %2632 = vmatpush.msra.mxu0 0.0
      %2633 = vmatpush.msra.mxu0 0.0
      %2634 = vmatpush.msra.mxu0 0.0
      %2635 = vmatpush.msra.mxu0 0.0
      %2636 = vmatpush.msra.mxu0 0.0
      %2637 = vmatpush.msra.mxu0 0.0
      %2638 = vmatpush.msra.mxu0 0.0
      %2639 = vmatpush.msra.mxu0 0.0
      %2640 = vmatpush.msra.mxu0 %v2616
      %2641 = vmatmul.f32.gmra.mxu0 %v2623
      %v2642 = vpop.f32.mrf.mxu0
      %v2643 = vadd.f32 0.0, %v2642
      %2644 = vdwg.mxu0
      %2645 = vmatpush.msra.mxu0 0.0
      %2646 = vmatpush.msra.mxu0 0.0
      %2647 = vmatpush.msra.mxu0 0.0
      %2648 = vmatpush.msra.mxu0 0.0
      %2649 = vmatpush.msra.mxu0 0.0
      %2650 = vmatpush.msra.mxu0 0.0
      %2651 = vmatpush.msra.mxu0 0.0
      %2652 = vmatpush.msra.mxu0 0.0
      %2653 = vmatpush.msra.mxu0 0.0
      %2654 = vmatpush.msra.mxu0 0.0
      %2655 = vmatpush.msra.mxu0 0.0
      %2656 = vmatpush.msra.mxu0 0.0
      %2657 = vmatpush.msra.mxu0 0.0
      %2658 = vmatpush.msra.mxu0 0.0
      %2659 = vmatpush.msra.mxu0 0.0
      %2660 = vmatpush.msra.mxu0 %v2617
      %2661 = vmatmul.f32.gmra.mxu0 %v2623
      %v2662 = vpop.f32.mrf.mxu0
      %v2663 = vadd.f32 0.0, %v2662
      %2664 = vdwg.mxu0
      %2665 = vmatpush.msra.mxu0 0.0
      %2666 = vmatpush.msra.mxu0 0.0
      %2667 = vmatpush.msra.mxu0 0.0
      %2668 = vmatpush.msra.mxu0 0.0
      %2669 = vmatpush.msra.mxu0 0.0
      %2670 = vmatpush.msra.mxu0 0.0
      %2671 = vmatpush.msra.mxu0 0.0
      %2672 = vmatpush.msra.mxu0 0.0
      %2673 = vmatpush.msra.mxu0 0.0
      %2674 = vmatpush.msra.mxu0 0.0
      %2675 = vmatpush.msra.mxu0 0.0
      %2676 = vmatpush.msra.mxu0 0.0
      %2677 = vmatpush.msra.mxu0 0.0
      %2678 = vmatpush.msra.mxu0 0.0
      %2679 = vmatpush.msra.mxu0 0.0
      %2680 = vmatpush.msra.mxu0 %v2618
      %2681 = vmatmul.f32.gmra.mxu0 %v2623
      %v2682 = vpop.f32.mrf.mxu0
      %v2683 = vadd.f32 0.0, %v2682
      %2684 = vdwg.mxu0
      %v2685 = vadd.f32 %v2604, %v2643
      %v2686 = vadd.f32 %v2605, %v2663
      %v2687 = vadd.f32 %v2606, %v2683
      %2688 = vrot.lane.b32.xlu0 %v2437, 109
      %v2689 = vpop.permute.xlu0 %2688
      %2690 = vrot.lane.b32.xlu0 %v2438, 109
      %v2691 = vpop.permute.xlu0 %2690
      %2692 = vrot.lane.b32.xlu0 %v2439, 109
      %v2693 = vpop.permute.xlu0 %2692
      %2694 = vrot.lane.b32.xlu0 %v2440, 109
      %v2695 = vpop.permute.xlu0 %2694
      %vm2696 = vcmask 891904
      %v2697 = vsel %vm2696, %v2689, %v2691
      %v2698 = vsel %vm2696, %v2691, %v2693
      %v2699 = vsel %vm2696, %v2693, %v2695
      %v2704 = vsel %vm2067, %v2043, 0
      %2706 = vmatpush.msra.mxu0 0.0
      %2707 = vmatpush.msra.mxu0 0.0
      %2708 = vmatpush.msra.mxu0 0.0
      %2709 = vmatpush.msra.mxu0 0.0
      %2710 = vmatpush.msra.mxu0 0.0
      %2711 = vmatpush.msra.mxu0 0.0
      %2712 = vmatpush.msra.mxu0 0.0
      %2713 = vmatpush.msra.mxu0 0.0
      %2714 = vmatpush.msra.mxu0 0.0
      %2715 = vmatpush.msra.mxu0 0.0
      %2716 = vmatpush.msra.mxu0 0.0
      %2717 = vmatpush.msra.mxu0 0.0
      %2718 = vmatpush.msra.mxu0 0.0
      %2719 = vmatpush.msra.mxu0 0.0
      %2720 = vmatpush.msra.mxu0 0.0
      %2721 = vmatpush.msra.mxu0 %v2697
      %2722 = vmatmul.f32.gmra.mxu0 %v2704
      %v2723 = vpop.f32.mrf.mxu0
      %v2724 = vadd.f32 0.0, %v2723
      %2725 = vdwg.mxu0
      %2726 = vmatpush.msra.mxu0 0.0
      %2727 = vmatpush.msra.mxu0 0.0
      %2728 = vmatpush.msra.mxu0 0.0
      %2729 = vmatpush.msra.mxu0 0.0
      %2730 = vmatpush.msra.mxu0 0.0
      %2731 = vmatpush.msra.mxu0 0.0
      %2732 = vmatpush.msra.mxu0 0.0
      %2733 = vmatpush.msra.mxu0 0.0
      %2734 = vmatpush.msra.mxu0 0.0
      %2735 = vmatpush.msra.mxu0 0.0
      %2736 = vmatpush.msra.mxu0 0.0
      %2737 = vmatpush.msra.mxu0 0.0
      %2738 = vmatpush.msra.mxu0 0.0
      %2739 = vmatpush.msra.mxu0 0.0
      %2740 = vmatpush.msra.mxu0 0.0
      %2741 = vmatpush.msra.mxu0 %v2698
      %2742 = vmatmul.f32.gmra.mxu0 %v2704
      %v2743 = vpop.f32.mrf.mxu0
      %v2744 = vadd.f32 0.0, %v2743
      %2745 = vdwg.mxu0
      %2746 = vmatpush.msra.mxu0 0.0
      %2747 = vmatpush.msra.mxu0 0.0
      %2748 = vmatpush.msra.mxu0 0.0
      %2749 = vmatpush.msra.mxu0 0.0
      %2750 = vmatpush.msra.mxu0 0.0
      %2751 = vmatpush.msra.mxu0 0.0
      %2752 = vmatpush.msra.mxu0 0.0
      %2753 = vmatpush.msra.mxu0 0.0
      %2754 = vmatpush.msra.mxu0 0.0
      %2755 = vmatpush.msra.mxu0 0.0
      %2756 = vmatpush.msra.mxu0 0.0
      %2757 = vmatpush.msra.mxu0 0.0
      %2758 = vmatpush.msra.mxu0 0.0
      %2759 = vmatpush.msra.mxu0 0.0
      %2760 = vmatpush.msra.mxu0 0.0
      %2761 = vmatpush.msra.mxu0 %v2699
      %2762 = vmatmul.f32.gmra.mxu0 %v2704
      %v2763 = vpop.f32.mrf.mxu0
      %v2764 = vadd.f32 0.0, %v2763
      %2765 = vdwg.mxu0
      %v2766 = vadd.f32 %v2685, %v2724
      %v2767 = vadd.f32 %v2686, %v2744
      %v2768 = vadd.f32 %v2687, %v2764
      %v2769 = vld [vmem:[%s11] sm:$0xff]
      %2771 = vset.pattern.permute.xlu0 0
      %2772 = vperm.xlu0 %2771, %v2769
      %v2773 = vpop.permute.xlu0 %2772
      %v2775 = vadd.f32 %v2766, %v2773
      %v2776 = vadd.f32 %v2767, %v2773
      %v2777 = vadd.f32 %v2768, %v2773
      %v2778 = vsel %vm415, 1, 0
      %v2779 = vperm.slane %v2778, 0
      %v2780 = vperm.slane %v2778, 1
      %v2781 = vperm.slane %v2778, 2
      %vm2782 = vcmp.eq.s32.totalorder %v2779, 1
      %vm2783 = vcmp.eq.s32.totalorder %v2780, 1
      %vm2784 = vcmp.eq.s32.totalorder %v2781, 1
      %v2785 = vsel %vm2782, %v2775, 0.0
      %v2786 = vsel %vm2783, %v2776, 0.0
      %v2787 = vsel %vm2784, %v2777, 0.0
      %v2788 = vld [vmem:[%s408 + $0x8] sm:$0xff]
      %v2789 = vld [vmem:[%s408 + $0x10] sm:$0xff]
      %v2790 = vld [vmem:[%s408 + $0x18] sm:$0xff]
      %v2791 = vadd.f32 %v2788, %v2785
      %v2792 = vadd.f32 %v2789, %v2786
      %v2793 = vadd.f32 %v2790, %v2787
      %2794 = vst [vmem:[%s413] sm:$0xff] %v2791
      %2795 = vst [vmem:[%s413 + $0x8] sm:$0xff] %v2792
      %2796 = vst [vmem:[%s413 + $0x10] sm:$0xff] %v2793
      %p2797 = scmp.lt.s32.totalorder %s23, 1
      %s2798 = scalar_select %p2797, %s23, 1
      %s2799 = smul.addr %s2798, 3
      %s2800 = smul.addr %s2799, 8
      %s2801 = scalar_lea.vmem %s12, %s2800
      // Predicated region
      $region76: #{rg_forward.1} parent=67 // pred_check
        %p2802 = pneg %p298
      $region77: #{rg_forward.1} parent=67 // pred_check_branch
        %2804 = sbr.rel (%p2802) target = $region79
      $region78: #{rg_forward.1} parent=67 // pred_region
        _
      $region79: #{rg_forward.1} parent=67 // pred_fallthru
        _
    $region68: #{rg_forward.1} parent=5 // pred_fallthru
      _
    %p2805 = scmp.le.s32.totalorder 2, %s18
    // Predicated region
    $region80: #{rg_forward.1} parent=5 // pred_check
      %p2806 = pneg %p2805
    $region81: #{rg_forward.1} parent=5 // pred_check_branch
      %2808 = sbr.rel (%p2806) target = $region83
    $region82: #{rg_forward.1} parent=5 // pred_region
      %s2809 = ssub.s32 %s18, 2
      // Predicated region
      $region84: #{rg_forward.1} parent=82 // pred_check
        %p2810 = pneg %p304
      $region85: #{rg_forward.1} parent=82 // pred_check_branch
        %2812 = sbr.rel (%p2810) target = $region87
      $region86: #{rg_forward.1} parent=82 // pred_region
        %p2813 = scmp.lt.s32.totalorder %s24, 1
        %s2814 = scalar_select %p2813, %s24, 1
        %s2815 = smul.addr %s2814, 3
        %s2816 = smul.addr %s2815, 8
        %s2817 = scalar_lea.vmem %s12, %s2816
      $region87: #{rg_forward.1} parent=82 // pred_fallthru
        _
    $region83: #{rg_forward.1} parent=5 // pred_fallthru
      _
  $region6: #{rg_forward.1} parent=0 // loop_footer
    %s22 = sadd.s32 1, %s18
  $region7: #{rg_forward.1} parent=0 // loop_footer_branch
    %17 = sbr.rel target = $region3
  $region8: #{rg_forward.1} parent=0 // loop_exit
    _

</llo_original>
